<compile_context>
chip_gen: v5e
topology: v5e:2x2
jax: 0.10.0
libtpu: 0.0.40
codegen_flags: <defaults>
</compile_context>

<pallas_src>
import numpy as np
import jax
import jax.numpy as jnp
from jax.experimental import pallas as pl
from jax.experimental.pallas import tpu as pltpu

# ---------------- configuration (GABlock hyper-params, small demo sizes) ----------------
N   = 2      # batch
L   = 16     # sequence length
F   = 32     # node_feat_dim
C   = 16     # pair_feat_dim
H   = 4      # num_heads
QKD = 8      # query_key_dim
VD  = 8      # value_dim (== query_key_dim, required by GABlock._node_aggregation)
QP  = 4      # num_query_points
VP  = 4      # num_value_points
LN_EPS   = 1e-5
MASK_INF = 1e5

B_BLK = 2             # batch elements folded per grid step (whole batch here)
BL    = B_BLK * L     # rows per grid step == matmul M dimension

DQ    = QKD + 3 * QP              # 20  per-head [q | qg] / [k | kg] width
HQP   = H * QP                    # 16
HVP   = H * VP                    # 16
HVD   = H * VD                    # 32
PTW   = HVD + 3 * HVP             # 80  value + value-point aggregation width
DALL  = H * C + HVD + H * VP * 7  # 208 out_transform input width
OPTS  = 2 * H * QKD + HVD         # 96  offset of point columns in the fused projection
APTS  = 2 * HQP + HVP             # 48  per-axis point block (qp | kp | vp)
NPROJ = OPTS + 3 * APTS           # 240 fused projection width
RAWQK = 2 * H * QKD + 6 * HQP     # 160 input width of the head-major gather matmul
SQRT13 = float(np.sqrt(1.0 / 3.0))


# ---------------- structural constants (parameter independent, NumPy, built once) --------
_RREP  = np.tile(np.kron(np.eye(L, dtype=np.float32), np.ones((1, C), np.float32)), (B_BLK, 1))
_GSUMT = np.kron(np.ones((1, L), np.float32), np.eye(C, dtype=np.float32))        # (C, L*C)
_PPOOL = np.kron(np.eye(H, dtype=np.float32), np.ones((1, QP), np.float32))       # (H, H*QP)
_BONES = np.kron(np.eye(H, dtype=np.float32), np.ones((BL, 1), np.float32))       # (H*BL, H)
_BDIAG = np.kron(np.eye(B_BLK, dtype=np.float32), np.ones((L, L), np.float32))    # (BL, BL)


def _build_vmask():
    # column -> head ownership mask for the block-expanded value matrix / deferred normalization
    m = np.zeros((H, PTW), np.float32)
    for h in range(H):
        m[h, h * VD:(h + 1) * VD] = 1.0
        for a in range(3):
            base = HVD + a * HVP + h * VP
            m[h, base:base + VP] = 1.0
    return m


_VMASK = _build_vmask()                                                           # (H, PTW)


def _build_pqk_perm():
    # gathers [q_all | k_all | qg_xyz | kg_xyz] (axis-major) into head-major [Qfeat | Kfeat]
    P = np.zeros((RAWQK, 2 * H * DQ), np.float32)
    for h in range(H):
        for d in range(QKD):
            P[h * QKD + d, h * DQ + d] = 1.0                                       # q_h
            P[H * QKD + h * QKD + d, H * DQ + h * DQ + d] = 1.0                    # k_h
        for a in range(3):
            for p in range(QP):
                src = 2 * H * QKD + a * 2 * HQP + h * QP + p
                P[src, h * DQ + QKD + a * QP + p] = 1.0                            # qg
                P[src + HQP, H * DQ + h * DQ + QKD + a * QP + p] = 1.0             # kg
    return P


_PQK = _build_pqk_perm()                                                           # (160, 160)


def _wout_row_perm():
    # kernel feature columns: p2n (h,c) | node (h,d) | points (a,h,p) | dist (h,p) | dir (a,h,p)
    # torch w_out rows:       p2n (h,c) | node (h,d) | points (h,p,a) | dist (h,p) | dir (h,p,a)
    idx = list(range(H * C + HVD))
    base = H * C + HVD
    idx += [base + h * VP * 3 + p * 3 + a for a in range(3) for h in range(H) for p in range(VP)]
    base += HVP * 3
    idx += [base + h * VP + p for h in range(H) for p in range(VP)]
    base += HVP
    idx += [base + h * VP * 3 + p * 3 + a for a in range(3) for h in range(H) for p in range(VP)]
    return np.asarray(idx, dtype=np.int32)


_WOUT_PERM = _wout_row_perm()


# ---------------- small in-kernel helpers ------------------------------------------------
def _mm(a, b):
    return jax.lax.dot_general(a, b, (((1,), (0,)), ((), ())),
                               preferred_element_type=jnp.float32)


def _mm_nt(a, b):
    # a: (m, k), b: (n, k) -> (m, n)   (A @ B^T without materializing a transpose)
    return jax.lax.dot_general(a, b, (((1,), (1,)), ((), ())),
                               preferred_element_type=jnp.float32)


def _layer_norm(u, g, b):
    mu = jnp.mean(u, axis=1, keepdims=True)
    d = u - mu
    var = jnp.mean(d * d, axis=1, keepdims=True)
    return d * jax.lax.rsqrt(var + LN_EPS) * g + b


# ---------------- the Pallas kernel -------------------------------------------------------
def _ga_block_kernel(
    # batched row tensors (BL rows per grid step)
    x_ref, z_ref, r_ref, t_ref, mcol_ref, mrow_ref,
    # fused projection + structural weights (VMEM)
    wproj_ref, pqk_ref, wpair_ref, rrep_ref, gsumT_ref, ppool_ref,
    bones_ref, vmask_ref, bdiag_ref,
    # per-head spatial coefficients (SMEM scalars)
    coef_ref,
    # output transform / layer norms / transition MLP
    wout_ref, bout_ref, g1_ref, b1_ref,
    wm1_ref, bm1_ref, wm2_ref, bm2_ref, wm3_ref, bm3_ref,
    g2_ref, b2_ref,
    # output
    o_ref,
):
    x    = x_ref[...]          # (BL, F)
    z2   = z_ref[...]          # (BL, L*C)   column j*C + c == z[b, i, j, c]
    rv   = r_ref[...]          # (BL, 9)
    tv   = t_ref[...]          # (BL, 3)
    mcol = mcol_ref[...]       # (BL, 1)
    mrow = mrow_ref[0]         # (1, BL)

    # ---------------- fused projections: q | k | v | point coords, one MXU op, M = BL ----
    proj = _mm(x, wproj_ref[...])                            # (BL, NPROJ)

    # ---------------- local -> global rotation for all point types / heads at once -------
    R = [[rv[:, 3 * a + b:3 * a + b + 1] for b in range(3)] for a in range(3)]
    T = [tv[:, a:a + 1] for a in range(3)]
    loc = [proj[:, OPTS + a * APTS:OPTS + (a + 1) * APTS] for a in range(3)]
    g = [R[a][0] * loc[0] + R[a][1] * loc[1] + R[a][2] * loc[2] + T[a] for a in range(3)]

    # per-head squared point norms: query side as a column, key side as a row
    qg_sq = g[0][:, :HQP] * g[0][:, :HQP] + g[1][:, :HQP] * g[1][:, :HQP] + g[2][:, :HQP] * g[2][:, :HQP]
    kg_sq = (g[0][:, HQP:2 * HQP] * g[0][:, HQP:2 * HQP]
             + g[1][:, HQP:2 * HQP] * g[1][:, HQP:2 * HQP]
             + g[2][:, HQP:2 * HQP] * g[2][:, HQP:2 * HQP])
    q_sq   = _mm_nt(qg_sq, ppool_ref[...])                   # (BL, H)
    k_sq_t = _mm_nt(ppool_ref[...], kg_sq)                   # (H, BL)

    # pair-bias logits for all heads, already in the fused-slab (BL, H*BL) layout
    lp = _mm(z2, wpair_ref[...])                             # (BL, H*BL)

    # additive mask: pair mask * batch-block-diagonal restriction
    mask_bias = (mcol * mrow * bdiag_ref[...] - 1.0) * MASK_INF          # (BL, BL)

    # head-major [q_h | qg_h] / [k_h | kg_h] features via ONE structural gather matmul
    raw_qk = jnp.concatenate(
        [proj[:, :2 * H * QKD], g[0][:, :2 * HQP], g[1][:, :2 * HQP], g[2][:, :2 * HQP]], axis=1)
    qkf = _mm(raw_qk, pqk_ref[...])                          # (BL, 2*H*DQ)

    # ---------------- per-head node + spatial logits, assembled into one slab ------------
    blocks = []
    for h in range(H):
        ch = coef_ref[0, h]
        lq = qkf[:, h * DQ:(h + 1) * DQ]                     # [q_h | -2*c_h*qg_h]
        lk = qkf[:, H * DQ + h * DQ:H * DQ + (h + 1) * DQ]   # [k_h | kg_h]
        lg = _mm_nt(lq, lk)                                  # (BL, BL)
        lg = lg + ch * q_sq[:, h:h + 1] + ch * k_sq_t[h:h + 1, :] + mask_bias
        blocks.append(lg)
    slab = jnp.concatenate(blocks, axis=1) + lp              # (BL, H*BL) lane-dense

    # ---------------- fused masked softmax (shared row max), deferred normalization ------
    mx = jnp.max(slab, axis=1, keepdims=True)
    e = jnp.exp(slab - mx)                                   # cross-batch / masked keys -> 0.0
    s = _mm(e, bones_ref[...])                               # (BL, H) per-head denominators
    recip = 1.0 / s                                          # exact (parity with the reference)

    # ---------------- node + value-point aggregation for ALL heads in one matmul ---------
    vmask = vmask_ref[...]                                   # (H, PTW)
    vfeat = jnp.concatenate(
        [proj[:, 2 * H * QKD:OPTS], g[0][:, 2 * HQP:], g[1][:, 2 * HQP:], g[2][:, 2 * HQP:]], axis=1)
    vblk = jnp.concatenate([vfeat * vmask[h:h + 1, :] for h in range(H)], axis=0)   # (H*BL, PTW)
    agg = _mm(e, vblk) * _mm(recip, vmask)                   # (BL, PTW) normalized
    # layout: [node feats head-major (HVD) | aggr points x (HVP) | y | z]

    # ---------------- pair aggregation: two small matmuls per head ------------------------
    p2n = []
    for h in range(H):
        ae = _mm(e[:, h * BL:(h + 1) * BL], rrep_ref[...])                  # (BL, L*C)
        p2n.append(_mm_nt(ae * z2, gsumT_ref[...]) * recip[:, h:h + 1])     # (BL, C)

    # ---------------- global -> local, distance, direction --------------------------------
    d = [agg[:, HVD + a * HVP:HVD + (a + 1) * HVP] - T[a] for a in range(3)]
    fp = [R[0][a] * d[0] + R[1][a] * d[1] + R[2][a] * d[2] for a in range(3)]
    dist = jnp.sqrt(fp[0] * fp[0] + fp[1] * fp[1] + fp[2] * fp[2])
    inv = 1.0 / (dist + 1e-4)                                # exact

    feat = jnp.concatenate(
        p2n + [agg[:, :HVD]] + fp + [dist] + [fp[a] * inv for a in range(3)], axis=1)   # (BL, DALL)

    # ---------------- out_transform, mask, residual + LN, transition MLP + LN -------------
    out = _mm(feat, wout_ref[...]) + bout_ref[...]
    out = out * mcol                                          # mask_zero
    y1 = _layer_norm(x + out, g1_ref[...], b1_ref[...])
    m = jnp.maximum(_mm(y1, wm1_ref[...]) + bm1_ref[...], 0.0)
    m = jnp.maximum(_mm(m, wm2_ref[...]) + bm2_ref[...], 0.0)
    m = _mm(m, wm3_ref[...]) + bm3_ref[...]
    o_ref[...] = _layer_norm(y1 + m, g2_ref[...], b2_ref[...])


# ---------------- BlockSpec helpers -------------------------------------------------------
def _rows(width):
    return pl.BlockSpec((BL, width), lambda i: (i, 0))


def _full(shape):
    return pl.BlockSpec(tuple(shape), lambda i, nd=len(shape): (0,) * nd)


# ---------------- wrapper ------------------------------------------------------------------
@jax.jit
def ga_block_forward(Rmat, t, x, z, mask, params):
    n, l = x.shape[:2]
    assert l == L and n % B_BLK == 0
    nb = n // B_BLK
    rows = n * l
    f32 = jnp.float32

    x2 = x.reshape(rows, F)
    z2 = z.reshape(rows, l * C)                       # lane-dense (j, c) layout per row
    r2 = Rmat.reshape(rows, 9)
    t2 = t.reshape(rows, 3)
    mask_f = mask.astype(f32)
    mcol = mask_f.reshape(rows, 1)
    mrow = mask_f.reshape(nb, 1, BL)

    # --- fused projection weight (node-logit scale folded into w_q, points axis-major) ----
    w_q = params["w_q"] * (SQRT13 / float(np.sqrt(QKD)))

    def rearr(w, npts):   # torch column (h*np+p)*3 + a  ->  (F, 3, H*np)
        return jnp.transpose(w.reshape(F, H * npts, 3), (0, 2, 1))

    wqp, wkp, wvp = rearr(params["w_qp"], QP), rearr(params["w_kp"], QP), rearr(params["w_vp"], VP)
    pts = jnp.concatenate(
        [jnp.concatenate([wqp[:, a], wkp[:, a], wvp[:, a]], axis=1) for a in range(3)], axis=1)
    w_proj = jnp.concatenate([w_q, params["w_k"], params["w_v"], pts], axis=1)    # (F, NPROJ)

    # --- per-head spatial coefficients (softmax scale folded in) --------------------------
    coef_vec = (-jax.nn.softplus(params["spatial_coef"])
                * float(np.sqrt(2.0 / (9.0 * QP))) / 2.0 * SQRT13)                # (H,)

    # head-major gather matrix with the -2*c_h scale folded into the qg output columns
    q_scale = jnp.concatenate(
        [jnp.concatenate([jnp.ones((QKD,), f32), jnp.full((3 * QP,), -2.0, f32) * coef_vec[h]])
         for h in range(H)])
    col_scale = jnp.concatenate([q_scale, jnp.ones((H * DQ,), f32)])
    p_qk = jnp.asarray(_PQK) * col_scale[None, :]                                  # (160, 160)

    # pair-bias structural weight producing the (BL, H*BL) slab layout directly
    wp = params["w_pair"] * SQRT13                                                 # (C, H)
    eyeL = jnp.eye(L, dtype=f32)
    wpair2 = jnp.einsum("jJ,ch->jchJ", eyeL, wp)                                   # (L, C, H, L)
    wpair2 = jnp.broadcast_to(wpair2[:, :, :, None, :],
                              (L, C, H, B_BLK, L)).reshape(L * C, H * BL)

    coef = coef_vec.reshape(1, H)
    wout = params["w_out"][_WOUT_PERM, :]                   # rows permuted to kernel layout
    rowvec = lambda v: v.reshape(1, F)

    inputs = (
        x2, z2, r2, t2, mcol, mrow,
        w_proj, p_qk, wpair2,
        jnp.asarray(_RREP), jnp.asarray(_GSUMT), jnp.asarray(_PPOOL),
        jnp.asarray(_BONES), jnp.asarray(_VMASK), jnp.asarray(_BDIAG),
        coef,
        wout, rowvec(params["b_out"]),
        rowvec(params["ln1_g"]), rowvec(params["ln1_b"]),
        params["w_m1"], rowvec(params["b_m1"]),
        params["w_m2"], rowvec(params["b_m2"]),
        params["w_m3"], rowvec(params["b_m3"]),
        rowvec(params["ln2_g"]), rowvec(params["ln2_b"]),
    )

    in_specs = [
        _rows(F), _rows(L * C), _rows(9), _rows(3), _rows(1),
        pl.BlockSpec((1, 1, BL), lambda i: (i, 0, 0)),
        _full((F, NPROJ)), _full((RAWQK, 2 * H * DQ)), _full((L * C, H * BL)),
        _full((BL, L * C)), _full((C, L * C)), _full((H, HQP)),
        _full((H * BL, H)), _full((H, PTW)), _full((BL, BL)),
        pl.BlockSpec(memory_space=pltpu.MemorySpace.SMEM),   # coef (1, H)
        _full((DALL, F)), _full((1, F)),
        _full((1, F)), _full((1, F)),
        _full((F, F)), _full((1, F)),
        _full((F, F)), _full((1, F)),
        _full((F, F)), _full((1, F)),
        _full((1, F)), _full((1, F)),
    ]

    out = pl.pallas_call(
        _ga_block_kernel,
        out_shape=jax.ShapeDtypeStruct((rows, F), jnp.float32),
        grid=(nb,),
        in_specs=in_specs,
        out_specs=pl.BlockSpec((BL, F), lambda i: (i, 0)),
        compiler_params=pltpu.CompilerParams(dimension_semantics=("parallel",)),
    )(*inputs)
    return out.reshape(n, l, F)


# ---------------- deterministic parameter init (torch-layout, (in, out)) -----------------
def init_params(key):
    ks = jax.random.split(key, 19)
    w = lambda k, shape, s=0.1: s * jax.random.normal(k, shape, dtype=jnp.float32)
    return {
        "w_q": w(ks[0], (F, H * QKD)),
        "w_k": w(ks[1], (F, H * QKD)),
        "w_v": w(ks[2], (F, H * VD)),
        "w_pair": w(ks[3], (C, H)),
        "spatial_coef": jnp.full((H,), float(np.log(np.exp(1.0) - 1.0)), dtype=jnp.float32),
        "w_qp": w(ks[4], (F, H * QP * 3)),
        "w_kp": w(ks[5], (F, H * QP * 3)),
        "w_vp": w(ks[6], (F, H * VP * 3)),
        "w_out": w(ks[7], (DALL, F)),
        "b_out": w(ks[8], (F,), 0.05),
        "ln1_g": 1.0 + w(ks[9], (F,), 0.05),
        "ln1_b": w(ks[10], (F,), 0.05),
        "w_m1": w(ks[11], (F, F)),
        "b_m1": w(ks[12], (F,), 0.05),
        "w_m2": w(ks[13], (F, F)),
        "b_m2": w(ks[14], (F,), 0.05),
        "w_m3": w(ks[15], (F, F)),
        "b_m3": w(ks[16], (F,), 0.05),
        "ln2_g": 1.0 + w(ks[17], (F,), 0.05),
        "ln2_b": w(ks[18], (F,), 0.05),
    }


# ---------------- pure-JAX reference mirroring the PyTorch forward -----------------------
def ga_block_reference(Rmat, t, x, z, mask, p):
    n, l, _ = x.shape
    mask_f = mask.astype(jnp.float32)
    q = (x @ p["w_q"]).reshape(n, l, H, QKD)
    k = (x @ p["w_k"]).reshape(n, l, H, QKD)
    logits_node = jnp.einsum("nihd,njhd->nijh", q, k) * float(1.0 / np.sqrt(QKD))
    logits_pair = z @ p["w_pair"]

    def local_to_global(p3):  # (n, l, M, 3)
        return jnp.einsum("nlab,nlmb->nlma", Rmat, p3) + t[:, :, None, :]

    qp = local_to_global((x @ p["w_qp"]).reshape(n, l, H * QP, 3)).reshape(n, l, H, QP * 3)
    kp = local_to_global((x @ p["w_kp"]).reshape(n, l, H * QP, 3)).reshape(n, l, H, QP * 3)
    sum_sq = jnp.sum((qp[:, :, None] - kp[:, None]) ** 2, axis=-1)
    gamma = jax.nn.softplus(p["spatial_coef"])
    logits_spatial = sum_sq * (-gamma * float(np.sqrt(2.0 / (9.0 * QP))) / 2.0)

    logits = (logits_node + logits_pair + logits_spatial) * float(np.sqrt(1.0 / 3.0))
    mask_row = mask_f[:, :, None, None]
    mask_pair = mask_row * mask_f[:, None, :, None]
    logits = jnp.where(mask_pair > 0.5, logits, logits - MASK_INF)
    alpha = jax.nn.softmax(logits, axis=2)
    alpha = jnp.where(mask_row > 0.5, alpha, 0.0)

    feat_p2n = jnp.einsum("nijh,nijc->nihc", alpha, z).reshape(n, l, -1)
    v = (x @ p["w_v"]).reshape(n, l, H, VD)
    feat_node = jnp.einsum("nijh,njhd->nihd", alpha, v).reshape(n, l, -1)

    vp = local_to_global((x @ p["w_vp"]).reshape(n, l, H * VP, 3)).reshape(n, l, H, VP, 3)
    aggr = jnp.einsum("nijh,njhpa->nihpa", alpha, vp)
    fp = jnp.einsum("niba,nihpb->nihpa", Rmat, aggr - t[:, :, None, None, :])
    dist = jnp.sqrt(jnp.sum(fp * fp, axis=-1))
    direc = fp / (dist[..., None] + 1e-4)
    feat_spatial = jnp.concatenate(
        [fp.reshape(n, l, -1), dist.reshape(n, l, -1), direc.reshape(n, l, -1)], axis=-1)

    feat_all = jnp.concatenate([feat_p2n, feat_node, feat_spatial], axis=-1)
    feat_all = feat_all @ p["w_out"] + p["b_out"]
    feat_all = jnp.where(mask_f[:, :, None] > 0.5, feat_all, 0.0)

    def ln(u, g, b):
        mu = u.mean(-1, keepdims=True)
        var = ((u - mu) ** 2).mean(-1, keepdims=True)
        return (u - mu) / jnp.sqrt(var + LN_EPS) * g + b

    y1 = ln(x + feat_all, p["ln1_g"], p["ln1_b"])
    m = jnp.maximum(y1 @ p["w_m1"] + p["b_m1"], 0.0)
    m = jnp.maximum(m @ p["w_m2"] + p["b_m2"], 0.0)
    m = m @ p["w_m3"] + p["b_m3"]
    return ln(y1 + m, p["ln2_g"], p["ln2_b"])


# ---------------- main --------------------------------------------------------------------
if __name__ == "__main__":
    key = jax.random.PRNGKey(0)
    k_r, k_t, k_x, k_z, k_m, k_p = jax.random.split(key, 6)

    # deterministic orthonormal frames
    A = np.asarray(jax.random.normal(k_r, (N, L, 3, 3), dtype=jnp.float32))
    Rmat = jnp.asarray(np.linalg.qr(A)[0].astype(np.float32))
    t = jax.random.normal(k_t, (N, L, 3), dtype=jnp.float32)
    x = jax.random.normal(k_x, (N, L, F), dtype=jnp.float32)
    z = jax.random.normal(k_z, (N, L, L, C), dtype=jnp.float32)
    mask = (jax.random.uniform(k_m, (N, L)) > 0.2).astype(jnp.float32)

    params = init_params(k_p)

    out = jax.block_until_ready(ga_block_forward(Rmat, t, x, z, mask, params))
    ref = ga_block_reference(Rmat, t, x, z, mask, params)

    # exact reciprocals inside the kernel -> only MXU/reduction-order level differences remain
    np.testing.assert_allclose(np.asarray(out), np.asarray(ref), rtol=2e-3, atol=2e-3)
    print("KERNEL_OK")
</pallas_src>

<mosaic_0001>
module attributes {stable_mosaic.version = 11 : i64} {
  func.func @_ga_block_kernel(%arg0: i32, %arg1: memref<32x32xf32, #tpu.memory_space<vmem>>, %arg2: memref<32x256xf32, #tpu.memory_space<vmem>>, %arg3: memref<32x9xf32, #tpu.memory_space<vmem>>, %arg4: memref<32x3xf32, #tpu.memory_space<vmem>>, %arg5: memref<32x1xf32, #tpu.memory_space<vmem>>, %arg6: memref<1x1x32xf32, #tpu.memory_space<vmem>>, %arg7: memref<32x240xf32, #tpu.memory_space<vmem>>, %arg8: memref<160x160xf32, #tpu.memory_space<vmem>>, %arg9: memref<256x128xf32, #tpu.memory_space<vmem>>, %arg10: memref<32x256xf32, #tpu.memory_space<vmem>>, %arg11: memref<16x256xf32, #tpu.memory_space<vmem>>, %arg12: memref<4x16xf32, #tpu.memory_space<vmem>>, %arg13: memref<128x4xf32, #tpu.memory_space<vmem>>, %arg14: memref<4x80xf32, #tpu.memory_space<vmem>>, %arg15: memref<32x32xf32, #tpu.memory_space<vmem>>, %arg16: memref<1x4xf32, #tpu.memory_space<smem>>, %arg17: memref<208x32xf32, #tpu.memory_space<vmem>>, %arg18: memref<1x32xf32, #tpu.memory_space<vmem>>, %arg19: memref<1x32xf32, #tpu.memory_space<vmem>>, %arg20: memref<1x32xf32, #tpu.memory_space<vmem>>, %arg21: memref<32x32xf32, #tpu.memory_space<vmem>>, %arg22: memref<1x32xf32, #tpu.memory_space<vmem>>, %arg23: memref<32x32xf32, #tpu.memory_space<vmem>>, %arg24: memref<1x32xf32, #tpu.memory_space<vmem>>, %arg25: memref<32x32xf32, #tpu.memory_space<vmem>>, %arg26: memref<1x32xf32, #tpu.memory_space<vmem>>, %arg27: memref<1x32xf32, #tpu.memory_space<vmem>>, %arg28: memref<1x32xf32, #tpu.memory_space<vmem>>, %arg29: memref<32x32xf32, #tpu.memory_space<vmem>>) attributes {dimension_semantics = [#tpu.dimension_semantics<parallel>], iteration_bounds = array<i64: 1>, scalar_prefetch = 0 : i64, scratch_operands = 0 : i64, tpu.core_type = #tpu.core_type<tc>, window_params = [{transform_indices = @transform_0, window_bounds = array<i64: 32, 32>}, {transform_indices = @transform_1, window_bounds = array<i64: 32, 256>}, {transform_indices = @transform_2, window_bounds = array<i64: 32, 9>}, {transform_indices = @transform_3, window_bounds = array<i64: 32, 3>}, {transform_indices = @transform_4, window_bounds = array<i64: 32, 1>}, {transform_indices = @transform_5, window_bounds = array<i64: 1, 1, 32>}, {pipeline_mode = #tpu.pipeline_mode<synchronous>, transform_indices = @transform_6, window_bounds = array<i64: 32, 240>}, {pipeline_mode = #tpu.pipeline_mode<synchronous>, transform_indices = @transform_7, window_bounds = array<i64: 160, 160>}, {pipeline_mode = #tpu.pipeline_mode<synchronous>, transform_indices = @transform_8, window_bounds = array<i64: 256, 128>}, {pipeline_mode = #tpu.pipeline_mode<synchronous>, transform_indices = @transform_9, window_bounds = array<i64: 32, 256>}, {pipeline_mode = #tpu.pipeline_mode<synchronous>, transform_indices = @transform_10, window_bounds = array<i64: 16, 256>}, {pipeline_mode = #tpu.pipeline_mode<synchronous>, transform_indices = @transform_11, window_bounds = array<i64: 4, 16>}, {pipeline_mode = #tpu.pipeline_mode<synchronous>, transform_indices = @transform_12, window_bounds = array<i64: 128, 4>}, {pipeline_mode = #tpu.pipeline_mode<synchronous>, transform_indices = @transform_13, window_bounds = array<i64: 4, 80>}, {pipeline_mode = #tpu.pipeline_mode<synchronous>, transform_indices = @transform_14, window_bounds = array<i64: 32, 32>}, {transform_indices = @transform_15, window_bounds = array<i64: 1, 4>}, {pipeline_mode = #tpu.pipeline_mode<synchronous>, transform_indices = @transform_16, window_bounds = array<i64: 208, 32>}, {pipeline_mode = #tpu.pipeline_mode<synchronous>, transform_indices = @transform_17, window_bounds = array<i64: 1, 32>}, {pipeline_mode = #tpu.pipeline_mode<synchronous>, transform_indices = @transform_18, window_bounds = array<i64: 1, 32>}, {pipeline_mode = #tpu.pipeline_mode<synchronous>, transform_indices = @transform_19, window_bounds = array<i64: 1, 32>}, {pipeline_mode = #tpu.pipeline_mode<synchronous>, transform_indices = @transform_20, window_bounds = array<i64: 32, 32>}, {pipeline_mode = #tpu.pipeline_mode<synchronous>, transform_indices = @transform_21, window_bounds = array<i64: 1, 32>}, {pipeline_mode = #tpu.pipeline_mode<synchronous>, transform_indices = @transform_22, window_bounds = array<i64: 32, 32>}, {pipeline_mode = #tpu.pipeline_mode<synchronous>, transform_indices = @transform_23, window_bounds = array<i64: 1, 32>}, {pipeline_mode = #tpu.pipeline_mode<synchronous>, transform_indices = @transform_24, window_bounds = array<i64: 32, 32>}, {pipeline_mode = #tpu.pipeline_mode<synchronous>, transform_indices = @transform_25, window_bounds = array<i64: 1, 32>}, {pipeline_mode = #tpu.pipeline_mode<synchronous>, transform_indices = @transform_26, window_bounds = array<i64: 1, 32>}, {pipeline_mode = #tpu.pipeline_mode<synchronous>, transform_indices = @transform_27, window_bounds = array<i64: 1, 32>}, {transform_indices = @transform_28, window_bounds = array<i64: 32, 32>}]} {
    %c0 = arith.constant 0 : index
    %c0_0 = arith.constant 0 : index
    %0 = vector.load %arg1[%c0, %c0_0] : memref<32x32xf32, #tpu.memory_space<vmem>>, vector<32x32xf32>
    %c0_1 = arith.constant 0 : index
    %c0_2 = arith.constant 0 : index
    %1 = vector.load %arg2[%c0_1, %c0_2] : memref<32x256xf32, #tpu.memory_space<vmem>>, vector<32x256xf32>
    %c0_3 = arith.constant 0 : index
    %c0_4 = arith.constant 0 : index
    %2 = vector.load %arg3[%c0_3, %c0_4] : memref<32x9xf32, #tpu.memory_space<vmem>>, vector<32x9xf32>
    %c0_5 = arith.constant 0 : index
    %c0_6 = arith.constant 0 : index
    %3 = vector.load %arg4[%c0_5, %c0_6] : memref<32x3xf32, #tpu.memory_space<vmem>>, vector<32x3xf32>
    %c0_7 = arith.constant 0 : index
    %c0_8 = arith.constant 0 : index
    %4 = vector.load %arg5[%c0_7, %c0_8] : memref<32x1xf32, #tpu.memory_space<vmem>>, vector<32x1xf32>
    %c0_9 = arith.constant 0 : index
    %c0_10 = arith.constant 0 : index
    %c0_11 = arith.constant 0 : index
    %5 = vector.load %arg6[%c0_9, %c0_10, %c0_11] : memref<1x1x32xf32, #tpu.memory_space<vmem>>, vector<1x1x32xf32>
    %6 = vector.shape_cast %5 : vector<1x1x32xf32> to vector<1x32xf32>
    %c0_12 = arith.constant 0 : index
    %c0_13 = arith.constant 0 : index
    %7 = vector.load %arg7[%c0_12, %c0_13] : memref<32x240xf32, #tpu.memory_space<vmem>>, vector<32x240xf32>
    %cst = arith.constant dense<0.000000e+00> : vector<32x240xf32>
    %8 = tpu.matmul %0, %7, %cst {dimension_numbers = #tpu.dot_dimension_numbers<[1], [0], [0], [1], [0, 0, 1, 1], [], []>} : vector<32x32xf32>, vector<32x240xf32>, vector<32x240xf32> -> vector<32x240xf32>
    %9 = vector.extract_strided_slice %2 {offsets = [0, 0], sizes = [32, 1], strides = [1, 1]} : vector<32x9xf32> to vector<32x1xf32>
    %10 = vector.extract_strided_slice %2 {offsets = [0, 1], sizes = [32, 1], strides = [1, 1]} : vector<32x9xf32> to vector<32x1xf32>
    %11 = vector.extract_strided_slice %2 {offsets = [0, 2], sizes = [32, 1], strides = [1, 1]} : vector<32x9xf32> to vector<32x1xf32>
    %12 = vector.extract_strided_slice %2 {offsets = [0, 3], sizes = [32, 1], strides = [1, 1]} : vector<32x9xf32> to vector<32x1xf32>
    %13 = vector.extract_strided_slice %2 {offsets = [0, 4], sizes = [32, 1], strides = [1, 1]} : vector<32x9xf32> to vector<32x1xf32>
    %14 = vector.extract_strided_slice %2 {offsets = [0, 5], sizes = [32, 1], strides = [1, 1]} : vector<32x9xf32> to vector<32x1xf32>
    %15 = vector.extract_strided_slice %2 {offsets = [0, 6], sizes = [32, 1], strides = [1, 1]} : vector<32x9xf32> to vector<32x1xf32>
    %16 = vector.extract_strided_slice %2 {offsets = [0, 7], sizes = [32, 1], strides = [1, 1]} : vector<32x9xf32> to vector<32x1xf32>
    %17 = vector.extract_strided_slice %2 {offsets = [0, 8], sizes = [32, 1], strides = [1, 1]} : vector<32x9xf32> to vector<32x1xf32>
    %18 = vector.extract_strided_slice %3 {offsets = [0, 0], sizes = [32, 1], strides = [1, 1]} : vector<32x3xf32> to vector<32x1xf32>
    %19 = vector.extract_strided_slice %3 {offsets = [0, 1], sizes = [32, 1], strides = [1, 1]} : vector<32x3xf32> to vector<32x1xf32>
    %20 = vector.extract_strided_slice %3 {offsets = [0, 2], sizes = [32, 1], strides = [1, 1]} : vector<32x3xf32> to vector<32x1xf32>
    %21 = vector.extract_strided_slice %8 {offsets = [0, 96], sizes = [32, 48], strides = [1, 1]} : vector<32x240xf32> to vector<32x48xf32>
    %22 = vector.extract_strided_slice %8 {offsets = [0, 144], sizes = [32, 48], strides = [1, 1]} : vector<32x240xf32> to vector<32x48xf32>
    %23 = vector.extract_strided_slice %8 {offsets = [0, 192], sizes = [32, 48], strides = [1, 1]} : vector<32x240xf32> to vector<32x48xf32>
    %24 = vector.broadcast %9 : vector<32x1xf32> to vector<32x48xf32>
    %25 = arith.mulf %24, %21 : vector<32x48xf32>
    %26 = vector.broadcast %10 : vector<32x1xf32> to vector<32x48xf32>
    %27 = arith.mulf %26, %22 : vector<32x48xf32>
    %28 = arith.addf %25, %27 : vector<32x48xf32>
    %29 = vector.broadcast %11 : vector<32x1xf32> to vector<32x48xf32>
    %30 = arith.mulf %29, %23 : vector<32x48xf32>
    %31 = arith.addf %28, %30 : vector<32x48xf32>
    %32 = vector.broadcast %18 : vector<32x1xf32> to vector<32x48xf32>
    %33 = arith.addf %31, %32 : vector<32x48xf32>
    %34 = vector.broadcast %12 : vector<32x1xf32> to vector<32x48xf32>
    %35 = arith.mulf %34, %21 : vector<32x48xf32>
    %36 = vector.broadcast %13 : vector<32x1xf32> to vector<32x48xf32>
    %37 = arith.mulf %36, %22 : vector<32x48xf32>
    %38 = arith.addf %35, %37 : vector<32x48xf32>
    %39 = vector.broadcast %14 : vector<32x1xf32> to vector<32x48xf32>
    %40 = arith.mulf %39, %23 : vector<32x48xf32>
    %41 = arith.addf %38, %40 : vector<32x48xf32>
    %42 = vector.broadcast %19 : vector<32x1xf32> to vector<32x48xf32>
    %43 = arith.addf %41, %42 : vector<32x48xf32>
    %44 = vector.broadcast %15 : vector<32x1xf32> to vector<32x48xf32>
    %45 = arith.mulf %44, %21 : vector<32x48xf32>
    %46 = vector.broadcast %16 : vector<32x1xf32> to vector<32x48xf32>
    %47 = arith.mulf %46, %22 : vector<32x48xf32>
    %48 = arith.addf %45, %47 : vector<32x48xf32>
    %49 = vector.broadcast %17 : vector<32x1xf32> to vector<32x48xf32>
    %50 = arith.mulf %49, %23 : vector<32x48xf32>
    %51 = arith.addf %48, %50 : vector<32x48xf32>
    %52 = vector.broadcast %20 : vector<32x1xf32> to vector<32x48xf32>
    %53 = arith.addf %51, %52 : vector<32x48xf32>
    %54 = vector.extract_strided_slice %33 {offsets = [0, 0], sizes = [32, 16], strides = [1, 1]} : vector<32x48xf32> to vector<32x16xf32>
    %55 = vector.extract_strided_slice %33 {offsets = [0, 0], sizes = [32, 16], strides = [1, 1]} : vector<32x48xf32> to vector<32x16xf32>
    %56 = arith.mulf %54, %55 : vector<32x16xf32>
    %57 = vector.extract_strided_slice %43 {offsets = [0, 0], sizes = [32, 16], strides = [1, 1]} : vector<32x48xf32> to vector<32x16xf32>
    %58 = vector.extract_strided_slice %43 {offsets = [0, 0], sizes = [32, 16], strides = [1, 1]} : vector<32x48xf32> to vector<32x16xf32>
    %59 = arith.mulf %57, %58 : vector<32x16xf32>
    %60 = arith.addf %56, %59 : vector<32x16xf32>
    %61 = vector.extract_strided_slice %53 {offsets = [0, 0], sizes = [32, 16], strides = [1, 1]} : vector<32x48xf32> to vector<32x16xf32>
    %62 = vector.extract_strided_slice %53 {offsets = [0, 0], sizes = [32, 16], strides = [1, 1]} : vector<32x48xf32> to vector<32x16xf32>
    %63 = arith.mulf %61, %62 : vector<32x16xf32>
    %64 = arith.addf %60, %63 : vector<32x16xf32>
    %65 = vector.extract_strided_slice %33 {offsets = [0, 16], sizes = [32, 16], strides = [1, 1]} : vector<32x48xf32> to vector<32x16xf32>
    %66 = vector.extract_strided_slice %33 {offsets = [0, 16], sizes = [32, 16], strides = [1, 1]} : vector<32x48xf32> to vector<32x16xf32>
    %67 = arith.mulf %65, %66 : vector<32x16xf32>
    %68 = vector.extract_strided_slice %43 {offsets = [0, 16], sizes = [32, 16], strides = [1, 1]} : vector<32x48xf32> to vector<32x16xf32>
    %69 = vector.extract_strided_slice %43 {offsets = [0, 16], sizes = [32, 16], strides = [1, 1]} : vector<32x48xf32> to vector<32x16xf32>
    %70 = arith.mulf %68, %69 : vector<32x16xf32>
    %71 = arith.addf %67, %70 : vector<32x16xf32>
    %72 = vector.extract_strided_slice %53 {offsets = [0, 16], sizes = [32, 16], strides = [1, 1]} : vector<32x48xf32> to vector<32x16xf32>
    %73 = vector.extract_strided_slice %53 {offsets = [0, 16], sizes = [32, 16], strides = [1, 1]} : vector<32x48xf32> to vector<32x16xf32>
    %74 = arith.mulf %72, %73 : vector<32x16xf32>
    %75 = arith.addf %71, %74 : vector<32x16xf32>
    %c0_14 = arith.constant 0 : index
    %c0_15 = arith.constant 0 : index
    %76 = vector.load %arg12[%c0_14, %c0_15] : memref<4x16xf32, #tpu.memory_space<vmem>>, vector<4x16xf32>
    %cst_16 = arith.constant dense<0.000000e+00> : vector<32x4xf32>
    %77 = tpu.matmul %64, %76, %cst_16 {dimension_numbers = #tpu.dot_dimension_numbers<[1], [1], [0], [0], [0, 0, 1, 0], [], []>} : vector<32x16xf32>, vector<4x16xf32>, vector<32x4xf32> -> vector<32x4xf32>
    %c0_17 = arith.constant 0 : index
    %c0_18 = arith.constant 0 : index
    %78 = vector.load %arg12[%c0_17, %c0_18] : memref<4x16xf32, #tpu.memory_space<vmem>>, vector<4x16xf32>
    %cst_19 = arith.constant dense<0.000000e+00> : vector<4x32xf32>
    %79 = tpu.matmul %78, %75, %cst_19 {dimension_numbers = #tpu.dot_dimension_numbers<[1], [1], [0], [0], [0, 0, 1, 0], [], []>} : vector<4x16xf32>, vector<32x16xf32>, vector<4x32xf32> -> vector<4x32xf32>
    %c0_20 = arith.constant 0 : index
    %c0_21 = arith.constant 0 : index
    %80 = vector.load %arg9[%c0_20, %c0_21] : memref<256x128xf32, #tpu.memory_space<vmem>>, vector<256x128xf32>
    %cst_22 = arith.constant dense<0.000000e+00> : vector<32x128xf32>
    %81 = tpu.matmul %1, %80, %cst_22 {dimension_numbers = #tpu.dot_dimension_numbers<[1], [0], [0], [1], [0, 0, 1, 1], [], []>} : vector<32x256xf32>, vector<256x128xf32>, vector<32x128xf32> -> vector<32x128xf32>
    %82 = vector.broadcast %4 : vector<32x1xf32> to vector<32x32xf32>
    %83 = vector.broadcast %6 : vector<1x32xf32> to vector<32x32xf32>
    %84 = arith.mulf %82, %83 : vector<32x32xf32>
    %c0_23 = arith.constant 0 : index
    %c0_24 = arith.constant 0 : index
    %85 = vector.load %arg15[%c0_23, %c0_24] : memref<32x32xf32, #tpu.memory_space<vmem>>, vector<32x32xf32>
    %86 = arith.mulf %84, %85 : vector<32x32xf32>
    %cst_25 = arith.constant 1.000000e+00 : f32
    %87 = vector.broadcast %cst_25 : f32 to vector<32x32xf32>
    %88 = arith.subf %86, %87 : vector<32x32xf32>
    %cst_26 = arith.constant 1.000000e+05 : f32
    %89 = vector.broadcast %cst_26 : f32 to vector<32x32xf32>
    %90 = arith.mulf %88, %89 : vector<32x32xf32>
    %91 = vector.extract_strided_slice %8 {offsets = [0, 0], sizes = [32, 64], strides = [1, 1]} : vector<32x240xf32> to vector<32x64xf32>
    %92 = vector.extract_strided_slice %33 {offsets = [0, 0], sizes = [32, 32], strides = [1, 1]} : vector<32x48xf32> to vector<32x32xf32>
    %93 = vector.extract_strided_slice %43 {offsets = [0, 0], sizes = [32, 32], strides = [1, 1]} : vector<32x48xf32> to vector<32x32xf32>
    %94 = vector.extract_strided_slice %53 {offsets = [0, 0], sizes = [32, 32], strides = [1, 1]} : vector<32x48xf32> to vector<32x32xf32>
    %95 = tpu.concatenate %91, %92, %93, %94 in 1 : vector<32x64xf32>, vector<32x32xf32>, vector<32x32xf32>, vector<32x32xf32> -> vector<32x160xf32>
    %c0_27 = arith.constant 0 : index
    %c0_28 = arith.constant 0 : index
    %96 = vector.load %arg8[%c0_27, %c0_28] : memref<160x160xf32, #tpu.memory_space<vmem>>, vector<160x160xf32>
    %cst_29 = arith.constant dense<0.000000e+00> : vector<32x160xf32>
    %97 = tpu.matmul %95, %96, %cst_29 {dimension_numbers = #tpu.dot_dimension_numbers<[1], [0], [0], [1], [0, 0, 1, 1], [], []>} : vector<32x160xf32>, vector<160x160xf32>, vector<32x160xf32> -> vector<32x160xf32>
    %c0_30 = arith.constant 0 : index
    %c0_31 = arith.constant 0 : index
    %98 = memref.load %arg16[%c0_30, %c0_31] : memref<1x4xf32, #tpu.memory_space<smem>>
    %99 = vector.extract_strided_slice %97 {offsets = [0, 0], sizes = [32, 20], strides = [1, 1]} : vector<32x160xf32> to vector<32x20xf32>
    %100 = vector.extract_strided_slice %97 {offsets = [0, 80], sizes = [32, 20], strides = [1, 1]} : vector<32x160xf32> to vector<32x20xf32>
    %cst_32 = arith.constant dense<0.000000e+00> : vector<32x32xf32>
    %101 = tpu.matmul %99, %100, %cst_32 {dimension_numbers = #tpu.dot_dimension_numbers<[1], [1], [0], [0], [0, 0, 1, 0], [], []>} : vector<32x20xf32>, vector<32x20xf32>, vector<32x32xf32> -> vector<32x32xf32>
    %102 = vector.extract_strided_slice %77 {offsets = [0, 0], sizes = [32, 1], strides = [1, 1]} : vector<32x4xf32> to vector<32x1xf32>
    %103 = vector.broadcast %98 : f32 to vector<32x1xf32>
    %104 = arith.mulf %103, %102 : vector<32x1xf32>
    %105 = vector.broadcast %104 : vector<32x1xf32> to vector<32x32xf32>
    %106 = arith.addf %101, %105 : vector<32x32xf32>
    %107 = vector.extract_strided_slice %79 {offsets = [0, 0], sizes = [1, 32], strides = [1, 1]} : vector<4x32xf32> to vector<1x32xf32>
    %108 = vector.broadcast %98 : f32 to vector<1x32xf32>
    %109 = arith.mulf %108, %107 : vector<1x32xf32>
    %110 = vector.broadcast %109 : vector<1x32xf32> to vector<32x32xf32>
    %111 = arith.addf %106, %110 : vector<32x32xf32>
    %112 = arith.addf %111, %90 : vector<32x32xf32>
    %c0_33 = arith.constant 0 : index
    %c1 = arith.constant 1 : index
    %113 = memref.load %arg16[%c0_33, %c1] : memref<1x4xf32, #tpu.memory_space<smem>>
    %114 = vector.extract_strided_slice %97 {offsets = [0, 20], sizes = [32, 20], strides = [1, 1]} : vector<32x160xf32> to vector<32x20xf32>
    %115 = vector.extract_strided_slice %97 {offsets = [0, 100], sizes = [32, 20], strides = [1, 1]} : vector<32x160xf32> to vector<32x20xf32>
    %cst_34 = arith.constant dense<0.000000e+00> : vector<32x32xf32>
    %116 = tpu.matmul %114, %115, %cst_34 {dimension_numbers = #tpu.dot_dimension_numbers<[1], [1], [0], [0], [0, 0, 1, 0], [], []>} : vector<32x20xf32>, vector<32x20xf32>, vector<32x32xf32> -> vector<32x32xf32>
    %117 = vector.extract_strided_slice %77 {offsets = [0, 1], sizes = [32, 1], strides = [1, 1]} : vector<32x4xf32> to vector<32x1xf32>
    %118 = vector.broadcast %113 : f32 to vector<32x1xf32>
    %119 = arith.mulf %118, %117 : vector<32x1xf32>
    %120 = vector.broadcast %119 : vector<32x1xf32> to vector<32x32xf32>
    %121 = arith.addf %116, %120 : vector<32x32xf32>
    %122 = vector.extract_strided_slice %79 {offsets = [1, 0], sizes = [1, 32], strides = [1, 1]} : vector<4x32xf32> to vector<1x32xf32>
    %123 = vector.broadcast %113 : f32 to vector<1x32xf32>
    %124 = arith.mulf %123, %122 : vector<1x32xf32>
    %125 = vector.broadcast %124 : vector<1x32xf32> to vector<32x32xf32>
    %126 = arith.addf %121, %125 : vector<32x32xf32>
    %127 = arith.addf %126, %90 : vector<32x32xf32>
    %c0_35 = arith.constant 0 : index
    %c2 = arith.constant 2 : index
    %128 = memref.load %arg16[%c0_35, %c2] : memref<1x4xf32, #tpu.memory_space<smem>>
    %129 = vector.extract_strided_slice %97 {offsets = [0, 40], sizes = [32, 20], strides = [1, 1]} : vector<32x160xf32> to vector<32x20xf32>
    %130 = vector.extract_strided_slice %97 {offsets = [0, 120], sizes = [32, 20], strides = [1, 1]} : vector<32x160xf32> to vector<32x20xf32>
    %cst_36 = arith.constant dense<0.000000e+00> : vector<32x32xf32>
    %131 = tpu.matmul %129, %130, %cst_36 {dimension_numbers = #tpu.dot_dimension_numbers<[1], [1], [0], [0], [0, 0, 1, 0], [], []>} : vector<32x20xf32>, vector<32x20xf32>, vector<32x32xf32> -> vector<32x32xf32>
    %132 = vector.extract_strided_slice %77 {offsets = [0, 2], sizes = [32, 1], strides = [1, 1]} : vector<32x4xf32> to vector<32x1xf32>
    %133 = vector.broadcast %128 : f32 to vector<32x1xf32>
    %134 = arith.mulf %133, %132 : vector<32x1xf32>
    %135 = vector.broadcast %134 : vector<32x1xf32> to vector<32x32xf32>
    %136 = arith.addf %131, %135 : vector<32x32xf32>
    %137 = vector.extract_strided_slice %79 {offsets = [2, 0], sizes = [1, 32], strides = [1, 1]} : vector<4x32xf32> to vector<1x32xf32>
    %138 = vector.broadcast %128 : f32 to vector<1x32xf32>
    %139 = arith.mulf %138, %137 : vector<1x32xf32>
    %140 = vector.broadcast %139 : vector<1x32xf32> to vector<32x32xf32>
    %141 = arith.addf %136, %140 : vector<32x32xf32>
    %142 = arith.addf %141, %90 : vector<32x32xf32>
    %c0_37 = arith.constant 0 : index
    %c3 = arith.constant 3 : index
    %143 = memref.load %arg16[%c0_37, %c3] : memref<1x4xf32, #tpu.memory_space<smem>>
    %144 = vector.extract_strided_slice %97 {offsets = [0, 60], sizes = [32, 20], strides = [1, 1]} : vector<32x160xf32> to vector<32x20xf32>
    %145 = vector.extract_strided_slice %97 {offsets = [0, 140], sizes = [32, 20], strides = [1, 1]} : vector<32x160xf32> to vector<32x20xf32>
    %cst_38 = arith.constant dense<0.000000e+00> : vector<32x32xf32>
    %146 = tpu.matmul %144, %145, %cst_38 {dimension_numbers = #tpu.dot_dimension_numbers<[1], [1], [0], [0], [0, 0, 1, 0], [], []>} : vector<32x20xf32>, vector<32x20xf32>, vector<32x32xf32> -> vector<32x32xf32>
    %147 = vector.extract_strided_slice %77 {offsets = [0, 3], sizes = [32, 1], strides = [1, 1]} : vector<32x4xf32> to vector<32x1xf32>
    %148 = vector.broadcast %143 : f32 to vector<32x1xf32>
    %149 = arith.mulf %148, %147 : vector<32x1xf32>
    %150 = vector.broadcast %149 : vector<32x1xf32> to vector<32x32xf32>
    %151 = arith.addf %146, %150 : vector<32x32xf32>
    %152 = vector.extract_strided_slice %79 {offsets = [3, 0], sizes = [1, 32], strides = [1, 1]} : vector<4x32xf32> to vector<1x32xf32>
    %153 = vector.broadcast %143 : f32 to vector<1x32xf32>
    %154 = arith.mulf %153, %152 : vector<1x32xf32>
    %155 = vector.broadcast %154 : vector<1x32xf32> to vector<32x32xf32>
    %156 = arith.addf %151, %155 : vector<32x32xf32>
    %157 = arith.addf %156, %90 : vector<32x32xf32>
    %158 = tpu.concatenate %112, %127, %142, %157 in 1 : vector<32x32xf32>, vector<32x32xf32>, vector<32x32xf32>, vector<32x32xf32> -> vector<32x128xf32>
    %159 = arith.addf %158, %81 : vector<32x128xf32>
    %cst_39 = arith.constant dense<0xFF800000> : vector<32xf32>
    %160 = vector.multi_reduction <maximumf>, %159, %cst_39 [1] : vector<32x128xf32> to vector<32xf32>
    %161 = vector.shape_cast %160 : vector<32xf32> to vector<32x1xf32>
    %162 = vector.broadcast %161 : vector<32x1xf32> to vector<32x128xf32>
    %163 = arith.subf %159, %162 : vector<32x128xf32>
    %164 = math.exp %163 : vector<32x128xf32>
    %c0_40 = arith.constant 0 : index
    %c0_41 = arith.constant 0 : index
    %165 = vector.load %arg13[%c0_40, %c0_41] : memref<128x4xf32, #tpu.memory_space<vmem>>, vector<128x4xf32>
    %cst_42 = arith.constant dense<0.000000e+00> : vector<32x4xf32>
    %166 = tpu.matmul %164, %165, %cst_42 {dimension_numbers = #tpu.dot_dimension_numbers<[1], [0], [0], [1], [0, 0, 1, 1], [], []>} : vector<32x128xf32>, vector<128x4xf32>, vector<32x4xf32> -> vector<32x4xf32>
    %cst_43 = arith.constant 1.000000e+00 : f32
    %167 = vector.broadcast %cst_43 : f32 to vector<32x4xf32>
    %168 = arith.divf %167, %166 : vector<32x4xf32>
    %c0_44 = arith.constant 0 : index
    %c0_45 = arith.constant 0 : index
    %169 = vector.load %arg14[%c0_44, %c0_45] : memref<4x80xf32, #tpu.memory_space<vmem>>, vector<4x80xf32>
    %170 = vector.extract_strided_slice %8 {offsets = [0, 64], sizes = [32, 32], strides = [1, 1]} : vector<32x240xf32> to vector<32x32xf32>
    %171 = vector.extract_strided_slice %33 {offsets = [0, 32], sizes = [32, 16], strides = [1, 1]} : vector<32x48xf32> to vector<32x16xf32>
    %172 = vector.extract_strided_slice %43 {offsets = [0, 32], sizes = [32, 16], strides = [1, 1]} : vector<32x48xf32> to vector<32x16xf32>
    %173 = vector.extract_strided_slice %53 {offsets = [0, 32], sizes = [32, 16], strides = [1, 1]} : vector<32x48xf32> to vector<32x16xf32>
    %174 = tpu.concatenate %170, %171, %172, %173 in 1 : vector<32x32xf32>, vector<32x16xf32>, vector<32x16xf32>, vector<32x16xf32> -> vector<32x80xf32>
    %175 = vector.extract_strided_slice %169 {offsets = [0, 0], sizes = [1, 80], strides = [1, 1]} : vector<4x80xf32> to vector<1x80xf32>
    %176 = vector.broadcast %175 : vector<1x80xf32> to vector<32x80xf32>
    %177 = arith.mulf %174, %176 : vector<32x80xf32>
    %178 = vector.extract_strided_slice %169 {offsets = [1, 0], sizes = [1, 80], strides = [1, 1]} : vector<4x80xf32> to vector<1x80xf32>
    %179 = vector.broadcast %178 : vector<1x80xf32> to vector<32x80xf32>
    %180 = arith.mulf %174, %179 : vector<32x80xf32>
    %181 = vector.extract_strided_slice %169 {offsets = [2, 0], sizes = [1, 80], strides = [1, 1]} : vector<4x80xf32> to vector<1x80xf32>
    %182 = vector.broadcast %181 : vector<1x80xf32> to vector<32x80xf32>
    %183 = arith.mulf %174, %182 : vector<32x80xf32>
    %184 = vector.extract_strided_slice %169 {offsets = [3, 0], sizes = [1, 80], strides = [1, 1]} : vector<4x80xf32> to vector<1x80xf32>
    %185 = vector.broadcast %184 : vector<1x80xf32> to vector<32x80xf32>
    %186 = arith.mulf %174, %185 : vector<32x80xf32>
    %187 = tpu.concatenate %177, %180, %183, %186 in 0 : vector<32x80xf32>, vector<32x80xf32>, vector<32x80xf32>, vector<32x80xf32> -> vector<128x80xf32>
    %cst_46 = arith.constant dense<0.000000e+00> : vector<32x80xf32>
    %188 = tpu.matmul %164, %187, %cst_46 {dimension_numbers = #tpu.dot_dimension_numbers<[1], [0], [0], [1], [0, 0, 1, 1], [], []>} : vector<32x128xf32>, vector<128x80xf32>, vector<32x80xf32> -> vector<32x80xf32>
    %cst_47 = arith.constant dense<0.000000e+00> : vector<32x80xf32>
    %189 = tpu.matmul %168, %169, %cst_47 {dimension_numbers = #tpu.dot_dimension_numbers<[1], [0], [0], [1], [0, 0, 1, 1], [], []>} : vector<32x4xf32>, vector<4x80xf32>, vector<32x80xf32> -> vector<32x80xf32>
    %190 = arith.mulf %188, %189 : vector<32x80xf32>
    %191 = vector.extract_strided_slice %164 {offsets = [0, 0], sizes = [32, 32], strides = [1, 1]} : vector<32x128xf32> to vector<32x32xf32>
    %c0_48 = arith.constant 0 : index
    %c0_49 = arith.constant 0 : index
    %192 = vector.load %arg10[%c0_48, %c0_49] : memref<32x256xf32, #tpu.memory_space<vmem>>, vector<32x256xf32>
    %cst_50 = arith.constant dense<0.000000e+00> : vector<32x256xf32>
    %193 = tpu.matmul %191, %192, %cst_50 {dimension_numbers = #tpu.dot_dimension_numbers<[1], [0], [0], [1], [0, 0, 1, 1], [], []>} : vector<32x32xf32>, vector<32x256xf32>, vector<32x256xf32> -> vector<32x256xf32>
    %194 = arith.mulf %193, %1 : vector<32x256xf32>
    %c0_51 = arith.constant 0 : index
    %c0_52 = arith.constant 0 : index
    %195 = vector.load %arg11[%c0_51, %c0_52] : memref<16x256xf32, #tpu.memory_space<vmem>>, vector<16x256xf32>
    %cst_53 = arith.constant dense<0.000000e+00> : vector<32x16xf32>
    %196 = tpu.matmul %194, %195, %cst_53 {dimension_numbers = #tpu.dot_dimension_numbers<[1], [1], [0], [0], [0, 0, 1, 0], [], []>} : vector<32x256xf32>, vector<16x256xf32>, vector<32x16xf32> -> vector<32x16xf32>
    %197 = vector.extract_strided_slice %168 {offsets = [0, 0], sizes = [32, 1], strides = [1, 1]} : vector<32x4xf32> to vector<32x1xf32>
    %198 = vector.broadcast %197 : vector<32x1xf32> to vector<32x16xf32>
    %199 = arith.mulf %196, %198 : vector<32x16xf32>
    %200 = vector.extract_strided_slice %164 {offsets = [0, 32], sizes = [32, 32], strides = [1, 1]} : vector<32x128xf32> to vector<32x32xf32>
    %c0_54 = arith.constant 0 : index
    %c0_55 = arith.constant 0 : index
    %201 = vector.load %arg10[%c0_54, %c0_55] : memref<32x256xf32, #tpu.memory_space<vmem>>, vector<32x256xf32>
    %cst_56 = arith.constant dense<0.000000e+00> : vector<32x256xf32>
    %202 = tpu.matmul %200, %201, %cst_56 {dimension_numbers = #tpu.dot_dimension_numbers<[1], [0], [0], [1], [0, 0, 1, 1], [], []>} : vector<32x32xf32>, vector<32x256xf32>, vector<32x256xf32> -> vector<32x256xf32>
    %203 = arith.mulf %202, %1 : vector<32x256xf32>
    %c0_57 = arith.constant 0 : index
    %c0_58 = arith.constant 0 : index
    %204 = vector.load %arg11[%c0_57, %c0_58] : memref<16x256xf32, #tpu.memory_space<vmem>>, vector<16x256xf32>
    %cst_59 = arith.constant dense<0.000000e+00> : vector<32x16xf32>
    %205 = tpu.matmul %203, %204, %cst_59 {dimension_numbers = #tpu.dot_dimension_numbers<[1], [1], [0], [0], [0, 0, 1, 0], [], []>} : vector<32x256xf32>, vector<16x256xf32>, vector<32x16xf32> -> vector<32x16xf32>
    %206 = vector.extract_strided_slice %168 {offsets = [0, 1], sizes = [32, 1], strides = [1, 1]} : vector<32x4xf32> to vector<32x1xf32>
    %207 = vector.broadcast %206 : vector<32x1xf32> to vector<32x16xf32>
    %208 = arith.mulf %205, %207 : vector<32x16xf32>
    %209 = vector.extract_strided_slice %164 {offsets = [0, 64], sizes = [32, 32], strides = [1, 1]} : vector<32x128xf32> to vector<32x32xf32>
    %c0_60 = arith.constant 0 : index
    %c0_61 = arith.constant 0 : index
    %210 = vector.load %arg10[%c0_60, %c0_61] : memref<32x256xf32, #tpu.memory_space<vmem>>, vector<32x256xf32>
    %cst_62 = arith.constant dense<0.000000e+00> : vector<32x256xf32>
    %211 = tpu.matmul %209, %210, %cst_62 {dimension_numbers = #tpu.dot_dimension_numbers<[1], [0], [0], [1], [0, 0, 1, 1], [], []>} : vector<32x32xf32>, vector<32x256xf32>, vector<32x256xf32> -> vector<32x256xf32>
    %212 = arith.mulf %211, %1 : vector<32x256xf32>
    %c0_63 = arith.constant 0 : index
    %c0_64 = arith.constant 0 : index
    %213 = vector.load %arg11[%c0_63, %c0_64] : memref<16x256xf32, #tpu.memory_space<vmem>>, vector<16x256xf32>
    %cst_65 = arith.constant dense<0.000000e+00> : vector<32x16xf32>
    %214 = tpu.matmul %212, %213, %cst_65 {dimension_numbers = #tpu.dot_dimension_numbers<[1], [1], [0], [0], [0, 0, 1, 0], [], []>} : vector<32x256xf32>, vector<16x256xf32>, vector<32x16xf32> -> vector<32x16xf32>
    %215 = vector.extract_strided_slice %168 {offsets = [0, 2], sizes = [32, 1], strides = [1, 1]} : vector<32x4xf32> to vector<32x1xf32>
    %216 = vector.broadcast %215 : vector<32x1xf32> to vector<32x16xf32>
    %217 = arith.mulf %214, %216 : vector<32x16xf32>
    %218 = vector.extract_strided_slice %164 {offsets = [0, 96], sizes = [32, 32], strides = [1, 1]} : vector<32x128xf32> to vector<32x32xf32>
    %c0_66 = arith.constant 0 : index
    %c0_67 = arith.constant 0 : index
    %219 = vector.load %arg10[%c0_66, %c0_67] : memref<32x256xf32, #tpu.memory_space<vmem>>, vector<32x256xf32>
    %cst_68 = arith.constant dense<0.000000e+00> : vector<32x256xf32>
    %220 = tpu.matmul %218, %219, %cst_68 {dimension_numbers = #tpu.dot_dimension_numbers<[1], [0], [0], [1], [0, 0, 1, 1], [], []>} : vector<32x32xf32>, vector<32x256xf32>, vector<32x256xf32> -> vector<32x256xf32>
    %221 = arith.mulf %220, %1 : vector<32x256xf32>
    %c0_69 = arith.constant 0 : index
    %c0_70 = arith.constant 0 : index
    %222 = vector.load %arg11[%c0_69, %c0_70] : memref<16x256xf32, #tpu.memory_space<vmem>>, vector<16x256xf32>
    %cst_71 = arith.constant dense<0.000000e+00> : vector<32x16xf32>
    %223 = tpu.matmul %221, %222, %cst_71 {dimension_numbers = #tpu.dot_dimension_numbers<[1], [1], [0], [0], [0, 0, 1, 0], [], []>} : vector<32x256xf32>, vector<16x256xf32>, vector<32x16xf32> -> vector<32x16xf32>
    %224 = vector.extract_strided_slice %168 {offsets = [0, 3], sizes = [32, 1], strides = [1, 1]} : vector<32x4xf32> to vector<32x1xf32>
    %225 = vector.broadcast %224 : vector<32x1xf32> to vector<32x16xf32>
    %226 = arith.mulf %223, %225 : vector<32x16xf32>
    %227 = vector.extract_strided_slice %190 {offsets = [0, 32], sizes = [32, 16], strides = [1, 1]} : vector<32x80xf32> to vector<32x16xf32>
    %228 = vector.broadcast %18 : vector<32x1xf32> to vector<32x16xf32>
    %229 = arith.subf %227, %228 : vector<32x16xf32>
    %230 = vector.extract_strided_slice %190 {offsets = [0, 48], sizes = [32, 16], strides = [1, 1]} : vector<32x80xf32> to vector<32x16xf32>
    %231 = vector.broadcast %19 : vector<32x1xf32> to vector<32x16xf32>
    %232 = arith.subf %230, %231 : vector<32x16xf32>
    %233 = vector.extract_strided_slice %190 {offsets = [0, 64], sizes = [32, 16], strides = [1, 1]} : vector<32x80xf32> to vector<32x16xf32>
    %234 = vector.broadcast %20 : vector<32x1xf32> to vector<32x16xf32>
    %235 = arith.subf %233, %234 : vector<32x16xf32>
    %236 = vector.broadcast %9 : vector<32x1xf32> to vector<32x16xf32>
    %237 = arith.mulf %236, %229 : vector<32x16xf32>
    %238 = vector.broadcast %12 : vector<32x1xf32> to vector<32x16xf32>
    %239 = arith.mulf %238, %232 : vector<32x16xf32>
    %240 = arith.addf %237, %239 : vector<32x16xf32>
    %241 = vector.broadcast %15 : vector<32x1xf32> to vector<32x16xf32>
    %242 = arith.mulf %241, %235 : vector<32x16xf32>
    %243 = arith.addf %240, %242 : vector<32x16xf32>
    %244 = vector.broadcast %10 : vector<32x1xf32> to vector<32x16xf32>
    %245 = arith.mulf %244, %229 : vector<32x16xf32>
    %246 = vector.broadcast %13 : vector<32x1xf32> to vector<32x16xf32>
    %247 = arith.mulf %246, %232 : vector<32x16xf32>
    %248 = arith.addf %245, %247 : vector<32x16xf32>
    %249 = vector.broadcast %16 : vector<32x1xf32> to vector<32x16xf32>
    %250 = arith.mulf %249, %235 : vector<32x16xf32>
    %251 = arith.addf %248, %250 : vector<32x16xf32>
    %252 = vector.broadcast %11 : vector<32x1xf32> to vector<32x16xf32>
    %253 = arith.mulf %252, %229 : vector<32x16xf32>
    %254 = vector.broadcast %14 : vector<32x1xf32> to vector<32x16xf32>
    %255 = arith.mulf %254, %232 : vector<32x16xf32>
    %256 = arith.addf %253, %255 : vector<32x16xf32>
    %257 = vector.broadcast %17 : vector<32x1xf32> to vector<32x16xf32>
    %258 = arith.mulf %257, %235 : vector<32x16xf32>
    %259 = arith.addf %256, %258 : vector<32x16xf32>
    %260 = arith.mulf %243, %243 : vector<32x16xf32>
    %261 = arith.mulf %251, %251 : vector<32x16xf32>
    %262 = arith.addf %260, %261 : vector<32x16xf32>
    %263 = arith.mulf %259, %259 : vector<32x16xf32>
    %264 = arith.addf %262, %263 : vector<32x16xf32>
    %265 = math.sqrt %264 : vector<32x16xf32>
    %cst_72 = arith.constant 9.99999974E-5 : f32
    %266 = vector.broadcast %cst_72 : f32 to vector<32x16xf32>
    %267 = arith.addf %265, %266 : vector<32x16xf32>
    %cst_73 = arith.constant 1.000000e+00 : f32
    %268 = vector.broadcast %cst_73 : f32 to vector<32x16xf32>
    %269 = arith.divf %268, %267 : vector<32x16xf32>
    %270 = vector.extract_strided_slice %190 {offsets = [0, 0], sizes = [32, 32], strides = [1, 1]} : vector<32x80xf32> to vector<32x32xf32>
    %271 = arith.mulf %243, %269 : vector<32x16xf32>
    %272 = arith.mulf %251, %269 : vector<32x16xf32>
    %273 = arith.mulf %259, %269 : vector<32x16xf32>
    %274 = tpu.concatenate %199, %208, %217, %226, %270, %243, %251, %259, %265, %271, %272, %273 in 1 : vector<32x16xf32>, vector<32x16xf32>, vector<32x16xf32>, vector<32x16xf32>, vector<32x32xf32>, vector<32x16xf32>, vector<32x16xf32>, vector<32x16xf32>, vector<32x16xf32>, vector<32x16xf32>, vector<32x16xf32>, vector<32x16xf32> -> vector<32x208xf32>
    %c0_74 = arith.constant 0 : index
    %c0_75 = arith.constant 0 : index
    %275 = vector.load %arg17[%c0_74, %c0_75] : memref<208x32xf32, #tpu.memory_space<vmem>>, vector<208x32xf32>
    %cst_76 = arith.constant dense<0.000000e+00> : vector<32x32xf32>
    %276 = tpu.matmul %274, %275, %cst_76 {dimension_numbers = #tpu.dot_dimension_numbers<[1], [0], [0], [1], [0, 0, 1, 1], [], []>} : vector<32x208xf32>, vector<208x32xf32>, vector<32x32xf32> -> vector<32x32xf32>
    %c0_77 = arith.constant 0 : index
    %c0_78 = arith.constant 0 : index
    %277 = vector.load %arg18[%c0_77, %c0_78] : memref<1x32xf32, #tpu.memory_space<vmem>>, vector<1x32xf32>
    %278 = vector.broadcast %277 : vector<1x32xf32> to vector<32x32xf32>
    %279 = arith.addf %276, %278 : vector<32x32xf32>
    %280 = vector.broadcast %4 : vector<32x1xf32> to vector<32x32xf32>
    %281 = arith.mulf %279, %280 : vector<32x32xf32>
    %282 = arith.addf %0, %281 : vector<32x32xf32>
    %c0_79 = arith.constant 0 : index
    %c0_80 = arith.constant 0 : index
    %283 = vector.load %arg19[%c0_79, %c0_80] : memref<1x32xf32, #tpu.memory_space<vmem>>, vector<1x32xf32>
    %c0_81 = arith.constant 0 : index
    %c0_82 = arith.constant 0 : index
    %284 = vector.load %arg20[%c0_81, %c0_82] : memref<1x32xf32, #tpu.memory_space<vmem>>, vector<1x32xf32>
    %cst_83 = arith.constant dense<0.000000e+00> : vector<32xf32>
    %285 = vector.multi_reduction <add>, %282, %cst_83 [1] : vector<32x32xf32> to vector<32xf32>
    %286 = vector.shape_cast %285 : vector<32xf32> to vector<32x1xf32>
    %cst_84 = arith.constant 3.200000e+01 : f32
    %287 = vector.broadcast %cst_84 : f32 to vector<32x1xf32>
    %288 = arith.divf %286, %287 : vector<32x1xf32>
    %289 = vector.broadcast %288 : vector<32x1xf32> to vector<32x32xf32>
    %290 = arith.subf %282, %289 : vector<32x32xf32>
    %291 = arith.mulf %290, %290 : vector<32x32xf32>
    %cst_85 = arith.constant dense<0.000000e+00> : vector<32xf32>
    %292 = vector.multi_reduction <add>, %291, %cst_85 [1] : vector<32x32xf32> to vector<32xf32>
    %293 = vector.shape_cast %292 : vector<32xf32> to vector<32x1xf32>
    %cst_86 = arith.constant 3.200000e+01 : f32
    %294 = vector.broadcast %cst_86 : f32 to vector<32x1xf32>
    %295 = arith.divf %293, %294 : vector<32x1xf32>
    %cst_87 = arith.constant 9.99999974E-6 : f32
    %296 = vector.broadcast %cst_87 : f32 to vector<32x1xf32>
    %297 = arith.addf %295, %296 : vector<32x1xf32>
    %298 = math.rsqrt %297 : vector<32x1xf32>
    %299 = vector.broadcast %298 : vector<32x1xf32> to vector<32x32xf32>
    %300 = arith.mulf %290, %299 : vector<32x32xf32>
    %301 = vector.broadcast %283 : vector<1x32xf32> to vector<32x32xf32>
    %302 = arith.mulf %300, %301 : vector<32x32xf32>
    %303 = vector.broadcast %284 : vector<1x32xf32> to vector<32x32xf32>
    %304 = arith.addf %302, %303 : vector<32x32xf32>
    %c0_88 = arith.constant 0 : index
    %c0_89 = arith.constant 0 : index
    %305 = vector.load %arg21[%c0_88, %c0_89] : memref<32x32xf32, #tpu.memory_space<vmem>>, vector<32x32xf32>
    %cst_90 = arith.constant dense<0.000000e+00> : vector<32x32xf32>
    %306 = tpu.matmul %304, %305, %cst_90 {dimension_numbers = #tpu.dot_dimension_numbers<[1], [0], [0], [1], [0, 0, 1, 1], [], []>} : vector<32x32xf32>, vector<32x32xf32>, vector<32x32xf32> -> vector<32x32xf32>
    %c0_91 = arith.constant 0 : index
    %c0_92 = arith.constant 0 : index
    %307 = vector.load %arg22[%c0_91, %c0_92] : memref<1x32xf32, #tpu.memory_space<vmem>>, vector<1x32xf32>
    %308 = vector.broadcast %307 : vector<1x32xf32> to vector<32x32xf32>
    %309 = arith.addf %306, %308 : vector<32x32xf32>
    %cst_93 = arith.constant 0.000000e+00 : f32
    %310 = vector.broadcast %cst_93 : f32 to vector<32x32xf32>
    %311 = arith.maximumf %309, %310 : vector<32x32xf32>
    %c0_94 = arith.constant 0 : index
    %c0_95 = arith.constant 0 : index
    %312 = vector.load %arg23[%c0_94, %c0_95] : memref<32x32xf32, #tpu.memory_space<vmem>>, vector<32x32xf32>
    %cst_96 = arith.constant dense<0.000000e+00> : vector<32x32xf32>
    %313 = tpu.matmul %311, %312, %cst_96 {dimension_numbers = #tpu.dot_dimension_numbers<[1], [0], [0], [1], [0, 0, 1, 1], [], []>} : vector<32x32xf32>, vector<32x32xf32>, vector<32x32xf32> -> vector<32x32xf32>
    %c0_97 = arith.constant 0 : index
    %c0_98 = arith.constant 0 : index
    %314 = vector.load %arg24[%c0_97, %c0_98] : memref<1x32xf32, #tpu.memory_space<vmem>>, vector<1x32xf32>
    %315 = vector.broadcast %314 : vector<1x32xf32> to vector<32x32xf32>
    %316 = arith.addf %313, %315 : vector<32x32xf32>
    %cst_99 = arith.constant 0.000000e+00 : f32
    %317 = vector.broadcast %cst_99 : f32 to vector<32x32xf32>
    %318 = arith.maximumf %316, %317 : vector<32x32xf32>
    %c0_100 = arith.constant 0 : index
    %c0_101 = arith.constant 0 : index
    %319 = vector.load %arg25[%c0_100, %c0_101] : memref<32x32xf32, #tpu.memory_space<vmem>>, vector<32x32xf32>
    %cst_102 = arith.constant dense<0.000000e+00> : vector<32x32xf32>
    %320 = tpu.matmul %318, %319, %cst_102 {dimension_numbers = #tpu.dot_dimension_numbers<[1], [0], [0], [1], [0, 0, 1, 1], [], []>} : vector<32x32xf32>, vector<32x32xf32>, vector<32x32xf32> -> vector<32x32xf32>
    %c0_103 = arith.constant 0 : index
    %c0_104 = arith.constant 0 : index
    %321 = vector.load %arg26[%c0_103, %c0_104] : memref<1x32xf32, #tpu.memory_space<vmem>>, vector<1x32xf32>
    %322 = vector.broadcast %321 : vector<1x32xf32> to vector<32x32xf32>
    %323 = arith.addf %320, %322 : vector<32x32xf32>
    %324 = arith.addf %304, %323 : vector<32x32xf32>
    %c0_105 = arith.constant 0 : index
    %c0_106 = arith.constant 0 : index
    %325 = vector.load %arg27[%c0_105, %c0_106] : memref<1x32xf32, #tpu.memory_space<vmem>>, vector<1x32xf32>
    %c0_107 = arith.constant 0 : index
    %c0_108 = arith.constant 0 : index
    %326 = vector.load %arg28[%c0_107, %c0_108] : memref<1x32xf32, #tpu.memory_space<vmem>>, vector<1x32xf32>
    %cst_109 = arith.constant dense<0.000000e+00> : vector<32xf32>
    %327 = vector.multi_reduction <add>, %324, %cst_109 [1] : vector<32x32xf32> to vector<32xf32>
    %328 = vector.shape_cast %327 : vector<32xf32> to vector<32x1xf32>
    %cst_110 = arith.constant 3.200000e+01 : f32
    %329 = vector.broadcast %cst_110 : f32 to vector<32x1xf32>
    %330 = arith.divf %328, %329 : vector<32x1xf32>
    %331 = vector.broadcast %330 : vector<32x1xf32> to vector<32x32xf32>
    %332 = arith.subf %324, %331 : vector<32x32xf32>
    %333 = arith.mulf %332, %332 : vector<32x32xf32>
    %cst_111 = arith.constant dense<0.000000e+00> : vector<32xf32>
    %334 = vector.multi_reduction <add>, %333, %cst_111 [1] : vector<32x32xf32> to vector<32xf32>
    %335 = vector.shape_cast %334 : vector<32xf32> to vector<32x1xf32>
    %cst_112 = arith.constant 3.200000e+01 : f32
    %336 = vector.broadcast %cst_112 : f32 to vector<32x1xf32>
    %337 = arith.divf %335, %336 : vector<32x1xf32>
    %cst_113 = arith.constant 9.99999974E-6 : f32
    %338 = vector.broadcast %cst_113 : f32 to vector<32x1xf32>
    %339 = arith.addf %337, %338 : vector<32x1xf32>
    %340 = math.rsqrt %339 : vector<32x1xf32>
    %341 = vector.broadcast %340 : vector<32x1xf32> to vector<32x32xf32>
    %342 = arith.mulf %332, %341 : vector<32x32xf32>
    %343 = vector.broadcast %325 : vector<1x32xf32> to vector<32x32xf32>
    %344 = arith.mulf %342, %343 : vector<32x32xf32>
    %345 = vector.broadcast %326 : vector<1x32xf32> to vector<32x32xf32>
    %346 = arith.addf %344, %345 : vector<32x32xf32>
    %c0_114 = arith.constant 0 : index
    %c0_115 = arith.constant 0 : index
    %347 = vector.load %arg29[%c0_114, %c0_115] : memref<32x32xf32, #tpu.memory_space<vmem>>, vector<32x32xf32>
    tpu.vector_store %arg29[%c0_114, %c0_115], %346 {strides = array<i32>} : memref<32x32xf32, #tpu.memory_space<vmem>>, vector<32x32xf32>,
    return
  }
  func.func @transform_0(%arg0: i32) -> (i32, i32) {
    %c0_i32 = arith.constant 0 : i32
    %c0_i32_0 = arith.constant 0 : i32
    return %arg0, %c0_i32 : i32, i32
  }
  func.func @transform_1(%arg0: i32) -> (i32, i32) {
    %c0_i32 = arith.constant 0 : i32
    %c0_i32_0 = arith.constant 0 : i32
    return %arg0, %c0_i32 : i32, i32
  }
  func.func @transform_2(%arg0: i32) -> (i32, i32) {
    %c0_i32 = arith.constant 0 : i32
    %c0_i32_0 = arith.constant 0 : i32
    return %arg0, %c0_i32 : i32, i32
  }
  func.func @transform_3(%arg0: i32) -> (i32, i32) {
    %c0_i32 = arith.constant 0 : i32
    %c0_i32_0 = arith.constant 0 : i32
    return %arg0, %c0_i32 : i32, i32
  }
  func.func @transform_4(%arg0: i32) -> (i32, i32) {
    %c0_i32 = arith.constant 0 : i32
    %c0_i32_0 = arith.constant 0 : i32
    return %arg0, %c0_i32 : i32, i32
  }
  func.func @transform_5(%arg0: i32) -> (i32, i32, i32) {
    %c0_i32 = arith.constant 0 : i32
    %c0_i32_0 = arith.constant 0 : i32
    %c0_i32_1 = arith.constant 0 : i32
    return %arg0, %c0_i32, %c0_i32_0 : i32, i32, i32
  }
  func.func @transform_6(%arg0: i32) -> (i32, i32) {
    %c0_i32 = arith.constant 0 : i32
    %c0_i32_0 = arith.constant 0 : i32
    %c0_i32_1 = arith.constant 0 : i32
    return %c0_i32, %c0_i32_0 : i32, i32
  }
  func.func @transform_7(%arg0: i32) -> (i32, i32) {
    %c0_i32 = arith.constant 0 : i32
    %c0_i32_0 = arith.constant 0 : i32
    %c0_i32_1 = arith.constant 0 : i32
    return %c0_i32, %c0_i32_0 : i32, i32
  }
  func.func @transform_8(%arg0: i32) -> (i32, i32) {
    %c0_i32 = arith.constant 0 : i32
    %c0_i32_0 = arith.constant 0 : i32
    %c0_i32_1 = arith.constant 0 : i32
    return %c0_i32, %c0_i32_0 : i32, i32
  }
  func.func @transform_9(%arg0: i32) -> (i32, i32) {
    %c0_i32 = arith.constant 0 : i32
    %c0_i32_0 = arith.constant 0 : i32
    %c0_i32_1 = arith.constant 0 : i32
    return %c0_i32, %c0_i32_0 : i32, i32
  }
  func.func @transform_10(%arg0: i32) -> (i32, i32) {
    %c0_i32 = arith.constant 0 : i32
    %c0_i32_0 = arith.constant 0 : i32
    %c0_i32_1 = arith.constant 0 : i32
    return %c0_i32, %c0_i32_0 : i32, i32
  }
  func.func @transform_11(%arg0: i32) -> (i32, i32) {
    %c0_i32 = arith.constant 0 : i32
    %c0_i32_0 = arith.constant 0 : i32
    %c0_i32_1 = arith.constant 0 : i32
    return %c0_i32, %c0_i32_0 : i32, i32
  }
  func.func @transform_12(%arg0: i32) -> (i32, i32) {
    %c0_i32 = arith.constant 0 : i32
    %c0_i32_0 = arith.constant 0 : i32
    %c0_i32_1 = arith.constant 0 : i32
    return %c0_i32, %c0_i32_0 : i32, i32
  }
  func.func @transform_13(%arg0: i32) -> (i32, i32) {
    %c0_i32 = arith.constant 0 : i32
    %c0_i32_0 = arith.constant 0 : i32
    %c0_i32_1 = arith.constant 0 : i32
    return %c0_i32, %c0_i32_0 : i32, i32
  }
  func.func @transform_14(%arg0: i32) -> (i32, i32) {
    %c0_i32 = arith.constant 0 : i32
    %c0_i32_0 = arith.constant 0 : i32
    %c0_i32_1 = arith.constant 0 : i32
    return %c0_i32, %c0_i32_0 : i32, i32
  }
  func.func @transform_15(%arg0: i32) -> (i32, i32) {
    %c0_i32 = arith.constant 0 : i32
    %c0_i32_0 = arith.constant 0 : i32
    %c0_i32_1 = arith.constant 0 : i32
    return %c0_i32, %c0_i32_0 : i32, i32
  }
  func.func @transform_16(%arg0: i32) -> (i32, i32) {
    %c0_i32 = arith.constant 0 : i32
    %c0_i32_0 = arith.constant 0 : i32
    %c0_i32_1 = arith.constant 0 : i32
    return %c0_i32, %c0_i32_0 : i32, i32
  }
  func.func @transform_17(%arg0: i32) -> (i32, i32) {
    %c0_i32 = arith.constant 0 : i32
    %c0_i32_0 = arith.constant 0 : i32
    %c0_i32_1 = arith.constant 0 : i32
    return %c0_i32, %c0_i32_0 : i32, i32
  }
  func.func @transform_18(%arg0: i32) -> (i32, i32) {
    %c0_i32 = arith.constant 0 : i32
    %c0_i32_0 = arith.constant 0 : i32
    %c0_i32_1 = arith.constant 0 : i32
    return %c0_i32, %c0_i32_0 : i32, i32
  }
  func.func @transform_19(%arg0: i32) -> (i32, i32) {
    %c0_i32 = arith.constant 0 : i32
    %c0_i32_0 = arith.constant 0 : i32
    %c0_i32_1 = arith.constant 0 : i32
    return %c0_i32, %c0_i32_0 : i32, i32
  }
  func.func @transform_20(%arg0: i32) -> (i32, i32) {
    %c0_i32 = arith.constant 0 : i32
    %c0_i32_0 = arith.constant 0 : i32
    %c0_i32_1 = arith.constant 0 : i32
    return %c0_i32, %c0_i32_0 : i32, i32
  }
  func.func @transform_21(%arg0: i32) -> (i32, i32) {
    %c0_i32 = arith.constant 0 : i32
    %c0_i32_0 = arith.constant 0 : i32
    %c0_i32_1 = arith.constant 0 : i32
    return %c0_i32, %c0_i32_0 : i32, i32
  }
  func.func @transform_22(%arg0: i32) -> (i32, i32) {
    %c0_i32 = arith.constant 0 : i32
    %c0_i32_0 = arith.constant 0 : i32
    %c0_i32_1 = arith.constant 0 : i32
    return %c0_i32, %c0_i32_0 : i32, i32
  }
  func.func @transform_23(%arg0: i32) -> (i32, i32) {
    %c0_i32 = arith.constant 0 : i32
    %c0_i32_0 = arith.constant 0 : i32
    %c0_i32_1 = arith.constant 0 : i32
    return %c0_i32, %c0_i32_0 : i32, i32
  }
  func.func @transform_24(%arg0: i32) -> (i32, i32) {
    %c0_i32 = arith.constant 0 : i32
    %c0_i32_0 = arith.constant 0 : i32
    %c0_i32_1 = arith.constant 0 : i32
    return %c0_i32, %c0_i32_0 : i32, i32
  }
  func.func @transform_25(%arg0: i32) -> (i32, i32) {
    %c0_i32 = arith.constant 0 : i32
    %c0_i32_0 = arith.constant 0 : i32
    %c0_i32_1 = arith.constant 0 : i32
    return %c0_i32, %c0_i32_0 : i32, i32
  }
  func.func @transform_26(%arg0: i32) -> (i32, i32) {
    %c0_i32 = arith.constant 0 : i32
    %c0_i32_0 = arith.constant 0 : i32
    %c0_i32_1 = arith.constant 0 : i32
    return %c0_i32, %c0_i32_0 : i32, i32
  }
  func.func @transform_27(%arg0: i32) -> (i32, i32) {
    %c0_i32 = arith.constant 0 : i32
    %c0_i32_0 = arith.constant 0 : i32
    %c0_i32_1 = arith.constant 0 : i32
    return %c0_i32, %c0_i32_0 : i32, i32
  }
  func.func @transform_28(%arg0: i32) -> (i32, i32) {
    %c0_i32 = arith.constant 0 : i32
    %c0_i32_0 = arith.constant 0 : i32
    return %arg0, %c0_i32 : i32, i32
  }
}

</mosaic_0001>

<llo_original>
// kernel: ga_block_forward.1
$region0: #{ga_block_forward.1}
  #allocation0 [shape = 'u32[]', space=smem, size = 0x4, offset = 0x4, fixed_abs, tag = 'smem constant byte address 0x4 - core index']
  #allocation1 [shape = 'u32[72,128]{1,0:T(1,128)}', space=vmem, size = 0x9000, scoped, tag = 'internal scratch']
  %s0 = inlined_call_operand.vmem [shape: f32[32,32], index: 0, kind: input, shape index: {}]
  %s1 = inlined_call_operand.vmem [shape: f32[32,256], index: 1, kind: input, shape index: {}]
  %s2 = inlined_call_operand.vmem [shape: f32[32,9], index: 2, kind: input, shape index: {}]
  %s3 = inlined_call_operand.vmem [shape: f32[32,3], index: 3, kind: input, shape index: {}]
  %s4 = inlined_call_operand.vmem [shape: f32[32,1], index: 4, kind: input, shape index: {}]
  %s5 = inlined_call_operand.vmem [shape: f32[1,1,32], index: 5, kind: input, shape index: {}]
  %s6 = inlined_call_operand.vmem [shape: f32[32,240], index: 6, kind: input, shape index: {}]
  %s7 = inlined_call_operand.vmem [shape: f32[160,160], index: 7, kind: input, shape index: {}]
  %s8 = inlined_call_operand.vmem [shape: f32[256,128], index: 8, kind: input, shape index: {}]
  %s9 = inlined_call_operand.vmem [shape: f32[32,256], index: 9, kind: input, shape index: {}]
  %s10 = inlined_call_operand.vmem [shape: f32[16,256], index: 10, kind: input, shape index: {}]
  %s11 = inlined_call_operand.vmem [shape: f32[4,16], index: 11, kind: input, shape index: {}]
  %s12 = inlined_call_operand.vmem [shape: f32[128,4], index: 12, kind: input, shape index: {}]
  %s13 = inlined_call_operand.vmem [shape: f32[4,80], index: 13, kind: input, shape index: {}]
  %s14 = inlined_call_operand.vmem [shape: f32[32,32], index: 14, kind: input, shape index: {}]
  %s15 = inlined_call_operand.vmem [shape: f32[1,4], index: 15, kind: input, shape index: {}]
  %s16 = inlined_call_operand.vmem [shape: f32[208,32], index: 16, kind: input, shape index: {}]
  %s17 = inlined_call_operand.vmem [shape: f32[1,32], index: 17, kind: input, shape index: {}]
  %s18 = inlined_call_operand.vmem [shape: f32[1,32], index: 18, kind: input, shape index: {}]
  %s19 = inlined_call_operand.vmem [shape: f32[1,32], index: 19, kind: input, shape index: {}]
  %s20 = inlined_call_operand.vmem [shape: f32[32,32], index: 20, kind: input, shape index: {}]
  %s21 = inlined_call_operand.vmem [shape: f32[1,32], index: 21, kind: input, shape index: {}]
  %s22 = inlined_call_operand.vmem [shape: f32[32,32], index: 22, kind: input, shape index: {}]
  %s23 = inlined_call_operand.vmem [shape: f32[1,32], index: 23, kind: input, shape index: {}]
  %s24 = inlined_call_operand.vmem [shape: f32[32,32], index: 24, kind: input, shape index: {}]
  %s25 = inlined_call_operand.vmem [shape: f32[1,32], index: 25, kind: input, shape index: {}]
  %s26 = inlined_call_operand.vmem [shape: f32[1,32], index: 26, kind: input, shape index: {}]
  %s27 = inlined_call_operand.vmem [shape: f32[1,32], index: 27, kind: input, shape index: {}]
  %s28 = inlined_call_operand.hbm [shape: f32[32,32], index: 28, kind: output, shape index: {}]
  %s29 = sld [smem:[#allocation0]]
  $region126: #{ga_block_forward.1} parent=0
    _
  %s31 = ssub.s32 1, %s29
  %s32 = scalar_select 0, %s31, %s29
  $region1: #{ga_block_forward.1} parent=0
    #allocation2 [shape = 'u8[512]{0}', space=smem, size = 0x200, scoped, tag = 'input window, operand 15, single buffered']
    #allocation3 [shape = 's32[1]{0}', space=sflag, size = 0x4, scoped, tag = 'scoped memory for ga_block_forward.1']
    #allocation4 [shape = 's32[1]{0}', space=sflag, size = 0x4, scoped, tag = 'scoped memory for ga_block_forward.1']
    #allocation5 [shape = 'u8[16384]{0}', space=vmem, size = 0x4000, scoped, tag = 'output window, operand 0, single buffered']
    %33 = vsyncpa [#allocation4], 0
    %34 = vsyncpa [#allocation3], 0
    // Predicated region
    $region2: #{ga_block_forward.1} parent=1 // pred_check
      _
    $region3: #{ga_block_forward.1} parent=1 // pred_check_branch
      %36 = sbr.rel (0) target = $region5
    $region4: #{ga_block_forward.1} parent=1 // pred_region
      _
    $region5: #{ga_block_forward.1} parent=1 // pred_fallthru
      _
    // Predicated region
    $region6: #{ga_block_forward.1} parent=1 // pred_check
      _
    $region7: #{ga_block_forward.1} parent=1 // pred_check_branch
      %38 = sbr.rel (0) target = $region9
    $region8: #{ga_block_forward.1} parent=1 // pred_region
      _
    $region9: #{ga_block_forward.1} parent=1 // pred_fallthru
      _
    // Predicated region
    $region10: #{ga_block_forward.1} parent=1 // pred_check
      _
    $region11: #{ga_block_forward.1} parent=1 // pred_check_branch
      %40 = sbr.rel (0) target = $region13
    $region12: #{ga_block_forward.1} parent=1 // pred_region
      _
    $region13: #{ga_block_forward.1} parent=1 // pred_fallthru
      _
    // Predicated region
    $region14: #{ga_block_forward.1} parent=1 // pred_check
      _
    $region15: #{ga_block_forward.1} parent=1 // pred_check_branch
      %42 = sbr.rel (0) target = $region17
    $region16: #{ga_block_forward.1} parent=1 // pred_region
      _
    $region17: #{ga_block_forward.1} parent=1 // pred_fallthru
      _
    // Predicated region
    $region18: #{ga_block_forward.1} parent=1 // pred_check
      _
    $region19: #{ga_block_forward.1} parent=1 // pred_check_branch
      %44 = sbr.rel (0) target = $region21
    $region20: #{ga_block_forward.1} parent=1 // pred_region
      _
    $region21: #{ga_block_forward.1} parent=1 // pred_fallthru
      _
    // Predicated region
    $region22: #{ga_block_forward.1} parent=1 // pred_check
      _
    $region23: #{ga_block_forward.1} parent=1 // pred_check_branch
      %46 = sbr.rel (0) target = $region25
    $region24: #{ga_block_forward.1} parent=1 // pred_region
      _
    $region25: #{ga_block_forward.1} parent=1 // pred_fallthru
      _
    // Predicated region
    $region26: #{ga_block_forward.1} parent=1 // pred_check
      _
    $region27: #{ga_block_forward.1} parent=1 // pred_check_branch
      %48 = sbr.rel (0) target = $region29
    $region28: #{ga_block_forward.1} parent=1 // pred_region
      _
    $region29: #{ga_block_forward.1} parent=1 // pred_fallthru
      _
    // Predicated region
    $region30: #{ga_block_forward.1} parent=1 // pred_check
      _
    $region31: #{ga_block_forward.1} parent=1 // pred_check_branch
      %50 = sbr.rel (0) target = $region33
    $region32: #{ga_block_forward.1} parent=1 // pred_region
      _
    $region33: #{ga_block_forward.1} parent=1 // pred_fallthru
      _
    // Predicated region
    $region34: #{ga_block_forward.1} parent=1 // pred_check
      _
    $region35: #{ga_block_forward.1} parent=1 // pred_check_branch
      %52 = sbr.rel (0) target = $region37
    $region36: #{ga_block_forward.1} parent=1 // pred_region
      _
    $region37: #{ga_block_forward.1} parent=1 // pred_fallthru
      _
    // Predicated region
    $region38: #{ga_block_forward.1} parent=1 // pred_check
      _
    $region39: #{ga_block_forward.1} parent=1 // pred_check_branch
      %54 = sbr.rel (0) target = $region41
    $region40: #{ga_block_forward.1} parent=1 // pred_region
      _
    $region41: #{ga_block_forward.1} parent=1 // pred_fallthru
      _
    // Predicated region
    $region42: #{ga_block_forward.1} parent=1 // pred_check
      _
    $region43: #{ga_block_forward.1} parent=1 // pred_check_branch
      %56 = sbr.rel (0) target = $region45
    $region44: #{ga_block_forward.1} parent=1 // pred_region
      _
    $region45: #{ga_block_forward.1} parent=1 // pred_fallthru
      _
    // Predicated region
    $region46: #{ga_block_forward.1} parent=1 // pred_check
      _
    $region47: #{ga_block_forward.1} parent=1 // pred_check_branch
      %58 = sbr.rel (0) target = $region49
    $region48: #{ga_block_forward.1} parent=1 // pred_region
      _
    $region49: #{ga_block_forward.1} parent=1 // pred_fallthru
      _
    // Predicated region
    $region50: #{ga_block_forward.1} parent=1 // pred_check
      _
    $region51: #{ga_block_forward.1} parent=1 // pred_check_branch
      %60 = sbr.rel (0) target = $region53
    $region52: #{ga_block_forward.1} parent=1 // pred_region
      _
    $region53: #{ga_block_forward.1} parent=1 // pred_fallthru
      _
    // Predicated region
    $region54: #{ga_block_forward.1} parent=1 // pred_check
      _
    $region55: #{ga_block_forward.1} parent=1 // pred_check_branch
      %62 = sbr.rel (0) target = $region57
    $region56: #{ga_block_forward.1} parent=1 // pred_region
      _
    $region57: #{ga_block_forward.1} parent=1 // pred_fallthru
      _
    // Predicated region
    $region58: #{ga_block_forward.1} parent=1 // pred_check
      _
    $region59: #{ga_block_forward.1} parent=1 // pred_check_branch
      %64 = sbr.rel (0) target = $region61
    $region60: #{ga_block_forward.1} parent=1 // pred_region
      _
    $region61: #{ga_block_forward.1} parent=1 // pred_fallthru
      _
    // Predicated region
    $region62: #{ga_block_forward.1} parent=1 // pred_check
      _
    $region63: #{ga_block_forward.1} parent=1 // pred_check_branch
      %66 = sbr.rel (0) target = $region65
    $region64: #{ga_block_forward.1} parent=1 // pred_region
      %68 = vsyncadd [#allocation4], 0
      %s70 = sshll.u32 %s15, 4
      %s71 = int_to_ptr.vmem [resolvable:$true] %s70
      %73 = dma.vmem_to_smem %s71, 16, [#allocation2], [#allocation4]
    $region65: #{ga_block_forward.1} parent=1 // pred_fallthru
      _
    // Predicated region
    $region66: #{ga_block_forward.1} parent=1 // pred_check
      _
    $region67: #{ga_block_forward.1} parent=1 // pred_check_branch
      %75 = sbr.rel (0) target = $region69
    $region68: #{ga_block_forward.1} parent=1 // pred_region
      _
    $region69: #{ga_block_forward.1} parent=1 // pred_fallthru
      _
    // Predicated region
    $region70: #{ga_block_forward.1} parent=1 // pred_check
      _
    $region71: #{ga_block_forward.1} parent=1 // pred_check_branch
      %77 = sbr.rel (0) target = $region73
    $region72: #{ga_block_forward.1} parent=1 // pred_region
      _
    $region73: #{ga_block_forward.1} parent=1 // pred_fallthru
      _
    // Predicated region
    $region74: #{ga_block_forward.1} parent=1 // pred_check
      _
    $region75: #{ga_block_forward.1} parent=1 // pred_check_branch
      %79 = sbr.rel (0) target = $region77
    $region76: #{ga_block_forward.1} parent=1 // pred_region
      _
    $region77: #{ga_block_forward.1} parent=1 // pred_fallthru
      _
    // Predicated region
    $region78: #{ga_block_forward.1} parent=1 // pred_check
      _
    $region79: #{ga_block_forward.1} parent=1 // pred_check_branch
      %81 = sbr.rel (0) target = $region81
    $region80: #{ga_block_forward.1} parent=1 // pred_region
      _
    $region81: #{ga_block_forward.1} parent=1 // pred_fallthru
      _
    // Predicated region
    $region82: #{ga_block_forward.1} parent=1 // pred_check
      _
    $region83: #{ga_block_forward.1} parent=1 // pred_check_branch
      %83 = sbr.rel (0) target = $region85
    $region84: #{ga_block_forward.1} parent=1 // pred_region
      _
    $region85: #{ga_block_forward.1} parent=1 // pred_fallthru
      _
    // Predicated region
    $region86: #{ga_block_forward.1} parent=1 // pred_check
      _
    $region87: #{ga_block_forward.1} parent=1 // pred_check_branch
      %85 = sbr.rel (0) target = $region89
    $region88: #{ga_block_forward.1} parent=1 // pred_region
      _
    $region89: #{ga_block_forward.1} parent=1 // pred_fallthru
      _
    // Predicated region
    $region90: #{ga_block_forward.1} parent=1 // pred_check
      _
    $region91: #{ga_block_forward.1} parent=1 // pred_check_branch
      %87 = sbr.rel (0) target = $region93
    $region92: #{ga_block_forward.1} parent=1 // pred_region
      _
    $region93: #{ga_block_forward.1} parent=1 // pred_fallthru
      _
    // Predicated region
    $region94: #{ga_block_forward.1} parent=1 // pred_check
      _
    $region95: #{ga_block_forward.1} parent=1 // pred_check_branch
      %89 = sbr.rel (0) target = $region97
    $region96: #{ga_block_forward.1} parent=1 // pred_region
      _
    $region97: #{ga_block_forward.1} parent=1 // pred_fallthru
      _
    // Predicated region
    $region98: #{ga_block_forward.1} parent=1 // pred_check
      _
    $region99: #{ga_block_forward.1} parent=1 // pred_check_branch
      %91 = sbr.rel (0) target = $region101
    $region100: #{ga_block_forward.1} parent=1 // pred_region
      _
    $region101: #{ga_block_forward.1} parent=1 // pred_fallthru
      _
    // Predicated region
    $region102: #{ga_block_forward.1} parent=1 // pred_check
      _
    $region103: #{ga_block_forward.1} parent=1 // pred_check_branch
      %93 = sbr.rel (0) target = $region105
    $region104: #{ga_block_forward.1} parent=1 // pred_region
      _
    $region105: #{ga_block_forward.1} parent=1 // pred_fallthru
      _
    // Predicated region
    $region106: #{ga_block_forward.1} parent=1 // pred_check
      _
    $region107: #{ga_block_forward.1} parent=1 // pred_check_branch
      %95 = sbr.rel (0) target = $region109
    $region108: #{ga_block_forward.1} parent=1 // pred_region
      _
    $region109: #{ga_block_forward.1} parent=1 // pred_fallthru
      _
    // Predicated region
    $region110: #{ga_block_forward.1} parent=1 // pred_check
      _
    $region111: #{ga_block_forward.1} parent=1 // pred_check_branch
      %97 = sbr.rel (0) target = $region113
    $region112: #{ga_block_forward.1} parent=1 // pred_region
      _
    $region113: #{ga_block_forward.1} parent=1 // pred_fallthru
      _
    // Predicated region
    $region114: #{ga_block_forward.1} parent=1 // pred_check
      _
    $region115: #{ga_block_forward.1} parent=1 // pred_check_branch
      %99 = sbr.rel (0) target = $region117
    $region116: #{ga_block_forward.1} parent=1 // pred_region
      %101 = dma.done [#allocation4], 16
    $region117: #{ga_block_forward.1} parent=1 // pred_fallthru
      _
    %102 = sfence
    %v103 = vld [vmem:[%s0] sm:$0xff]
    %v104 = vld [vmem:[%s0 + $0x8] sm:$0xff]
    %v105 = vld [vmem:[%s0 + $0x10] sm:$0xff]
    %v106 = vld [vmem:[%s0 + $0x18] sm:$0xff]
    %v107 = vld [vmem:[%s1] sm:$0xff]
    %v108 = vld [vmem:[%s1 + $0x8] sm:$0xff]
    %v109 = vld [vmem:[%s1 + $0x10] sm:$0xff]
    %v110 = vld [vmem:[%s1 + $0x18] sm:$0xff]
    %v111 = vld [vmem:[%s1 + $0x20] sm:$0xff]
    %v112 = vld [vmem:[%s1 + $0x28] sm:$0xff]
    %v113 = vld [vmem:[%s1 + $0x30] sm:$0xff]
    %v114 = vld [vmem:[%s1 + $0x38] sm:$0xff]
    %v115 = vld [vmem:[%s2] sm:$0xff]
    %v116 = vld [vmem:[%s2 + $0x8] sm:$0xff]
    %v117 = vld [vmem:[%s2 + $0x10] sm:$0xff]
    %v118 = vld [vmem:[%s2 + $0x18] sm:$0xff]
    %v119 = vld [vmem:[%s3] sm:$0xff]
    %v120 = vld [vmem:[%s3 + $0x8] sm:$0xff]
    %v121 = vld [vmem:[%s3 + $0x10] sm:$0xff]
    %v122 = vld [vmem:[%s3 + $0x18] sm:$0xff]
    %v123 = vld [vmem:[%s4] sm:$0xff]
    %v124 = vld [vmem:[%s4 + $0x8] sm:$0xff]
    %v125 = vld [vmem:[%s4 + $0x10] sm:$0xff]
    %v126 = vld [vmem:[%s4 + $0x18] sm:$0xff]
    %v127 = vld [vmem:[%s5] sm:$0x1]
    %v128 = vld [vmem:[%s6] sm:$0xff]
    %v129 = vld [vmem:[%s6 + $0x8] sm:$0xff]
    %v130 = vld [vmem:[%s6 + $0x10] sm:$0xff]
    %v131 = vld [vmem:[%s6 + $0x18] sm:$0xff]
    %v132 = vld [vmem:[%s6 + $0x20] sm:$0xff]
    %v133 = vld [vmem:[%s6 + $0x28] sm:$0xff]
    %v134 = vld [vmem:[%s6 + $0x30] sm:$0xff]
    %v135 = vld [vmem:[%s6 + $0x38] sm:$0xff]
    %vm136 = vcmask 261120
    %v138 = vsel %vm136, %v103, 0
    %v141 = vsel %vm136, %v104, 0
    %v144 = vsel %vm136, %v105, 0
    %v147 = vsel %vm136, %v106, 0
    %149 = vmatpush.msra.mxu0 0.0
    %150 = vmatpush.msra.mxu0 0.0
    %151 = vmatpush.msra.mxu0 0.0
    %152 = vmatpush.msra.mxu0 0.0
    %153 = vmatpush.msra.mxu0 0.0
    %154 = vmatpush.msra.mxu0 0.0
    %155 = vmatpush.msra.mxu0 0.0
    %156 = vmatpush.msra.mxu0 0.0
    %157 = vmatpush.msra.mxu0 0.0
    %158 = vmatpush.msra.mxu0 0.0
    %159 = vmatpush.msra.mxu0 0.0
    %160 = vmatpush.msra.mxu0 0.0
    %161 = vmatpush.msra.mxu0 %v134
    %162 = vmatpush.msra.mxu0 %v132
    %163 = vmatpush.msra.mxu0 %v130
    %164 = vmatpush.msra.mxu0 %v128
    %165 = vmatmul.f32.gmra.mxu0 %v138
    %v166 = vpop.f32.mrf.mxu0
    %v167 = vadd.f32 0.0, %v166
    %168 = vmatmul.f32.gmra.mxu0 %v141
    %v169 = vpop.f32.mrf.mxu0
    %v170 = vadd.f32 0.0, %v169
    %171 = vmatmul.f32.gmra.mxu0 %v144
    %v172 = vpop.f32.mrf.mxu0
    %v173 = vadd.f32 0.0, %v172
    %174 = vmatmul.f32.gmra.mxu0 %v147
    %v175 = vpop.f32.mrf.mxu0
    %v176 = vadd.f32 0.0, %v175
    %177 = vdwg.mxu0
    %178 = vmatpush.msra.mxu0 0.0
    %179 = vmatpush.msra.mxu0 0.0
    %180 = vmatpush.msra.mxu0 0.0
    %181 = vmatpush.msra.mxu0 0.0
    %182 = vmatpush.msra.mxu0 0.0
    %183 = vmatpush.msra.mxu0 0.0
    %184 = vmatpush.msra.mxu0 0.0
    %185 = vmatpush.msra.mxu0 0.0
    %186 = vmatpush.msra.mxu0 0.0
    %187 = vmatpush.msra.mxu0 0.0
    %188 = vmatpush.msra.mxu0 0.0
    %189 = vmatpush.msra.mxu0 0.0
    %190 = vmatpush.msra.mxu0 %v135
    %191 = vmatpush.msra.mxu0 %v133
    %192 = vmatpush.msra.mxu0 %v131
    %193 = vmatpush.msra.mxu0 %v129
    %194 = vmatmul.f32.gmra.mxu0 %v138
    %v195 = vpop.f32.mrf.mxu0
    %v196 = vadd.f32 0.0, %v195
    %197 = vmatmul.f32.gmra.mxu0 %v141
    %v198 = vpop.f32.mrf.mxu0
    %v199 = vadd.f32 0.0, %v198
    %200 = vmatmul.f32.gmra.mxu0 %v144
    %v201 = vpop.f32.mrf.mxu0
    %v202 = vadd.f32 0.0, %v201
    %203 = vmatmul.f32.gmra.mxu0 %v147
    %v204 = vpop.f32.mrf.mxu0
    %v205 = vadd.f32 0.0, %v204
    %206 = vdwg.mxu0
    %208 = vset.pattern.permute.xlu0 0
    %209 = vperm.xlu0 %208, %v115
    %v210 = vpop.permute.xlu0 %209
    %213 = vset.pattern.permute.xlu0 0
    %214 = vperm.xlu0 %213, %v116
    %v215 = vpop.permute.xlu0 %214
    %218 = vset.pattern.permute.xlu0 0
    %219 = vperm.xlu0 %218, %v117
    %v220 = vpop.permute.xlu0 %219
    %223 = vset.pattern.permute.xlu0 0
    %224 = vperm.xlu0 %223, %v118
    %v225 = vpop.permute.xlu0 %224
    %v227 = vmul.f32 %v210, %v167
    %v228 = vmul.f32 %v210, %v196
    %v229 = vmul.f32 %v215, %v170
    %v230 = vmul.f32 %v215, %v199
    %v231 = vmul.f32 %v220, %v173
    %v232 = vmul.f32 %v220, %v202
    %v233 = vmul.f32 %v225, %v176
    %v234 = vmul.f32 %v225, %v205
    %235 = vset.pattern.permute.xlu0 1
    %236 = vperm.xlu0 %235, %v115
    %v237 = vpop.permute.xlu0 %236
    %239 = vset.pattern.permute.xlu0 1
    %240 = vperm.xlu0 %239, %v116
    %v241 = vpop.permute.xlu0 %240
    %243 = vset.pattern.permute.xlu0 1
    %244 = vperm.xlu0 %243, %v117
    %v245 = vpop.permute.xlu0 %244
    %247 = vset.pattern.permute.xlu0 1
    %248 = vperm.xlu0 %247, %v118
    %v249 = vpop.permute.xlu0 %248
    %v251 = vmul.f32 %v237, %v196
    %v252 = vmul.f32 %v241, %v199
    %v253 = vmul.f32 %v245, %v202
    %v254 = vmul.f32 %v249, %v205
    %259 = vrot.lane.b32.xlu0 %v251, 80
    %v260 = vpop.permute.xlu0 %259
    %261 = vrot.lane.b32.xlu0 %v252, 80
    %v262 = vpop.permute.xlu0 %261
    %263 = vrot.lane.b32.xlu0 %v253, 80
    %v264 = vpop.permute.xlu0 %263
    %265 = vrot.lane.b32.xlu0 %v254, 80
    %v266 = vpop.permute.xlu0 %265
    %v271 = vadd.f32 %v227, %v260
    %v272 = vadd.f32 %v228, %v260
    %v273 = vadd.f32 %v229, %v262
    %v274 = vadd.f32 %v230, %v262
    %v275 = vadd.f32 %v231, %v264
    %v276 = vadd.f32 %v232, %v264
    %v277 = vadd.f32 %v233, %v266
    %v278 = vadd.f32 %v234, %v266
    %279 = vset.pattern.permute.xlu0 2
    %280 = vperm.xlu0 %279, %v115
    %v281 = vpop.permute.xlu0 %280
    %283 = vset.pattern.permute.xlu0 2
    %284 = vperm.xlu0 %283, %v116
    %v285 = vpop.permute.xlu0 %284
    %287 = vset.pattern.permute.xlu0 2
    %288 = vperm.xlu0 %287, %v117
    %v289 = vpop.permute.xlu0 %288
    %291 = vset.pattern.permute.xlu0 2
    %292 = vperm.xlu0 %291, %v118
    %v293 = vpop.permute.xlu0 %292
    %v295 = vmul.f32 %v281, %v196
    %v296 = vmul.f32 %v285, %v199
    %v297 = vmul.f32 %v289, %v202
    %v298 = vmul.f32 %v293, %v205
    %303 = vrot.lane.b32.xlu0 %v295, 32
    %v304 = vpop.permute.xlu0 %303
    %305 = vrot.lane.b32.xlu0 %v296, 32
    %v306 = vpop.permute.xlu0 %305
    %307 = vrot.lane.b32.xlu0 %v297, 32
    %v308 = vpop.permute.xlu0 %307
    %309 = vrot.lane.b32.xlu0 %v298, 32
    %v310 = vpop.permute.xlu0 %309
    %v315 = vadd.f32 %v271, %v304
    %v316 = vadd.f32 %v272, %v304
    %v317 = vadd.f32 %v273, %v306
    %v318 = vadd.f32 %v274, %v306
    %v319 = vadd.f32 %v275, %v308
    %v320 = vadd.f32 %v276, %v308
    %v321 = vadd.f32 %v277, %v310
    %v322 = vadd.f32 %v278, %v310
    %324 = vset.pattern.permute.xlu0 0
    %325 = vperm.xlu0 %324, %v119
    %v326 = vpop.permute.xlu0 %325
    %329 = vset.pattern.permute.xlu0 0
    %330 = vperm.xlu0 %329, %v120
    %v331 = vpop.permute.xlu0 %330
    %334 = vset.pattern.permute.xlu0 0
    %335 = vperm.xlu0 %334, %v121
    %v336 = vpop.permute.xlu0 %335
    %339 = vset.pattern.permute.xlu0 0
    %340 = vperm.xlu0 %339, %v122
    %v341 = vpop.permute.xlu0 %340
    %v343 = vadd.f32 %v315, %v326
    %v344 = vadd.f32 %v316, %v326
    %v345 = vadd.f32 %v317, %v331
    %v346 = vadd.f32 %v318, %v331
    %v347 = vadd.f32 %v319, %v336
    %v348 = vadd.f32 %v320, %v336
    %v349 = vadd.f32 %v321, %v341
    %v350 = vadd.f32 %v322, %v341
    %351 = vset.pattern.permute.xlu0 3
    %352 = vperm.xlu0 %351, %v115
    %v353 = vpop.permute.xlu0 %352
    %355 = vset.pattern.permute.xlu0 3
    %356 = vperm.xlu0 %355, %v116
    %v357 = vpop.permute.xlu0 %356
    %359 = vset.pattern.permute.xlu0 3
    %360 = vperm.xlu0 %359, %v117
    %v361 = vpop.permute.xlu0 %360
    %363 = vset.pattern.permute.xlu0 3
    %364 = vperm.xlu0 %363, %v118
    %v365 = vpop.permute.xlu0 %364
    %v367 = vmul.f32 %v353, %v167
    %v368 = vmul.f32 %v353, %v196
    %v369 = vmul.f32 %v357, %v170
    %v370 = vmul.f32 %v357, %v199
    %v371 = vmul.f32 %v361, %v173
    %v372 = vmul.f32 %v361, %v202
    %v373 = vmul.f32 %v365, %v176
    %v374 = vmul.f32 %v365, %v205
    %375 = vset.pattern.permute.xlu0 4
    %376 = vperm.xlu0 %375, %v115
    %v377 = vpop.permute.xlu0 %376
    %379 = vset.pattern.permute.xlu0 4
    %380 = vperm.xlu0 %379, %v116
    %v381 = vpop.permute.xlu0 %380
    %383 = vset.pattern.permute.xlu0 4
    %384 = vperm.xlu0 %383, %v117
    %v385 = vpop.permute.xlu0 %384
    %387 = vset.pattern.permute.xlu0 4
    %388 = vperm.xlu0 %387, %v118
    %v389 = vpop.permute.xlu0 %388
    %v391 = vmul.f32 %v377, %v196
    %v392 = vmul.f32 %v381, %v199
    %v393 = vmul.f32 %v385, %v202
    %v394 = vmul.f32 %v389, %v205
    %399 = vrot.lane.b32.xlu0 %v391, 80
    %v400 = vpop.permute.xlu0 %399
    %401 = vrot.lane.b32.xlu0 %v392, 80
    %v402 = vpop.permute.xlu0 %401
    %403 = vrot.lane.b32.xlu0 %v393, 80
    %v404 = vpop.permute.xlu0 %403
    %405 = vrot.lane.b32.xlu0 %v394, 80
    %v406 = vpop.permute.xlu0 %405
    %v411 = vadd.f32 %v367, %v400
    %v412 = vadd.f32 %v368, %v400
    %v413 = vadd.f32 %v369, %v402
    %v414 = vadd.f32 %v370, %v402
    %v415 = vadd.f32 %v371, %v404
    %v416 = vadd.f32 %v372, %v404
    %v417 = vadd.f32 %v373, %v406
    %v418 = vadd.f32 %v374, %v406
    %419 = vset.pattern.permute.xlu0 5
    %420 = vperm.xlu0 %419, %v115
    %v421 = vpop.permute.xlu0 %420
    %423 = vset.pattern.permute.xlu0 5
    %424 = vperm.xlu0 %423, %v116
    %v425 = vpop.permute.xlu0 %424
    %427 = vset.pattern.permute.xlu0 5
    %428 = vperm.xlu0 %427, %v117
    %v429 = vpop.permute.xlu0 %428
    %431 = vset.pattern.permute.xlu0 5
    %432 = vperm.xlu0 %431, %v118
    %v433 = vpop.permute.xlu0 %432
    %v435 = vmul.f32 %v421, %v196
    %v436 = vmul.f32 %v425, %v199
    %v437 = vmul.f32 %v429, %v202
    %v438 = vmul.f32 %v433, %v205
    %443 = vrot.lane.b32.xlu0 %v435, 32
    %v444 = vpop.permute.xlu0 %443
    %445 = vrot.lane.b32.xlu0 %v436, 32
    %v446 = vpop.permute.xlu0 %445
    %447 = vrot.lane.b32.xlu0 %v437, 32
    %v448 = vpop.permute.xlu0 %447
    %449 = vrot.lane.b32.xlu0 %v438, 32
    %v450 = vpop.permute.xlu0 %449
    %v455 = vadd.f32 %v411, %v444
    %v456 = vadd.f32 %v412, %v444
    %v457 = vadd.f32 %v413, %v446
    %v458 = vadd.f32 %v414, %v446
    %v459 = vadd.f32 %v415, %v448
    %v460 = vadd.f32 %v416, %v448
    %v461 = vadd.f32 %v417, %v450
    %v462 = vadd.f32 %v418, %v450
    %463 = vset.pattern.permute.xlu0 1
    %464 = vperm.xlu0 %463, %v119
    %v465 = vpop.permute.xlu0 %464
    %467 = vset.pattern.permute.xlu0 1
    %468 = vperm.xlu0 %467, %v120
    %v469 = vpop.permute.xlu0 %468
    %471 = vset.pattern.permute.xlu0 1
    %472 = vperm.xlu0 %471, %v121
    %v473 = vpop.permute.xlu0 %472
    %475 = vset.pattern.permute.xlu0 1
    %476 = vperm.xlu0 %475, %v122
    %v477 = vpop.permute.xlu0 %476
    %v479 = vadd.f32 %v455, %v465
    %v480 = vadd.f32 %v456, %v465
    %v481 = vadd.f32 %v457, %v469
    %v482 = vadd.f32 %v458, %v469
    %v483 = vadd.f32 %v459, %v473
    %v484 = vadd.f32 %v460, %v473
    %v485 = vadd.f32 %v461, %v477
    %v486 = vadd.f32 %v462, %v477
    %487 = vset.pattern.permute.xlu0 6
    %488 = vperm.xlu0 %487, %v115
    %v489 = vpop.permute.xlu0 %488
    %491 = vset.pattern.permute.xlu0 6
    %492 = vperm.xlu0 %491, %v116
    %v493 = vpop.permute.xlu0 %492
    %495 = vset.pattern.permute.xlu0 6
    %496 = vperm.xlu0 %495, %v117
    %v497 = vpop.permute.xlu0 %496
    %499 = vset.pattern.permute.xlu0 6
    %500 = vperm.xlu0 %499, %v118
    %v501 = vpop.permute.xlu0 %500
    %v503 = vmul.f32 %v489, %v167
    %v504 = vmul.f32 %v489, %v196
    %v505 = vmul.f32 %v493, %v170
    %v506 = vmul.f32 %v493, %v199
    %v507 = vmul.f32 %v497, %v173
    %v508 = vmul.f32 %v497, %v202
    %v509 = vmul.f32 %v501, %v176
    %v510 = vmul.f32 %v501, %v205
    %511 = vset.pattern.permute.xlu0 7
    %512 = vperm.xlu0 %511, %v115
    %v513 = vpop.permute.xlu0 %512
    %515 = vset.pattern.permute.xlu0 7
    %516 = vperm.xlu0 %515, %v116
    %v517 = vpop.permute.xlu0 %516
    %519 = vset.pattern.permute.xlu0 7
    %520 = vperm.xlu0 %519, %v117
    %v521 = vpop.permute.xlu0 %520
    %523 = vset.pattern.permute.xlu0 7
    %524 = vperm.xlu0 %523, %v118
    %v525 = vpop.permute.xlu0 %524
    %v527 = vmul.f32 %v513, %v196
    %v528 = vmul.f32 %v517, %v199
    %v529 = vmul.f32 %v521, %v202
    %v530 = vmul.f32 %v525, %v205
    %535 = vrot.lane.b32.xlu0 %v527, 80
    %v536 = vpop.permute.xlu0 %535
    %537 = vrot.lane.b32.xlu0 %v528, 80
    %v538 = vpop.permute.xlu0 %537
    %539 = vrot.lane.b32.xlu0 %v529, 80
    %v540 = vpop.permute.xlu0 %539
    %541 = vrot.lane.b32.xlu0 %v530, 80
    %v542 = vpop.permute.xlu0 %541
    %v547 = vadd.f32 %v503, %v536
    %v548 = vadd.f32 %v504, %v536
    %v549 = vadd.f32 %v505, %v538
    %v550 = vadd.f32 %v506, %v538
    %v551 = vadd.f32 %v507, %v540
    %v552 = vadd.f32 %v508, %v540
    %v553 = vadd.f32 %v509, %v542
    %v554 = vadd.f32 %v510, %v542
    %555 = vset.pattern.permute.xlu0 8
    %556 = vperm.xlu0 %555, %v115
    %v557 = vpop.permute.xlu0 %556
    %559 = vset.pattern.permute.xlu0 8
    %560 = vperm.xlu0 %559, %v116
    %v561 = vpop.permute.xlu0 %560
    %563 = vset.pattern.permute.xlu0 8
    %564 = vperm.xlu0 %563, %v117
    %v565 = vpop.permute.xlu0 %564
    %567 = vset.pattern.permute.xlu0 8
    %568 = vperm.xlu0 %567, %v118
    %v569 = vpop.permute.xlu0 %568
    %v571 = vmul.f32 %v557, %v196
    %v572 = vmul.f32 %v561, %v199
    %v573 = vmul.f32 %v565, %v202
    %v574 = vmul.f32 %v569, %v205
    %579 = vrot.lane.b32.xlu0 %v571, 32
    %v580 = vpop.permute.xlu0 %579
    %581 = vrot.lane.b32.xlu0 %v572, 32
    %v582 = vpop.permute.xlu0 %581
    %583 = vrot.lane.b32.xlu0 %v573, 32
    %v584 = vpop.permute.xlu0 %583
    %585 = vrot.lane.b32.xlu0 %v574, 32
    %v586 = vpop.permute.xlu0 %585
    %v591 = vadd.f32 %v547, %v580
    %v592 = vadd.f32 %v548, %v580
    %v593 = vadd.f32 %v549, %v582
    %v594 = vadd.f32 %v550, %v582
    %v595 = vadd.f32 %v551, %v584
    %v596 = vadd.f32 %v552, %v584
    %v597 = vadd.f32 %v553, %v586
    %v598 = vadd.f32 %v554, %v586
    %599 = vset.pattern.permute.xlu0 2
    %600 = vperm.xlu0 %599, %v119
    %v601 = vpop.permute.xlu0 %600
    %603 = vset.pattern.permute.xlu0 2
    %604 = vperm.xlu0 %603, %v120
    %v605 = vpop.permute.xlu0 %604
    %607 = vset.pattern.permute.xlu0 2
    %608 = vperm.xlu0 %607, %v121
    %v609 = vpop.permute.xlu0 %608
    %611 = vset.pattern.permute.xlu0 2
    %612 = vperm.xlu0 %611, %v122
    %v613 = vpop.permute.xlu0 %612
    %v615 = vadd.f32 %v591, %v601
    %v616 = vadd.f32 %v592, %v601
    %v617 = vadd.f32 %v593, %v605
    %v618 = vadd.f32 %v594, %v605
    %v619 = vadd.f32 %v595, %v609
    %v620 = vadd.f32 %v596, %v609
    %v621 = vadd.f32 %v597, %v613
    %v622 = vadd.f32 %v598, %v613
    %v623 = vmul.f32 %v343, %v343
    %v624 = vmul.f32 %v345, %v345
    %v625 = vmul.f32 %v347, %v347
    %v626 = vmul.f32 %v349, %v349
    %v627 = vmul.f32 %v479, %v479
    %v628 = vmul.f32 %v481, %v481
    %v629 = vmul.f32 %v483, %v483
    %v630 = vmul.f32 %v485, %v485
    %v631 = vadd.f32 %v623, %v627
    %v632 = vadd.f32 %v624, %v628
    %v633 = vadd.f32 %v625, %v629
    %v634 = vadd.f32 %v626, %v630
    %v635 = vmul.f32 %v615, %v615
    %v636 = vmul.f32 %v617, %v617
    %v637 = vmul.f32 %v619, %v619
    %v638 = vmul.f32 %v621, %v621
    %v639 = vadd.f32 %v631, %v635
    %v640 = vadd.f32 %v632, %v636
    %v641 = vadd.f32 %v633, %v637
    %v642 = vadd.f32 %v634, %v638
    %v643 = vld [vmem:[%s11] sm:$0xf]
    %648 = vrot.lane.b32.xlu0 %v639, 32
    %v649 = vpop.permute.xlu0 %648
    %650 = vrot.lane.b32.xlu0 %v640, 32
    %v651 = vpop.permute.xlu0 %650
    %652 = vrot.lane.b32.xlu0 %v641, 32
    %v653 = vpop.permute.xlu0 %652
    %654 = vrot.lane.b32.xlu0 %v642, 32
    %v655 = vpop.permute.xlu0 %654
    %vm656 = vcmask 130048
    %v657 = vsel %vm656, %v649, 0
    %v659 = vsel %vm656, %v651, 0
    %v661 = vsel %vm656, %v653, 0
    %v663 = vsel %vm656, %v655, 0
    %v666 = vsel %vm656, %v643, 0
    %668 = vmatpush.xpose.msra.mxu0 0.0
    %669 = vmatpush.xpose.msra.mxu0 0.0
    %670 = vmatpush.xpose.msra.mxu0 0.0
    %671 = vmatpush.xpose.msra.mxu0 0.0
    %672 = vmatpush.xpose.msra.mxu0 0.0
    %673 = vmatpush.xpose.msra.mxu0 0.0
    %674 = vmatpush.xpose.msra.mxu0 0.0
    %675 = vmatpush.xpose.msra.mxu0 0.0
    %676 = vmatpush.xpose.msra.mxu0 0.0
    %677 = vmatpush.xpose.msra.mxu0 0.0
    %678 = vmatpush.xpose.msra.mxu0 0.0
    %679 = vmatpush.xpose.msra.mxu0 0.0
    %680 = vmatpush.xpose.msra.mxu0 0.0
    %681 = vmatpush.xpose.msra.mxu0 0.0
    %682 = vmatpush.xpose.msra.mxu0 0.0
    %683 = vmatpush.xpose.msra.mxu0 %v666
    %684 = vmatmul.f32.gmra.mxu0 %v657
    %v685 = vpop.f32.mrf.mxu0
    %v686 = vadd.f32 0.0, %v685
    %687 = vmatmul.f32.gmra.mxu0 %v659
    %v688 = vpop.f32.mrf.mxu0
    %v689 = vadd.f32 0.0, %v688
    %690 = vmatmul.f32.gmra.mxu0 %v661
    %v691 = vpop.f32.mrf.mxu0
    %v692 = vadd.f32 0.0, %v691
    %693 = vmatmul.f32.gmra.mxu0 %v663
    %v694 = vpop.f32.mrf.mxu0
    %v695 = vadd.f32 0.0, %v694
    %696 = vdwg.mxu0
    %697 = vrot.lane.b32.xlu0 %v639, 16
    %v698 = vpop.permute.xlu0 %697
    %699 = vrot.lane.b32.xlu0 %v640, 16
    %v700 = vpop.permute.xlu0 %699
    %701 = vrot.lane.b32.xlu0 %v641, 16
    %v702 = vpop.permute.xlu0 %701
    %703 = vrot.lane.b32.xlu0 %v642, 16
    %v704 = vpop.permute.xlu0 %703
    %v705 = vsel %vm656, %v698, 0
    %v707 = vsel %vm656, %v700, 0
    %v709 = vsel %vm656, %v702, 0
    %v711 = vsel %vm656, %v704, 0
    %713 = vmatpush.xpose.msra.mxu0 0.0
    %714 = vmatpush.xpose.msra.mxu0 0.0
    %715 = vmatpush.xpose.msra.mxu0 0.0
    %716 = vmatpush.xpose.msra.mxu0 0.0
    %717 = vmatpush.xpose.msra.mxu0 0.0
    %718 = vmatpush.xpose.msra.mxu0 0.0
    %719 = vmatpush.xpose.msra.mxu0 0.0
    %720 = vmatpush.xpose.msra.mxu0 0.0
    %721 = vmatpush.xpose.msra.mxu0 0.0
    %722 = vmatpush.xpose.msra.mxu0 0.0
    %723 = vmatpush.xpose.msra.mxu0 0.0
    %724 = vmatpush.xpose.msra.mxu0 0.0
    %725 = vmatpush.xpose.msra.mxu0 %v711
    %726 = vmatpush.xpose.msra.mxu0 %v709
    %727 = vmatpush.xpose.msra.mxu0 %v707
    %728 = vmatpush.xpose.msra.mxu0 %v705
    %729 = vmatmul.f32.gmra.mxu0 %v666
    %v730 = vpop.f32.mrf.mxu0
    %v731 = vadd.f32 0.0, %v730
    %732 = vdwg.mxu0
    %v733 = vld [vmem:[%s8] sm:$0xff]
    %v734 = vld [vmem:[%s8 + $0x8] sm:$0xff]
    %v735 = vld [vmem:[%s8 + $0x10] sm:$0xff]
    %v736 = vld [vmem:[%s8 + $0x18] sm:$0xff]
    %v737 = vld [vmem:[%s8 + $0x20] sm:$0xff]
    %v738 = vld [vmem:[%s8 + $0x28] sm:$0xff]
    %v739 = vld [vmem:[%s8 + $0x30] sm:$0xff]
    %v740 = vld [vmem:[%s8 + $0x38] sm:$0xff]
    %v741 = vld [vmem:[%s8 + $0x40] sm:$0xff]
    %v742 = vld [vmem:[%s8 + $0x48] sm:$0xff]
    %v743 = vld [vmem:[%s8 + $0x50] sm:$0xff]
    %v744 = vld [vmem:[%s8 + $0x58] sm:$0xff]
    %v745 = vld [vmem:[%s8 + $0x60] sm:$0xff]
    %v746 = vld [vmem:[%s8 + $0x68] sm:$0xff]
    %v747 = vld [vmem:[%s8 + $0x70] sm:$0xff]
    %v748 = vld [vmem:[%s8 + $0x78] sm:$0xff]
    %v749 = vld [vmem:[%s8 + $0x80] sm:$0xff]
    %v750 = vld [vmem:[%s8 + $0x88] sm:$0xff]
    %v751 = vld [vmem:[%s8 + $0x90] sm:$0xff]
    %v752 = vld [vmem:[%s8 + $0x98] sm:$0xff]
    %v753 = vld [vmem:[%s8 + $0xa0] sm:$0xff]
    %v754 = vld [vmem:[%s8 + $0xa8] sm:$0xff]
    %v755 = vld [vmem:[%s8 + $0xb0] sm:$0xff]
    %v756 = vld [vmem:[%s8 + $0xb8] sm:$0xff]
    %v757 = vld [vmem:[%s8 + $0xc0] sm:$0xff]
    %v758 = vld [vmem:[%s8 + $0xc8] sm:$0xff]
    %v759 = vld [vmem:[%s8 + $0xd0] sm:$0xff]
    %v760 = vld [vmem:[%s8 + $0xd8] sm:$0xff]
    %v761 = vld [vmem:[%s8 + $0xe0] sm:$0xff]
    %v762 = vld [vmem:[%s8 + $0xe8] sm:$0xff]
    %v763 = vld [vmem:[%s8 + $0xf0] sm:$0xff]
    %v764 = vld [vmem:[%s8 + $0xf8] sm:$0xff]
    %765 = vmatpush.msra.mxu0 %v748
    %766 = vmatpush.msra.mxu0 %v747
    %767 = vmatpush.msra.mxu0 %v746
    %768 = vmatpush.msra.mxu0 %v745
    %769 = vmatpush.msra.mxu0 %v744
    %770 = vmatpush.msra.mxu0 %v743
    %771 = vmatpush.msra.mxu0 %v742
    %772 = vmatpush.msra.mxu0 %v741
    %773 = vmatpush.msra.mxu0 %v740
    %774 = vmatpush.msra.mxu0 %v739
    %775 = vmatpush.msra.mxu0 %v738
    %776 = vmatpush.msra.mxu0 %v737
    %777 = vmatpush.msra.mxu0 %v736
    %778 = vmatpush.msra.mxu0 %v735
    %779 = vmatpush.msra.mxu0 %v734
    %780 = vmatpush.msra.mxu0 %v733
    %781 = vmatmul.f32.gmra.mxu0 %v107
    %v782 = vpop.f32.mrf.mxu0
    %v783 = vadd.f32 0.0, %v782
    %784 = vmatmul.f32.gmra.mxu0 %v109
    %v785 = vpop.f32.mrf.mxu0
    %v786 = vadd.f32 0.0, %v785
    %787 = vmatmul.f32.gmra.mxu0 %v111
    %v788 = vpop.f32.mrf.mxu0
    %v789 = vadd.f32 0.0, %v788
    %790 = vmatmul.f32.gmra.mxu0 %v113
    %v791 = vpop.f32.mrf.mxu0
    %v792 = vadd.f32 0.0, %v791
    %793 = vdwg.mxu0
    %794 = vmatpush.msra.mxu0 %v764
    %795 = vmatpush.msra.mxu0 %v763
    %796 = vmatpush.msra.mxu0 %v762
    %797 = vmatpush.msra.mxu0 %v761
    %798 = vmatpush.msra.mxu0 %v760
    %799 = vmatpush.msra.mxu0 %v759
    %800 = vmatpush.msra.mxu0 %v758
    %801 = vmatpush.msra.mxu0 %v757
    %802 = vmatpush.msra.mxu0 %v756
    %803 = vmatpush.msra.mxu0 %v755
    %804 = vmatpush.msra.mxu0 %v754
    %805 = vmatpush.msra.mxu0 %v753
    %806 = vmatpush.msra.mxu0 %v752
    %807 = vmatpush.msra.mxu0 %v751
    %808 = vmatpush.msra.mxu0 %v750
    %809 = vmatpush.msra.mxu0 %v749
    %810 = vmatmul.f32.gmra.mxu0 %v108
    %v811 = vpop.f32.mrf.mxu0
    %v812 = vadd.f32 %v783, %v811
    %813 = vmatmul.f32.gmra.mxu0 %v110
    %v814 = vpop.f32.mrf.mxu0
    %v815 = vadd.f32 %v786, %v814
    %816 = vmatmul.f32.gmra.mxu0 %v112
    %v817 = vpop.f32.mrf.mxu0
    %v818 = vadd.f32 %v789, %v817
    %819 = vmatmul.f32.gmra.mxu0 %v114
    %v820 = vpop.f32.mrf.mxu0
    %v821 = vadd.f32 %v792, %v820
    %822 = vdwg.mxu0
    %824 = vset.pattern.permute.xlu0 0
    %825 = vperm.xlu0 %824, %v123
    %v826 = vpop.permute.xlu0 %825
    %829 = vset.pattern.permute.xlu0 0
    %830 = vperm.xlu0 %829, %v124
    %v831 = vpop.permute.xlu0 %830
    %834 = vset.pattern.permute.xlu0 0
    %835 = vperm.xlu0 %834, %v125
    %v836 = vpop.permute.xlu0 %835
    %839 = vset.pattern.permute.xlu0 0
    %840 = vperm.xlu0 %839, %v126
    %v841 = vpop.permute.xlu0 %840
    %v844 = vperm.slane %v127, 0
    %v846 = vmul.f32 %v826, %v844
    %v847 = vmul.f32 %v831, %v844
    %v848 = vmul.f32 %v836, %v844
    %v849 = vmul.f32 %v841, %v844
    %v850 = vld [vmem:[%s14] sm:$0xff]
    %v851 = vld [vmem:[%s14 + $0x8] sm:$0xff]
    %v852 = vld [vmem:[%s14 + $0x10] sm:$0xff]
    %v853 = vld [vmem:[%s14 + $0x18] sm:$0xff]
    %v854 = vmul.f32 %v846, %v850
    %v855 = vmul.f32 %v847, %v851
    %v856 = vmul.f32 %v848, %v852
    %v857 = vmul.f32 %v849, %v853
    %v858 = vsub.f32 %v854, 1.0
    %v859 = vsub.f32 %v855, 1.0
    %v860 = vsub.f32 %v856, 1.0
    %v861 = vsub.f32 %v857, 1.0
    %v862 = vmul.f32 %v858, 100000.0
    %v863 = vmul.f32 %v859, 100000.0
    %v864 = vmul.f32 %v860, 100000.0
    %v865 = vmul.f32 %v861, 100000.0
    %870 = vrot.lane.b32.xlu0 %v343, 96
    %v871 = vpop.permute.xlu0 %870
    %872 = vrot.lane.b32.xlu0 %v345, 96
    %v873 = vpop.permute.xlu0 %872
    %874 = vrot.lane.b32.xlu0 %v347, 96
    %v875 = vpop.permute.xlu0 %874
    %876 = vrot.lane.b32.xlu0 %v349, 96
    %v877 = vpop.permute.xlu0 %876
    %886 = vrot.lane.b32.xlu0 %v615, 32
    %v887 = vpop.permute.xlu0 %886
    %888 = vrot.lane.b32.xlu0 %v617, 32
    %v889 = vpop.permute.xlu0 %888
    %890 = vrot.lane.b32.xlu0 %v619, 32
    %v891 = vpop.permute.xlu0 %890
    %892 = vrot.lane.b32.xlu0 %v621, 32
    %v893 = vpop.permute.xlu0 %892
    %vm894 = vcmask 523264
    %v895 = vsel %vm894, %v167, %v871
    %v896 = vsel %vm894, %v170, %v873
    %v897 = vsel %vm894, %v173, %v875
    %v898 = vsel %vm894, %v176, %v877
    %vm899 = vcmask 785408
    %v900 = vsel %vm899, %v895, %v479
    %v901 = vsel %vm899, %v896, %v481
    %v902 = vsel %vm899, %v897, %v483
    %v903 = vsel %vm899, %v898, %v485
    %v904 = vld [vmem:[%s7] sm:$0xff]
    %v905 = vld [vmem:[%s7 + $0x8] sm:$0xff]
    %v906 = vld [vmem:[%s7 + $0x10] sm:$0xff]
    %v907 = vld [vmem:[%s7 + $0x18] sm:$0xff]
    %v908 = vld [vmem:[%s7 + $0x20] sm:$0xff]
    %v909 = vld [vmem:[%s7 + $0x28] sm:$0xff]
    %v910 = vld [vmem:[%s7 + $0x30] sm:$0xff]
    %v911 = vld [vmem:[%s7 + $0x38] sm:$0xff]
    %v912 = vld [vmem:[%s7 + $0x40] sm:$0xff]
    %v913 = vld [vmem:[%s7 + $0x48] sm:$0xff]
    %v914 = vld [vmem:[%s7 + $0x50] sm:$0xff]
    %v915 = vld [vmem:[%s7 + $0x58] sm:$0xff]
    %v916 = vld [vmem:[%s7 + $0x60] sm:$0xff]
    %v917 = vld [vmem:[%s7 + $0x68] sm:$0xff]
    %v918 = vld [vmem:[%s7 + $0x70] sm:$0xff]
    %v919 = vld [vmem:[%s7 + $0x78] sm:$0xff]
    %v920 = vld [vmem:[%s7 + $0x80] sm:$0xff]
    %v921 = vld [vmem:[%s7 + $0x88] sm:$0xff]
    %v922 = vld [vmem:[%s7 + $0x90] sm:$0xff]
    %v923 = vld [vmem:[%s7 + $0x98] sm:$0xff]
    %v924 = vld [vmem:[%s7 + $0xa0] sm:$0xff]
    %v925 = vld [vmem:[%s7 + $0xa8] sm:$0xff]
    %v926 = vld [vmem:[%s7 + $0xb0] sm:$0xff]
    %v927 = vld [vmem:[%s7 + $0xb8] sm:$0xff]
    %v928 = vld [vmem:[%s7 + $0xc0] sm:$0xff]
    %v929 = vld [vmem:[%s7 + $0xc8] sm:$0xff]
    %v930 = vld [vmem:[%s7 + $0xd0] sm:$0xff]
    %v931 = vld [vmem:[%s7 + $0xd8] sm:$0xff]
    %v932 = vld [vmem:[%s7 + $0xe0] sm:$0xff]
    %v933 = vld [vmem:[%s7 + $0xe8] sm:$0xff]
    %v934 = vld [vmem:[%s7 + $0xf0] sm:$0xff]
    %v935 = vld [vmem:[%s7 + $0xf8] sm:$0xff]
    %v936 = vld [vmem:[%s7 + $0x100] sm:$0xff]
    %v937 = vld [vmem:[%s7 + $0x108] sm:$0xff]
    %v938 = vld [vmem:[%s7 + $0x110] sm:$0xff]
    %v939 = vld [vmem:[%s7 + $0x118] sm:$0xff]
    %v940 = vld [vmem:[%s7 + $0x120] sm:$0xff]
    %v941 = vld [vmem:[%s7 + $0x128] sm:$0xff]
    %v942 = vld [vmem:[%s7 + $0x130] sm:$0xff]
    %v943 = vld [vmem:[%s7 + $0x138] sm:$0xff]
    %v944 = vsel %vm136, %v887, 0
    %v946 = vsel %vm136, %v889, 0
    %v948 = vsel %vm136, %v891, 0
    %v950 = vsel %vm136, %v893, 0
    %952 = vmatpush.msra.mxu0 %v934
    %953 = vmatpush.msra.mxu0 %v932
    %954 = vmatpush.msra.mxu0 %v930
    %955 = vmatpush.msra.mxu0 %v928
    %956 = vmatpush.msra.mxu0 %v926
    %957 = vmatpush.msra.mxu0 %v924
    %958 = vmatpush.msra.mxu0 %v922
    %959 = vmatpush.msra.mxu0 %v920
    %960 = vmatpush.msra.mxu0 %v918
    %961 = vmatpush.msra.mxu0 %v916
    %962 = vmatpush.msra.mxu0 %v914
    %963 = vmatpush.msra.mxu0 %v912
    %964 = vmatpush.msra.mxu0 %v910
    %965 = vmatpush.msra.mxu0 %v908
    %966 = vmatpush.msra.mxu0 %v906
    %967 = vmatpush.msra.mxu0 %v904
    %968 = vmatmul.f32.gmra.mxu0 %v900
    %v969 = vpop.f32.mrf.mxu0
    %v970 = vadd.f32 0.0, %v969
    %971 = vmatmul.f32.gmra.mxu0 %v901
    %v972 = vpop.f32.mrf.mxu0
    %v973 = vadd.f32 0.0, %v972
    %974 = vmatmul.f32.gmra.mxu0 %v902
    %v975 = vpop.f32.mrf.mxu0
    %v976 = vadd.f32 0.0, %v975
    %977 = vmatmul.f32.gmra.mxu0 %v903
    %v978 = vpop.f32.mrf.mxu0
    %v979 = vadd.f32 0.0, %v978
    %980 = vdwg.mxu0
    %981 = vmatpush.msra.mxu0 0.0
    %982 = vmatpush.msra.mxu0 0.0
    %983 = vmatpush.msra.mxu0 0.0
    %984 = vmatpush.msra.mxu0 0.0
    %985 = vmatpush.msra.mxu0 0.0
    %986 = vmatpush.msra.mxu0 0.0
    %987 = vmatpush.msra.mxu0 0.0
    %988 = vmatpush.msra.mxu0 0.0
    %989 = vmatpush.msra.mxu0 0.0
    %990 = vmatpush.msra.mxu0 0.0
    %991 = vmatpush.msra.mxu0 0.0
    %992 = vmatpush.msra.mxu0 0.0
    %993 = vmatpush.msra.mxu0 %v942
    %994 = vmatpush.msra.mxu0 %v940
    %995 = vmatpush.msra.mxu0 %v938
    %996 = vmatpush.msra.mxu0 %v936
    %997 = vmatmul.f32.gmra.mxu0 %v944
    %v998 = vpop.f32.mrf.mxu0
    %v999 = vadd.f32 %v970, %v998
    %1000 = vmatmul.f32.gmra.mxu0 %v946
    %v1001 = vpop.f32.mrf.mxu0
    %v1002 = vadd.f32 %v973, %v1001
    %1003 = vmatmul.f32.gmra.mxu0 %v948
    %v1004 = vpop.f32.mrf.mxu0
    %v1005 = vadd.f32 %v976, %v1004
    %1006 = vmatmul.f32.gmra.mxu0 %v950
    %v1007 = vpop.f32.mrf.mxu0
    %v1008 = vadd.f32 %v979, %v1007
    %1009 = vdwg.mxu0
    %1010 = vmatpush.msra.mxu0 %v935
    %1011 = vmatpush.msra.mxu0 %v933
    %1012 = vmatpush.msra.mxu0 %v931
    %1013 = vmatpush.msra.mxu0 %v929
    %1014 = vmatpush.msra.mxu0 %v927
    %1015 = vmatpush.msra.mxu0 %v925
    %1016 = vmatpush.msra.mxu0 %v923
    %1017 = vmatpush.msra.mxu0 %v921
    %1018 = vmatpush.msra.mxu0 %v919
    %1019 = vmatpush.msra.mxu0 %v917
    %1020 = vmatpush.msra.mxu0 %v915
    %1021 = vmatpush.msra.mxu0 %v913
    %1022 = vmatpush.msra.mxu0 %v911
    %1023 = vmatpush.msra.mxu0 %v909
    %1024 = vmatpush.msra.mxu0 %v907
    %1025 = vmatpush.msra.mxu0 %v905
    %1026 = vmatmul.f32.gmra.mxu0 %v900
    %v1027 = vpop.f32.mrf.mxu0
    %v1028 = vadd.f32 0.0, %v1027
    %1029 = vmatmul.f32.gmra.mxu0 %v901
    %v1030 = vpop.f32.mrf.mxu0
    %v1031 = vadd.f32 0.0, %v1030
    %1032 = vmatmul.f32.gmra.mxu0 %v902
    %v1033 = vpop.f32.mrf.mxu0
    %v1034 = vadd.f32 0.0, %v1033
    %1035 = vmatmul.f32.gmra.mxu0 %v903
    %v1036 = vpop.f32.mrf.mxu0
    %v1037 = vadd.f32 0.0, %v1036
    %1038 = vdwg.mxu0
    %1039 = vmatpush.msra.mxu0 0.0
    %1040 = vmatpush.msra.mxu0 0.0
    %1041 = vmatpush.msra.mxu0 0.0
    %1042 = vmatpush.msra.mxu0 0.0
    %1043 = vmatpush.msra.mxu0 0.0
    %1044 = vmatpush.msra.mxu0 0.0
    %1045 = vmatpush.msra.mxu0 0.0
    %1046 = vmatpush.msra.mxu0 0.0
    %1047 = vmatpush.msra.mxu0 0.0
    %1048 = vmatpush.msra.mxu0 0.0
    %1049 = vmatpush.msra.mxu0 0.0
    %1050 = vmatpush.msra.mxu0 0.0
    %1051 = vmatpush.msra.mxu0 %v943
    %1052 = vmatpush.msra.mxu0 %v941
    %1053 = vmatpush.msra.mxu0 %v939
    %1054 = vmatpush.msra.mxu0 %v937
    %1055 = vmatmul.f32.gmra.mxu0 %v944
    %v1056 = vpop.f32.mrf.mxu0
    %v1057 = vadd.f32 %v1028, %v1056
    %1058 = vmatmul.f32.gmra.mxu0 %v946
    %v1059 = vpop.f32.mrf.mxu0
    %v1060 = vadd.f32 %v1031, %v1059
    %1061 = vmatmul.f32.gmra.mxu0 %v948
    %v1062 = vpop.f32.mrf.mxu0
    %v1063 = vadd.f32 %v1034, %v1062
    %1064 = vmatmul.f32.gmra.mxu0 %v950
    %v1065 = vpop.f32.mrf.mxu0
    %v1066 = vadd.f32 %v1037, %v1065
    %1067 = vdwg.mxu0
    %s1068 = sld [smem:[#allocation2]]
    %v1069 = vstv %s1068
    %v1070 = vmul.f32 %v1069, %v686
    %v1071 = vmul.f32 %v1069, %v689
    %v1072 = vmul.f32 %v1069, %v692
    %v1073 = vmul.f32 %v1069, %v695
    %1075 = vset.pattern.permute.xlu0 0
    %1076 = vperm.xlu0 %1075, %v1070
    %v1077 = vpop.permute.xlu0 %1076
    %1080 = vset.pattern.permute.xlu0 0
    %1081 = vperm.xlu0 %1080, %v1071
    %v1082 = vpop.permute.xlu0 %1081
    %1085 = vset.pattern.permute.xlu0 0
    %1086 = vperm.xlu0 %1085, %v1072
    %v1087 = vpop.permute.xlu0 %1086
    %1090 = vset.pattern.permute.xlu0 0
    %1091 = vperm.xlu0 %1090, %v1073
    %v1092 = vpop.permute.xlu0 %1091
    %1098 = vrot.lane.b32.xlu0 %v999, 48
    %v1099 = vpop.permute.xlu0 %1098
    %1100 = vrot.lane.b32.xlu0 %v1002, 48
    %v1101 = vpop.permute.xlu0 %1100
    %1102 = vrot.lane.b32.xlu0 %v1005, 48
    %v1103 = vpop.permute.xlu0 %1102
    %1104 = vrot.lane.b32.xlu0 %v1008, 48
    %v1105 = vpop.permute.xlu0 %1104
    %vm1106 = vcmask 162816
    %v1107 = vsel %vm1106, %v999, 0
    %v1109 = vsel %vm1106, %v1002, 0
    %v1111 = vsel %vm1106, %v1005, 0
    %v1113 = vsel %vm1106, %v1008, 0
    %v1115 = vsel %vm1106, %v1099, 0
    %v1117 = vsel %vm1106, %v1101, 0
    %v1119 = vsel %vm1106, %v1103, 0
    %v1121 = vsel %vm1106, %v1105, 0
    %1123 = vmatpush.xpose.msra.mxu0 0.0
    %1124 = vmatpush.xpose.msra.mxu0 0.0
    %1125 = vmatpush.xpose.msra.mxu0 0.0
    %1126 = vmatpush.xpose.msra.mxu0 0.0
    %1127 = vmatpush.xpose.msra.mxu0 0.0
    %1128 = vmatpush.xpose.msra.mxu0 0.0
    %1129 = vmatpush.xpose.msra.mxu0 0.0
    %1130 = vmatpush.xpose.msra.mxu0 0.0
    %1131 = vmatpush.xpose.msra.mxu0 0.0
    %1132 = vmatpush.xpose.msra.mxu0 0.0
    %1133 = vmatpush.xpose.msra.mxu0 0.0
    %1134 = vmatpush.xpose.msra.mxu0 0.0
    %1135 = vmatpush.xpose.msra.mxu0 %v1121
    %1136 = vmatpush.xpose.msra.mxu0 %v1119
    %1137 = vmatpush.xpose.msra.mxu0 %v1117
    %1138 = vmatpush.xpose.msra.mxu0 %v1115
    %1139 = vmatmul.f32.gmra.mxu0 %v1107
    %v1140 = vpop.f32.mrf.mxu0
    %v1141 = vadd.f32 %v1077, %v1140
    %1142 = vmatmul.f32.gmra.mxu0 %v1109
    %v1143 = vpop.f32.mrf.mxu0
    %v1144 = vadd.f32 %v1082, %v1143
    %1145 = vmatmul.f32.gmra.mxu0 %v1111
    %v1146 = vpop.f32.mrf.mxu0
    %v1147 = vadd.f32 %v1087, %v1146
    %1148 = vmatmul.f32.gmra.mxu0 %v1113
    %v1149 = vpop.f32.mrf.mxu0
    %v1150 = vadd.f32 %v1092, %v1149
    %1151 = vdwg.mxu0
    %v1152 = vmul.f32 %v1069, %v731
    %v1153 = vperm.slane %v1152, 0
    %v1154 = vadd.f32 %v1141, %v1153
    %v1155 = vadd.f32 %v1144, %v1153
    %v1156 = vadd.f32 %v1147, %v1153
    %v1157 = vadd.f32 %v1150, %v1153
    %v1158 = vadd.f32 %v1154, %v862
    %v1159 = vadd.f32 %v1155, %v863
    %v1160 = vadd.f32 %v1156, %v864
    %v1161 = vadd.f32 %v1157, %v865
    %s1162 = sld [smem:[#allocation2 + $0x1]]
    %v1163 = vstv %s1162
    %v1164 = vmul.f32 %v1163, %v686
    %v1165 = vmul.f32 %v1163, %v689
    %v1166 = vmul.f32 %v1163, %v692
    %v1167 = vmul.f32 %v1163, %v695
    %1169 = vset.pattern.permute.xlu0 1
    %1170 = vperm.xlu0 %1169, %v1164
    %v1171 = vpop.permute.xlu0 %1170
    %1174 = vset.pattern.permute.xlu0 1
    %1175 = vperm.xlu0 %1174, %v1165
    %v1176 = vpop.permute.xlu0 %1175
    %1179 = vset.pattern.permute.xlu0 1
    %1180 = vperm.xlu0 %1179, %v1166
    %v1181 = vpop.permute.xlu0 %1180
    %1184 = vset.pattern.permute.xlu0 1
    %1185 = vperm.xlu0 %1184, %v1167
    %v1186 = vpop.permute.xlu0 %1185
    %1188 = vrot.lane.b32.xlu0 %v999, 108
    %v1189 = vpop.permute.xlu0 %1188
    %1190 = vrot.lane.b32.xlu0 %v1002, 108
    %v1191 = vpop.permute.xlu0 %1190
    %1192 = vrot.lane.b32.xlu0 %v1005, 108
    %v1193 = vpop.permute.xlu0 %1192
    %1194 = vrot.lane.b32.xlu0 %v1008, 108
    %v1195 = vpop.permute.xlu0 %1194
    %1196 = vrot.lane.b32.xlu0 %v999, 28
    %v1197 = vpop.permute.xlu0 %1196
    %1198 = vrot.lane.b32.xlu0 %v1002, 28
    %v1199 = vpop.permute.xlu0 %1198
    %1200 = vrot.lane.b32.xlu0 %v1005, 28
    %v1201 = vpop.permute.xlu0 %1200
    %1202 = vrot.lane.b32.xlu0 %v1008, 28
    %v1203 = vpop.permute.xlu0 %1202
    %v1204 = vsel %vm1106, %v1189, 0
    %v1206 = vsel %vm1106, %v1191, 0
    %v1208 = vsel %vm1106, %v1193, 0
    %v1210 = vsel %vm1106, %v1195, 0
    %v1212 = vsel %vm1106, %v1197, 0
    %v1214 = vsel %vm1106, %v1199, 0
    %v1216 = vsel %vm1106, %v1201, 0
    %v1218 = vsel %vm1106, %v1203, 0
    %1220 = vmatpush.xpose.msra.mxu0 0.0
    %1221 = vmatpush.xpose.msra.mxu0 0.0
    %1222 = vmatpush.xpose.msra.mxu0 0.0
    %1223 = vmatpush.xpose.msra.mxu0 0.0
    %1224 = vmatpush.xpose.msra.mxu0 0.0
    %1225 = vmatpush.xpose.msra.mxu0 0.0
    %1226 = vmatpush.xpose.msra.mxu0 0.0
    %1227 = vmatpush.xpose.msra.mxu0 0.0
    %1228 = vmatpush.xpose.msra.mxu0 0.0
    %1229 = vmatpush.xpose.msra.mxu0 0.0
    %1230 = vmatpush.xpose.msra.mxu0 0.0
    %1231 = vmatpush.xpose.msra.mxu0 0.0
    %1232 = vmatpush.xpose.msra.mxu0 %v1218
    %1233 = vmatpush.xpose.msra.mxu0 %v1216
    %1234 = vmatpush.xpose.msra.mxu0 %v1214
    %1235 = vmatpush.xpose.msra.mxu0 %v1212
    %1236 = vmatmul.f32.gmra.mxu0 %v1204
    %v1237 = vpop.f32.mrf.mxu0
    %v1238 = vadd.f32 %v1171, %v1237
    %1239 = vmatmul.f32.gmra.mxu0 %v1206
    %v1240 = vpop.f32.mrf.mxu0
    %v1241 = vadd.f32 %v1176, %v1240
    %1242 = vmatmul.f32.gmra.mxu0 %v1208
    %v1243 = vpop.f32.mrf.mxu0
    %v1244 = vadd.f32 %v1181, %v1243
    %1245 = vmatmul.f32.gmra.mxu0 %v1210
    %v1246 = vpop.f32.mrf.mxu0
    %v1247 = vadd.f32 %v1186, %v1246
    %1248 = vdwg.mxu0
    %v1249 = vmul.f32 %v1163, %v731
    %v1250 = vperm.slane %v1249, 1
    %v1251 = vadd.f32 %v1238, %v1250
    %v1252 = vadd.f32 %v1241, %v1250
    %v1253 = vadd.f32 %v1244, %v1250
    %v1254 = vadd.f32 %v1247, %v1250
    %v1255 = vadd.f32 %v1251, %v862
    %v1256 = vadd.f32 %v1252, %v863
    %v1257 = vadd.f32 %v1253, %v864
    %v1258 = vadd.f32 %v1254, %v865
    %s1259 = sld [smem:[#allocation2 + $0x2]]
    %v1260 = vstv %s1259
    %v1261 = vmul.f32 %v1260, %v686
    %v1262 = vmul.f32 %v1260, %v689
    %v1263 = vmul.f32 %v1260, %v692
    %v1264 = vmul.f32 %v1260, %v695
    %1266 = vset.pattern.permute.xlu0 2
    %1267 = vperm.xlu0 %1266, %v1261
    %v1268 = vpop.permute.xlu0 %1267
    %1271 = vset.pattern.permute.xlu0 2
    %1272 = vperm.xlu0 %1271, %v1262
    %v1273 = vpop.permute.xlu0 %1272
    %1276 = vset.pattern.permute.xlu0 2
    %1277 = vperm.xlu0 %1276, %v1263
    %v1278 = vpop.permute.xlu0 %1277
    %1281 = vset.pattern.permute.xlu0 2
    %1282 = vperm.xlu0 %1281, %v1264
    %v1283 = vpop.permute.xlu0 %1282
    %1285 = vrot.lane.b32.xlu0 %v999, 88
    %v1286 = vpop.permute.xlu0 %1285
    %1287 = vrot.lane.b32.xlu0 %v1002, 88
    %v1288 = vpop.permute.xlu0 %1287
    %1289 = vrot.lane.b32.xlu0 %v1005, 88
    %v1290 = vpop.permute.xlu0 %1289
    %1291 = vrot.lane.b32.xlu0 %v1008, 88
    %v1292 = vpop.permute.xlu0 %1291
    %1297 = vrot.lane.b32.xlu0 %v999, 8
    %v1298 = vpop.permute.xlu0 %1297
    %1299 = vrot.lane.b32.xlu0 %v1057, 8
    %v1300 = vpop.permute.xlu0 %1299
    %1301 = vrot.lane.b32.xlu0 %v1002, 8
    %v1302 = vpop.permute.xlu0 %1301
    %1303 = vrot.lane.b32.xlu0 %v1060, 8
    %v1304 = vpop.permute.xlu0 %1303
    %1305 = vrot.lane.b32.xlu0 %v1005, 8
    %v1306 = vpop.permute.xlu0 %1305
    %1307 = vrot.lane.b32.xlu0 %v1063, 8
    %v1308 = vpop.permute.xlu0 %1307
    %1309 = vrot.lane.b32.xlu0 %v1008, 8
    %v1310 = vpop.permute.xlu0 %1309
    %1311 = vrot.lane.b32.xlu0 %v1066, 8
    %v1312 = vpop.permute.xlu0 %1311
    %vm1313 = vcmask 64512
    %v1314 = vsel %vm1313, %v1298, %v1300
    %v1315 = vsel %vm1313, %v1302, %v1304
    %v1316 = vsel %vm1313, %v1306, %v1308
    %v1317 = vsel %vm1313, %v1310, %v1312
    %v1318 = vsel %vm1106, %v1286, 0
    %v1320 = vsel %vm1106, %v1288, 0
    %v1322 = vsel %vm1106, %v1290, 0
    %v1324 = vsel %vm1106, %v1292, 0
    %v1326 = vsel %vm1106, %v1314, 0
    %v1328 = vsel %vm1106, %v1315, 0
    %v1330 = vsel %vm1106, %v1316, 0
    %v1332 = vsel %vm1106, %v1317, 0
    %1334 = vmatpush.xpose.msra.mxu0 0.0
    %1335 = vmatpush.xpose.msra.mxu0 0.0
    %1336 = vmatpush.xpose.msra.mxu0 0.0
    %1337 = vmatpush.xpose.msra.mxu0 0.0
    %1338 = vmatpush.xpose.msra.mxu0 0.0
    %1339 = vmatpush.xpose.msra.mxu0 0.0
    %1340 = vmatpush.xpose.msra.mxu0 0.0
    %1341 = vmatpush.xpose.msra.mxu0 0.0
    %1342 = vmatpush.xpose.msra.mxu0 0.0
    %1343 = vmatpush.xpose.msra.mxu0 0.0
    %1344 = vmatpush.xpose.msra.mxu0 0.0
    %1345 = vmatpush.xpose.msra.mxu0 0.0
    %1346 = vmatpush.xpose.msra.mxu0 %v1332
    %1347 = vmatpush.xpose.msra.mxu0 %v1330
    %1348 = vmatpush.xpose.msra.mxu0 %v1328
    %1349 = vmatpush.xpose.msra.mxu0 %v1326
    %1350 = vmatmul.f32.gmra.mxu0 %v1318
    %v1351 = vpop.f32.mrf.mxu0
    %v1352 = vadd.f32 %v1268, %v1351
    %1353 = vmatmul.f32.gmra.mxu0 %v1320
    %v1354 = vpop.f32.mrf.mxu0
    %v1355 = vadd.f32 %v1273, %v1354
    %1356 = vmatmul.f32.gmra.mxu0 %v1322
    %v1357 = vpop.f32.mrf.mxu0
    %v1358 = vadd.f32 %v1278, %v1357
    %1359 = vmatmul.f32.gmra.mxu0 %v1324
    %v1360 = vpop.f32.mrf.mxu0
    %v1361 = vadd.f32 %v1283, %v1360
    %1362 = vdwg.mxu0
    %v1363 = vmul.f32 %v1260, %v731
    %v1364 = vperm.slane %v1363, 2
    %v1365 = vadd.f32 %v1352, %v1364
    %v1366 = vadd.f32 %v1355, %v1364
    %v1367 = vadd.f32 %v1358, %v1364
    %v1368 = vadd.f32 %v1361, %v1364
    %v1369 = vadd.f32 %v1365, %v862
    %v1370 = vadd.f32 %v1366, %v863
    %v1371 = vadd.f32 %v1367, %v864
    %v1372 = vadd.f32 %v1368, %v865
    %s1373 = sld [smem:[#allocation2 + $0x3]]
    %v1374 = vstv %s1373
    %v1375 = vmul.f32 %v1374, %v686
    %v1376 = vmul.f32 %v1374, %v689
    %v1377 = vmul.f32 %v1374, %v692
    %v1378 = vmul.f32 %v1374, %v695
    %1380 = vset.pattern.permute.xlu0 3
    %1381 = vperm.xlu0 %1380, %v1375
    %v1382 = vpop.permute.xlu0 %1381
    %1385 = vset.pattern.permute.xlu0 3
    %1386 = vperm.xlu0 %1385, %v1376
    %v1387 = vpop.permute.xlu0 %1386
    %1390 = vset.pattern.permute.xlu0 3
    %1391 = vperm.xlu0 %1390, %v1377
    %v1392 = vpop.permute.xlu0 %1391
    %1395 = vset.pattern.permute.xlu0 3
    %1396 = vperm.xlu0 %1395, %v1378
    %v1397 = vpop.permute.xlu0 %1396
    %1399 = vrot.lane.b32.xlu0 %v999, 68
    %v1400 = vpop.permute.xlu0 %1399
    %1401 = vrot.lane.b32.xlu0 %v1002, 68
    %v1402 = vpop.permute.xlu0 %1401
    %1403 = vrot.lane.b32.xlu0 %v1005, 68
    %v1404 = vpop.permute.xlu0 %1403
    %1405 = vrot.lane.b32.xlu0 %v1008, 68
    %v1406 = vpop.permute.xlu0 %1405
    %1407 = vrot.lane.b32.xlu0 %v1057, 116
    %v1408 = vpop.permute.xlu0 %1407
    %1409 = vrot.lane.b32.xlu0 %v1060, 116
    %v1410 = vpop.permute.xlu0 %1409
    %1411 = vrot.lane.b32.xlu0 %v1063, 116
    %v1412 = vpop.permute.xlu0 %1411
    %1413 = vrot.lane.b32.xlu0 %v1066, 116
    %v1414 = vpop.permute.xlu0 %1413
    %v1415 = vsel %vm1106, %v1400, 0
    %v1417 = vsel %vm1106, %v1402, 0
    %v1419 = vsel %vm1106, %v1404, 0
    %v1421 = vsel %vm1106, %v1406, 0
    %v1423 = vsel %vm1106, %v1408, 0
    %v1425 = vsel %vm1106, %v1410, 0
    %v1427 = vsel %vm1106, %v1412, 0
    %v1429 = vsel %vm1106, %v1414, 0
    %1431 = vmatpush.xpose.msra.mxu0 0.0
    %1432 = vmatpush.xpose.msra.mxu0 0.0
    %1433 = vmatpush.xpose.msra.mxu0 0.0
    %1434 = vmatpush.xpose.msra.mxu0 0.0
    %1435 = vmatpush.xpose.msra.mxu0 0.0
    %1436 = vmatpush.xpose.msra.mxu0 0.0
    %1437 = vmatpush.xpose.msra.mxu0 0.0
    %1438 = vmatpush.xpose.msra.mxu0 0.0
    %1439 = vmatpush.xpose.msra.mxu0 0.0
    %1440 = vmatpush.xpose.msra.mxu0 0.0
    %1441 = vmatpush.xpose.msra.mxu0 0.0
    %1442 = vmatpush.xpose.msra.mxu0 0.0
    %1443 = vmatpush.xpose.msra.mxu0 %v1429
    %1444 = vmatpush.xpose.msra.mxu0 %v1427
    %1445 = vmatpush.xpose.msra.mxu0 %v1425
    %1446 = vmatpush.xpose.msra.mxu0 %v1423
    %1447 = vmatmul.f32.gmra.mxu0 %v1415
    %v1448 = vpop.f32.mrf.mxu0
    %v1449 = vadd.f32 %v1382, %v1448
    %1450 = vmatmul.f32.gmra.mxu0 %v1417
    %v1451 = vpop.f32.mrf.mxu0
    %v1452 = vadd.f32 %v1387, %v1451
    %1453 = vmatmul.f32.gmra.mxu0 %v1419
    %v1454 = vpop.f32.mrf.mxu0
    %v1455 = vadd.f32 %v1392, %v1454
    %1456 = vmatmul.f32.gmra.mxu0 %v1421
    %v1457 = vpop.f32.mrf.mxu0
    %v1458 = vadd.f32 %v1397, %v1457
    %1459 = vdwg.mxu0
    %v1460 = vmul.f32 %v1374, %v731
    %v1461 = vperm.slane %v1460, 3
    %v1462 = vadd.f32 %v1449, %v1461
    %v1463 = vadd.f32 %v1452, %v1461
    %v1464 = vadd.f32 %v1455, %v1461
    %v1465 = vadd.f32 %v1458, %v1461
    %v1466 = vadd.f32 %v1462, %v862
    %v1467 = vadd.f32 %v1463, %v863
    %v1468 = vadd.f32 %v1464, %v864
    %v1469 = vadd.f32 %v1465, %v865
    %1474 = vrot.lane.b32.xlu0 %v1255, 32
    %v1475 = vpop.permute.xlu0 %1474
    %1476 = vrot.lane.b32.xlu0 %v1256, 32
    %v1477 = vpop.permute.xlu0 %1476
    %1478 = vrot.lane.b32.xlu0 %v1257, 32
    %v1479 = vpop.permute.xlu0 %1478
    %1480 = vrot.lane.b32.xlu0 %v1258, 32
    %v1481 = vpop.permute.xlu0 %1480
    %1490 = vrot.lane.b32.xlu0 %v1369, 64
    %v1491 = vpop.permute.xlu0 %1490
    %1492 = vrot.lane.b32.xlu0 %v1370, 64
    %v1493 = vpop.permute.xlu0 %1492
    %1494 = vrot.lane.b32.xlu0 %v1371, 64
    %v1495 = vpop.permute.xlu0 %1494
    %1496 = vrot.lane.b32.xlu0 %v1372, 64
    %v1497 = vpop.permute.xlu0 %1496
    %1506 = vrot.lane.b32.xlu0 %v1466, 96
    %v1507 = vpop.permute.xlu0 %1506
    %1508 = vrot.lane.b32.xlu0 %v1467, 96
    %v1509 = vpop.permute.xlu0 %1508
    %1510 = vrot.lane.b32.xlu0 %v1468, 96
    %v1511 = vpop.permute.xlu0 %1510
    %1512 = vrot.lane.b32.xlu0 %v1469, 96
    %v1513 = vpop.permute.xlu0 %1512
    %v1518 = vsel %vm136, %v1158, %v1475
    %v1519 = vsel %vm136, %v1159, %v1477
    %v1520 = vsel %vm136, %v1160, %v1479
    %v1521 = vsel %vm136, %v1161, %v1481
    %v1522 = vsel %vm894, %v1518, %v1491
    %v1523 = vsel %vm894, %v1519, %v1493
    %v1524 = vsel %vm894, %v1520, %v1495
    %v1525 = vsel %vm894, %v1521, %v1497
    %v1526 = vsel %vm899, %v1522, %v1507
    %v1527 = vsel %vm899, %v1523, %v1509
    %v1528 = vsel %vm899, %v1524, %v1511
    %v1529 = vsel %vm899, %v1525, %v1513
    %v1530 = vadd.f32 %v1526, %v812
    %v1531 = vadd.f32 %v1527, %v815
    %v1532 = vadd.f32 %v1528, %v818
    %v1533 = vadd.f32 %v1529, %v821
    %1534 = vmax.xlane.f32.xlu0 %v1530
    %v1535 = vpop.xlane.xlu0 %1534
    %1536 = vmax.xlane.f32.xlu0 %v1531
    %v1537 = vpop.xlane.xlu0 %1536
    %1538 = vmax.xlane.f32.xlu0 %v1532
    %v1539 = vpop.xlane.xlu0 %1538
    %1540 = vmax.xlane.f32.xlu0 %v1533
    %v1541 = vpop.xlane.xlu0 %1540
    %v1542 = vsub.f32 %v1530, %v1535
    %v1543 = vsub.f32 %v1531, %v1537
    %v1544 = vsub.f32 %v1532, %v1539
    %v1545 = vsub.f32 %v1533, %v1541
    %v1546 = vmul.f32 %v1542, 1.442695
    %v1547 = vpow.pop %v1546
    %v1548 = vmul.f32 %v1543, 1.442695
    %v1549 = vpow.pop %v1548
    %v1550 = vmul.f32 %v1544, 1.442695
    %v1551 = vpow.pop %v1550
    %v1552 = vmul.f32 %v1545, 1.442695
    %v1553 = vpow.pop %v1552
    %v1554 = vld [vmem:[%s12] sm:$0xff]
    %v1555 = vld [vmem:[%s12 + $0x8] sm:$0xff]
    %v1556 = vld [vmem:[%s12 + $0x10] sm:$0xff]
    %v1557 = vld [vmem:[%s12 + $0x18] sm:$0xff]
    %v1558 = vld [vmem:[%s12 + $0x20] sm:$0xff]
    %v1559 = vld [vmem:[%s12 + $0x28] sm:$0xff]
    %v1560 = vld [vmem:[%s12 + $0x30] sm:$0xff]
    %v1561 = vld [vmem:[%s12 + $0x38] sm:$0xff]
    %v1562 = vld [vmem:[%s12 + $0x40] sm:$0xff]
    %v1563 = vld [vmem:[%s12 + $0x48] sm:$0xff]
    %v1564 = vld [vmem:[%s12 + $0x50] sm:$0xff]
    %v1565 = vld [vmem:[%s12 + $0x58] sm:$0xff]
    %v1566 = vld [vmem:[%s12 + $0x60] sm:$0xff]
    %v1567 = vld [vmem:[%s12 + $0x68] sm:$0xff]
    %v1568 = vld [vmem:[%s12 + $0x70] sm:$0xff]
    %v1569 = vld [vmem:[%s12 + $0x78] sm:$0xff]
    %1570 = vmatpush.msra.mxu0 %v1569
    %1571 = vmatpush.msra.mxu0 %v1568
    %1572 = vmatpush.msra.mxu0 %v1567
    %1573 = vmatpush.msra.mxu0 %v1566
    %1574 = vmatpush.msra.mxu0 %v1565
    %1575 = vmatpush.msra.mxu0 %v1564
    %1576 = vmatpush.msra.mxu0 %v1563
    %1577 = vmatpush.msra.mxu0 %v1562
    %1578 = vmatpush.msra.mxu0 %v1561
    %1579 = vmatpush.msra.mxu0 %v1560
    %1580 = vmatpush.msra.mxu0 %v1559
    %1581 = vmatpush.msra.mxu0 %v1558
    %1582 = vmatpush.msra.mxu0 %v1557
    %1583 = vmatpush.msra.mxu0 %v1556
    %1584 = vmatpush.msra.mxu0 %v1555
    %1585 = vmatpush.msra.mxu0 %v1554
    %1586 = vmatmul.f32.gmra.mxu0 %v1547
    %v1587 = vpop.f32.mrf.mxu0
    %v1588 = vadd.f32 0.0, %v1587
    %1589 = vmatmul.f32.gmra.mxu0 %v1549
    %v1590 = vpop.f32.mrf.mxu0
    %v1591 = vadd.f32 0.0, %v1590
    %1592 = vmatmul.f32.gmra.mxu0 %v1551
    %v1593 = vpop.f32.mrf.mxu0
    %v1594 = vadd.f32 0.0, %v1593
    %1595 = vmatmul.f32.gmra.mxu0 %v1553
    %v1596 = vpop.f32.mrf.mxu0
    %v1597 = vadd.f32 0.0, %v1596
    %1598 = vdwg.mxu0
    %v1599 = vrcp.pop %v1588
    %v1600 = vmul.f32 %v1588, %v1599
    %v1601 = vsub.f32 1.0, %v1600
    %v1602 = vmul.f32 %v1599, %v1601
    %v1603 = vadd.f32 %v1599, %v1602
    %vm1604 = vweird.f32 %v1588
    %vm1605 = vweird.f32 %v1599
    %vm1606 = vmor %vm1604, %vm1605
    %v1607 = vsel %vm1606, %v1599, %v1603
    %v1608 = vand.u32 2147483647, %v1588
    %vm1609 = vcmp.eq.f32.partialorder %v1608, 8.507059e+37
    %v1610 = vand.u32 %v1588, 2147483648
    %v1611 = vor.u32 1.1754944e-38, %v1610
    %v1612 = vsel %vm1609, %v1611, %v1607
    %v1613 = vmul.f32 1.0, %v1612
    %v1614 = vrcp.pop %v1591
    %v1615 = vmul.f32 %v1591, %v1614
    %v1616 = vsub.f32 1.0, %v1615
    %v1617 = vmul.f32 %v1614, %v1616
    %v1618 = vadd.f32 %v1614, %v1617
    %vm1619 = vweird.f32 %v1591
    %vm1620 = vweird.f32 %v1614
    %vm1621 = vmor %vm1619, %vm1620
    %v1622 = vsel %vm1621, %v1614, %v1618
    %v1623 = vand.u32 2147483647, %v1591
    %vm1624 = vcmp.eq.f32.partialorder %v1623, 8.507059e+37
    %v1625 = vand.u32 %v1591, 2147483648
    %v1626 = vor.u32 1.1754944e-38, %v1625
    %v1627 = vsel %vm1624, %v1626, %v1622
    %v1628 = vmul.f32 1.0, %v1627
    %v1629 = vrcp.pop %v1594
    %v1630 = vmul.f32 %v1594, %v1629
    %v1631 = vsub.f32 1.0, %v1630
    %v1632 = vmul.f32 %v1629, %v1631
    %v1633 = vadd.f32 %v1629, %v1632
    %vm1634 = vweird.f32 %v1594
    %vm1635 = vweird.f32 %v1629
    %vm1636 = vmor %vm1634, %vm1635
    %v1637 = vsel %vm1636, %v1629, %v1633
    %v1638 = vand.u32 2147483647, %v1594
    %vm1639 = vcmp.eq.f32.partialorder %v1638, 8.507059e+37
    %v1640 = vand.u32 %v1594, 2147483648
    %v1641 = vor.u32 1.1754944e-38, %v1640
    %v1642 = vsel %vm1639, %v1641, %v1637
    %v1643 = vmul.f32 1.0, %v1642
    %v1644 = vrcp.pop %v1597
    %v1645 = vmul.f32 %v1597, %v1644
    %v1646 = vsub.f32 1.0, %v1645
    %v1647 = vmul.f32 %v1644, %v1646
    %v1648 = vadd.f32 %v1644, %v1647
    %vm1649 = vweird.f32 %v1597
    %vm1650 = vweird.f32 %v1644
    %vm1651 = vmor %vm1649, %vm1650
    %v1652 = vsel %vm1651, %v1644, %v1648
    %v1653 = vand.u32 2147483647, %v1597
    %vm1654 = vcmp.eq.f32.partialorder %v1653, 8.507059e+37
    %v1655 = vand.u32 %v1597, 2147483648
    %v1656 = vor.u32 1.1754944e-38, %v1655
    %v1657 = vsel %vm1654, %v1656, %v1652
    %v1658 = vmul.f32 1.0, %v1657
    %v1659 = vld [vmem:[%s13] sm:$0xf]
    %1664 = vrot.lane.b32.xlu0 %v167, 64
    %v1665 = vpop.permute.xlu0 %1664
    %1666 = vrot.lane.b32.xlu0 %v170, 64
    %v1667 = vpop.permute.xlu0 %1666
    %1668 = vrot.lane.b32.xlu0 %v173, 64
    %v1669 = vpop.permute.xlu0 %1668
    %1670 = vrot.lane.b32.xlu0 %v176, 64
    %v1671 = vpop.permute.xlu0 %1670
    %1680 = vrot.lane.b32.xlu0 %v344, 32
    %v1681 = vpop.permute.xlu0 %1680
    %1682 = vrot.lane.b32.xlu0 %v346, 32
    %v1683 = vpop.permute.xlu0 %1682
    %1684 = vrot.lane.b32.xlu0 %v348, 32
    %v1685 = vpop.permute.xlu0 %1684
    %1686 = vrot.lane.b32.xlu0 %v350, 32
    %v1687 = vpop.permute.xlu0 %1686
    %1696 = vrot.lane.b32.xlu0 %v480, 48
    %v1697 = vpop.permute.xlu0 %1696
    %1698 = vrot.lane.b32.xlu0 %v482, 48
    %v1699 = vpop.permute.xlu0 %1698
    %1700 = vrot.lane.b32.xlu0 %v484, 48
    %v1701 = vpop.permute.xlu0 %1700
    %1702 = vrot.lane.b32.xlu0 %v486, 48
    %v1703 = vpop.permute.xlu0 %1702
    %1712 = vrot.lane.b32.xlu0 %v616, 64
    %v1713 = vpop.permute.xlu0 %1712
    %1714 = vrot.lane.b32.xlu0 %v618, 64
    %v1715 = vpop.permute.xlu0 %1714
    %1716 = vrot.lane.b32.xlu0 %v620, 64
    %v1717 = vpop.permute.xlu0 %1716
    %1718 = vrot.lane.b32.xlu0 %v622, 64
    %v1719 = vpop.permute.xlu0 %1718
    %v1724 = vsel %vm136, %v1665, %v1681
    %v1725 = vsel %vm136, %v1667, %v1683
    %v1726 = vsel %vm136, %v1669, %v1685
    %v1727 = vsel %vm136, %v1671, %v1687
    %vm1728 = vcmask 392192
    %v1729 = vsel %vm1728, %v1724, %v1697
    %v1730 = vsel %vm1728, %v1725, %v1699
    %v1731 = vsel %vm1728, %v1726, %v1701
    %v1732 = vsel %vm1728, %v1727, %v1703
    %v1733 = vsel %vm894, %v1729, %v1713
    %v1734 = vsel %vm894, %v1730, %v1715
    %v1735 = vsel %vm894, %v1731, %v1717
    %v1736 = vsel %vm894, %v1732, %v1719
    %v1737 = vperm.slane %v1659, 0
    %v1738 = vmul.f32 %v1733, %v1737
    %v1739 = vmul.f32 %v1734, %v1737
    %v1740 = vmul.f32 %v1735, %v1737
    %v1741 = vmul.f32 %v1736, %v1737
    %v1742 = vperm.slane %v1659, 1
    %v1743 = vmul.f32 %v1733, %v1742
    %v1744 = vmul.f32 %v1734, %v1742
    %v1745 = vmul.f32 %v1735, %v1742
    %v1746 = vmul.f32 %v1736, %v1742
    %v1747 = vperm.slane %v1659, 2
    %v1748 = vmul.f32 %v1733, %v1747
    %v1749 = vmul.f32 %v1734, %v1747
    %v1750 = vmul.f32 %v1735, %v1747
    %v1751 = vmul.f32 %v1736, %v1747
    %v1752 = vperm.slane %v1659, 3
    %v1753 = vmul.f32 %v1733, %v1752
    %v1754 = vmul.f32 %v1734, %v1752
    %v1755 = vmul.f32 %v1735, %v1752
    %v1756 = vmul.f32 %v1736, %v1752
    %1757 = vmatpush.msra.mxu0 %v1756
    %1758 = vmatpush.msra.mxu0 %v1755
    %1759 = vmatpush.msra.mxu0 %v1754
    %1760 = vmatpush.msra.mxu0 %v1753
    %1761 = vmatpush.msra.mxu0 %v1751
    %1762 = vmatpush.msra.mxu0 %v1750
    %1763 = vmatpush.msra.mxu0 %v1749
    %1764 = vmatpush.msra.mxu0 %v1748
    %1765 = vmatpush.msra.mxu0 %v1746
    %1766 = vmatpush.msra.mxu0 %v1745
    %1767 = vmatpush.msra.mxu0 %v1744
    %1768 = vmatpush.msra.mxu0 %v1743
    %1769 = vmatpush.msra.mxu0 %v1741
    %1770 = vmatpush.msra.mxu0 %v1740
    %1771 = vmatpush.msra.mxu0 %v1739
    %1772 = vmatpush.msra.mxu0 %v1738
    %1773 = vmatmul.f32.gmra.mxu0 %v1547
    %v1774 = vpop.f32.mrf.mxu0
    %v1775 = vadd.f32 0.0, %v1774
    %1776 = vmatmul.f32.gmra.mxu0 %v1549
    %v1777 = vpop.f32.mrf.mxu0
    %v1778 = vadd.f32 0.0, %v1777
    %1779 = vmatmul.f32.gmra.mxu0 %v1551
    %v1780 = vpop.f32.mrf.mxu0
    %v1781 = vadd.f32 0.0, %v1780
    %1782 = vmatmul.f32.gmra.mxu0 %v1553
    %v1783 = vpop.f32.mrf.mxu0
    %v1784 = vadd.f32 0.0, %v1783
    %1785 = vdwg.mxu0
    %vm1786 = vcmask 31744
    %v1788 = vsel %vm1786, %v1613, 0
    %v1791 = vsel %vm1786, %v1628, 0
    %v1794 = vsel %vm1786, %v1643, 0
    %v1797 = vsel %vm1786, %v1658, 0
    %vm1799 = vcmask 1043456
    %v1801 = vsel %vm1799, %v1659, 0
    %1803 = vmatpush.msra.mxu0 0.0
    %1804 = vmatpush.msra.mxu0 0.0
    %1805 = vmatpush.msra.mxu0 0.0
    %1806 = vmatpush.msra.mxu0 0.0
    %1807 = vmatpush.msra.mxu0 0.0
    %1808 = vmatpush.msra.mxu0 0.0
    %1809 = vmatpush.msra.mxu0 0.0
    %1810 = vmatpush.msra.mxu0 0.0
    %1811 = vmatpush.msra.mxu0 0.0
    %1812 = vmatpush.msra.mxu0 0.0
    %1813 = vmatpush.msra.mxu0 0.0
    %1814 = vmatpush.msra.mxu0 0.0
    %1815 = vmatpush.msra.mxu0 0.0
    %1816 = vmatpush.msra.mxu0 0.0
    %1817 = vmatpush.msra.mxu0 0.0
    %1818 = vmatpush.msra.mxu0 %v1801
    %1819 = vmatmul.f32.gmra.mxu0 %v1788
    %v1820 = vpop.f32.mrf.mxu0
    %v1821 = vadd.f32 0.0, %v1820
    %1822 = vmatmul.f32.gmra.mxu0 %v1791
    %v1823 = vpop.f32.mrf.mxu0
    %v1824 = vadd.f32 0.0, %v1823
    %1825 = vmatmul.f32.gmra.mxu0 %v1794
    %v1826 = vpop.f32.mrf.mxu0
    %v1827 = vadd.f32 0.0, %v1826
    %1828 = vmatmul.f32.gmra.mxu0 %v1797
    %v1829 = vpop.f32.mrf.mxu0
    %v1830 = vadd.f32 0.0, %v1829
    %1831 = vdwg.mxu0
    %v1832 = vmul.f32 %v1775, %v1821
    %v1833 = vmul.f32 %v1778, %v1824
    %v1834 = vmul.f32 %v1781, %v1827
    %v1835 = vmul.f32 %v1784, %v1830
    %v1836 = vld [vmem:[%s9] sm:$0xff]
    %v1837 = vld [vmem:[%s9 + $0x8] sm:$0xff]
    %v1838 = vld [vmem:[%s9 + $0x10] sm:$0xff]
    %v1839 = vld [vmem:[%s9 + $0x18] sm:$0xff]
    %v1840 = vld [vmem:[%s9 + $0x20] sm:$0xff]
    %v1841 = vld [vmem:[%s9 + $0x28] sm:$0xff]
    %v1842 = vld [vmem:[%s9 + $0x30] sm:$0xff]
    %v1843 = vld [vmem:[%s9 + $0x38] sm:$0xff]
    %v1845 = vsel %vm136, %v1547, 0
    %v1848 = vsel %vm136, %v1549, 0
    %v1851 = vsel %vm136, %v1551, 0
    %v1854 = vsel %vm136, %v1553, 0
    %1856 = vmatpush.msra.mxu0 0.0
    %1857 = vmatpush.msra.mxu0 0.0
    %1858 = vmatpush.msra.mxu0 0.0
    %1859 = vmatpush.msra.mxu0 0.0
    %1860 = vmatpush.msra.mxu0 0.0
    %1861 = vmatpush.msra.mxu0 0.0
    %1862 = vmatpush.msra.mxu0 0.0
    %1863 = vmatpush.msra.mxu0 0.0
    %1864 = vmatpush.msra.mxu0 0.0
    %1865 = vmatpush.msra.mxu0 0.0
    %1866 = vmatpush.msra.mxu0 0.0
    %1867 = vmatpush.msra.mxu0 0.0
    %1868 = vmatpush.msra.mxu0 %v1842
    %1869 = vmatpush.msra.mxu0 %v1840
    %1870 = vmatpush.msra.mxu0 %v1838
    %1871 = vmatpush.msra.mxu0 %v1836
    %1872 = vmatmul.f32.gmra.mxu0 %v1845
    %v1873 = vpop.f32.mrf.mxu0
    %v1874 = vadd.f32 0.0, %v1873
    %1875 = vmatmul.f32.gmra.mxu0 %v1848
    %v1876 = vpop.f32.mrf.mxu0
    %v1877 = vadd.f32 0.0, %v1876
    %1878 = vmatmul.f32.gmra.mxu0 %v1851
    %v1879 = vpop.f32.mrf.mxu0
    %v1880 = vadd.f32 0.0, %v1879
    %1881 = vmatmul.f32.gmra.mxu0 %v1854
    %v1882 = vpop.f32.mrf.mxu0
    %v1883 = vadd.f32 0.0, %v1882
    %1884 = vdwg.mxu0
    %1885 = vmatpush.msra.mxu0 0.0
    %1886 = vmatpush.msra.mxu0 0.0
    %1887 = vmatpush.msra.mxu0 0.0
    %1888 = vmatpush.msra.mxu0 0.0
    %1889 = vmatpush.msra.mxu0 0.0
    %1890 = vmatpush.msra.mxu0 0.0
    %1891 = vmatpush.msra.mxu0 0.0
    %1892 = vmatpush.msra.mxu0 0.0
    %1893 = vmatpush.msra.mxu0 0.0
    %1894 = vmatpush.msra.mxu0 0.0
    %1895 = vmatpush.msra.mxu0 0.0
    %1896 = vmatpush.msra.mxu0 0.0
    %1897 = vmatpush.msra.mxu0 %v1843
    %1898 = vmatpush.msra.mxu0 %v1841
    %1899 = vmatpush.msra.mxu0 %v1839
    %1900 = vmatpush.msra.mxu0 %v1837
    %1901 = vmatmul.f32.gmra.mxu0 %v1845
    %v1902 = vpop.f32.mrf.mxu0
    %v1903 = vadd.f32 0.0, %v1902
    %1904 = vmatmul.f32.gmra.mxu0 %v1848
    %v1905 = vpop.f32.mrf.mxu0
    %v1906 = vadd.f32 0.0, %v1905
    %1907 = vmatmul.f32.gmra.mxu0 %v1851
    %v1908 = vpop.f32.mrf.mxu0
    %v1909 = vadd.f32 0.0, %v1908
    %1910 = vmatmul.f32.gmra.mxu0 %v1854
    %v1911 = vpop.f32.mrf.mxu0
    %v1912 = vadd.f32 0.0, %v1911
    %1913 = vdwg.mxu0
    %v1914 = vmul.f32 %v1874, %v107
    %v1915 = vmul.f32 %v1903, %v108
    %v1916 = vmul.f32 %v1877, %v109
    %v1917 = vmul.f32 %v1906, %v110
    %v1918 = vmul.f32 %v1880, %v111
    %v1919 = vmul.f32 %v1909, %v112
    %v1920 = vmul.f32 %v1883, %v113
    %v1921 = vmul.f32 %v1912, %v114
    %v1922 = vld [vmem:[%s10] sm:$0xff]
    %v1923 = vld [vmem:[%s10 + $0x8] sm:$0xff]
    %v1924 = vld [vmem:[%s10 + $0x10] sm:$0xff]
    %v1925 = vld [vmem:[%s10 + $0x18] sm:$0xff]
    %1926 = vmatpush.xpose.msra.mxu0 0.0
    %1927 = vmatpush.xpose.msra.mxu0 0.0
    %1928 = vmatpush.xpose.msra.mxu0 0.0
    %1929 = vmatpush.xpose.msra.mxu0 0.0
    %1930 = vmatpush.xpose.msra.mxu0 0.0
    %1931 = vmatpush.xpose.msra.mxu0 0.0
    %1932 = vmatpush.xpose.msra.mxu0 0.0
    %1933 = vmatpush.xpose.msra.mxu0 0.0
    %1934 = vmatpush.xpose.msra.mxu0 0.0
    %1935 = vmatpush.xpose.msra.mxu0 0.0
    %1936 = vmatpush.xpose.msra.mxu0 0.0
    %1937 = vmatpush.xpose.msra.mxu0 0.0
    %1938 = vmatpush.xpose.msra.mxu0 0.0
    %1939 = vmatpush.xpose.msra.mxu0 0.0
    %1940 = vmatpush.xpose.msra.mxu0 %v1924
    %1941 = vmatpush.xpose.msra.mxu0 %v1922
    %1942 = vmatmul.f32.gmra.mxu0 %v1914
    %v1943 = vpop.f32.mrf.mxu0
    %v1944 = vadd.f32 0.0, %v1943
    %1945 = vmatmul.f32.gmra.mxu0 %v1916
    %v1946 = vpop.f32.mrf.mxu0
    %v1947 = vadd.f32 0.0, %v1946
    %1948 = vmatmul.f32.gmra.mxu0 %v1918
    %v1949 = vpop.f32.mrf.mxu0
    %v1950 = vadd.f32 0.0, %v1949
    %1951 = vmatmul.f32.gmra.mxu0 %v1920
    %v1952 = vpop.f32.mrf.mxu0
    %v1953 = vadd.f32 0.0, %v1952
    %1954 = vdwg.mxu0
    %1955 = vmatpush.xpose.msra.mxu0 0.0
    %1956 = vmatpush.xpose.msra.mxu0 0.0
    %1957 = vmatpush.xpose.msra.mxu0 0.0
    %1958 = vmatpush.xpose.msra.mxu0 0.0
    %1959 = vmatpush.xpose.msra.mxu0 0.0
    %1960 = vmatpush.xpose.msra.mxu0 0.0
    %1961 = vmatpush.xpose.msra.mxu0 0.0
    %1962 = vmatpush.xpose.msra.mxu0 0.0
    %1963 = vmatpush.xpose.msra.mxu0 0.0
    %1964 = vmatpush.xpose.msra.mxu0 0.0
    %1965 = vmatpush.xpose.msra.mxu0 0.0
    %1966 = vmatpush.xpose.msra.mxu0 0.0
    %1967 = vmatpush.xpose.msra.mxu0 0.0
    %1968 = vmatpush.xpose.msra.mxu0 0.0
    %1969 = vmatpush.xpose.msra.mxu0 %v1925
    %1970 = vmatpush.xpose.msra.mxu0 %v1923
    %1971 = vmatmul.f32.gmra.mxu0 %v1915
    %v1972 = vpop.f32.mrf.mxu0
    %v1973 = vadd.f32 %v1944, %v1972
    %1974 = vmatmul.f32.gmra.mxu0 %v1917
    %v1975 = vpop.f32.mrf.mxu0
    %v1976 = vadd.f32 %v1947, %v1975
    %1977 = vmatmul.f32.gmra.mxu0 %v1919
    %v1978 = vpop.f32.mrf.mxu0
    %v1979 = vadd.f32 %v1950, %v1978
    %1980 = vmatmul.f32.gmra.mxu0 %v1921
    %v1981 = vpop.f32.mrf.mxu0
    %v1982 = vadd.f32 %v1953, %v1981
    %1983 = vdwg.mxu0
    %1984 = vset.pattern.permute.xlu0 0
    %1985 = vperm.xlu0 %1984, %v1613
    %v1986 = vpop.permute.xlu0 %1985
    %1988 = vset.pattern.permute.xlu0 0
    %1989 = vperm.xlu0 %1988, %v1628
    %v1990 = vpop.permute.xlu0 %1989
    %1992 = vset.pattern.permute.xlu0 0
    %1993 = vperm.xlu0 %1992, %v1643
    %v1994 = vpop.permute.xlu0 %1993
    %1996 = vset.pattern.permute.xlu0 0
    %1997 = vperm.xlu0 %1996, %v1658
    %v1998 = vpop.permute.xlu0 %1997
    %v2000 = vmul.f32 %v1973, %v1986
    %v2001 = vmul.f32 %v1976, %v1990
    %v2002 = vmul.f32 %v1979, %v1994
    %v2003 = vmul.f32 %v1982, %v1998
    %2004 = vrot.lane.b32.xlu0 %v1547, 96
    %v2005 = vpop.permute.xlu0 %2004
    %2006 = vrot.lane.b32.xlu0 %v1549, 96
    %v2007 = vpop.permute.xlu0 %2006
    %2008 = vrot.lane.b32.xlu0 %v1551, 96
    %v2009 = vpop.permute.xlu0 %2008
    %2010 = vrot.lane.b32.xlu0 %v1553, 96
    %v2011 = vpop.permute.xlu0 %2010
    %v2012 = vsel %vm136, %v2005, 0
    %v2014 = vsel %vm136, %v2007, 0
    %v2016 = vsel %vm136, %v2009, 0
    %v2018 = vsel %vm136, %v2011, 0
    %2020 = vmatpush.msra.mxu0 0.0
    %2021 = vmatpush.msra.mxu0 0.0
    %2022 = vmatpush.msra.mxu0 0.0
    %2023 = vmatpush.msra.mxu0 0.0
    %2024 = vmatpush.msra.mxu0 0.0
    %2025 = vmatpush.msra.mxu0 0.0
    %2026 = vmatpush.msra.mxu0 0.0
    %2027 = vmatpush.msra.mxu0 0.0
    %2028 = vmatpush.msra.mxu0 0.0
    %2029 = vmatpush.msra.mxu0 0.0
    %2030 = vmatpush.msra.mxu0 0.0
    %2031 = vmatpush.msra.mxu0 0.0
    %2032 = vmatpush.msra.mxu0 %v1842
    %2033 = vmatpush.msra.mxu0 %v1840
    %2034 = vmatpush.msra.mxu0 %v1838
    %2035 = vmatpush.msra.mxu0 %v1836
    %2036 = vmatmul.f32.gmra.mxu0 %v2012
    %v2037 = vpop.f32.mrf.mxu0
    %v2038 = vadd.f32 0.0, %v2037
    %2039 = vmatmul.f32.gmra.mxu0 %v2014
    %v2040 = vpop.f32.mrf.mxu0
    %v2041 = vadd.f32 0.0, %v2040
    %2042 = vmatmul.f32.gmra.mxu0 %v2016
    %v2043 = vpop.f32.mrf.mxu0
    %v2044 = vadd.f32 0.0, %v2043
    %2045 = vmatmul.f32.gmra.mxu0 %v2018
    %v2046 = vpop.f32.mrf.mxu0
    %v2047 = vadd.f32 0.0, %v2046
    %2048 = vdwg.mxu0
    %2049 = vmatpush.msra.mxu0 0.0
    %2050 = vmatpush.msra.mxu0 0.0
    %2051 = vmatpush.msra.mxu0 0.0
    %2052 = vmatpush.msra.mxu0 0.0
    %2053 = vmatpush.msra.mxu0 0.0
    %2054 = vmatpush.msra.mxu0 0.0
    %2055 = vmatpush.msra.mxu0 0.0
    %2056 = vmatpush.msra.mxu0 0.0
    %2057 = vmatpush.msra.mxu0 0.0
    %2058 = vmatpush.msra.mxu0 0.0
    %2059 = vmatpush.msra.mxu0 0.0
    %2060 = vmatpush.msra.mxu0 0.0
    %2061 = vmatpush.msra.mxu0 %v1843
    %2062 = vmatpush.msra.mxu0 %v1841
    %2063 = vmatpush.msra.mxu0 %v1839
    %2064 = vmatpush.msra.mxu0 %v1837
    %2065 = vmatmul.f32.gmra.mxu0 %v2012
    %v2066 = vpop.f32.mrf.mxu0
    %v2067 = vadd.f32 0.0, %v2066
    %2068 = vmatmul.f32.gmra.mxu0 %v2014
    %v2069 = vpop.f32.mrf.mxu0
    %v2070 = vadd.f32 0.0, %v2069
    %2071 = vmatmul.f32.gmra.mxu0 %v2016
    %v2072 = vpop.f32.mrf.mxu0
    %v2073 = vadd.f32 0.0, %v2072
    %2074 = vmatmul.f32.gmra.mxu0 %v2018
    %v2075 = vpop.f32.mrf.mxu0
    %v2076 = vadd.f32 0.0, %v2075
    %2077 = vdwg.mxu0
    %v2078 = vmul.f32 %v2038, %v107
    %v2079 = vmul.f32 %v2067, %v108
    %v2080 = vmul.f32 %v2041, %v109
    %v2081 = vmul.f32 %v2070, %v110
    %v2082 = vmul.f32 %v2044, %v111
    %v2083 = vmul.f32 %v2073, %v112
    %v2084 = vmul.f32 %v2047, %v113
    %v2085 = vmul.f32 %v2076, %v114
    %2086 = vmatpush.xpose.msra.mxu0 0.0
    %2087 = vmatpush.xpose.msra.mxu0 0.0
    %2088 = vmatpush.xpose.msra.mxu0 0.0
    %2089 = vmatpush.xpose.msra.mxu0 0.0
    %2090 = vmatpush.xpose.msra.mxu0 0.0
    %2091 = vmatpush.xpose.msra.mxu0 0.0
    %2092 = vmatpush.xpose.msra.mxu0 0.0
    %2093 = vmatpush.xpose.msra.mxu0 0.0
    %2094 = vmatpush.xpose.msra.mxu0 0.0
    %2095 = vmatpush.xpose.msra.mxu0 0.0
    %2096 = vmatpush.xpose.msra.mxu0 0.0
    %2097 = vmatpush.xpose.msra.mxu0 0.0
    %2098 = vmatpush.xpose.msra.mxu0 0.0
    %2099 = vmatpush.xpose.msra.mxu0 0.0
    %2100 = vmatpush.xpose.msra.mxu0 %v1924
    %2101 = vmatpush.xpose.msra.mxu0 %v1922
    %2102 = vmatmul.f32.gmra.mxu0 %v2078
    %v2103 = vpop.f32.mrf.mxu0
    %v2104 = vadd.f32 0.0, %v2103
    %2105 = vmatmul.f32.gmra.mxu0 %v2080
    %v2106 = vpop.f32.mrf.mxu0
    %v2107 = vadd.f32 0.0, %v2106
    %2108 = vmatmul.f32.gmra.mxu0 %v2082
    %v2109 = vpop.f32.mrf.mxu0
    %v2110 = vadd.f32 0.0, %v2109
    %2111 = vmatmul.f32.gmra.mxu0 %v2084
    %v2112 = vpop.f32.mrf.mxu0
    %v2113 = vadd.f32 0.0, %v2112
    %2114 = vdwg.mxu0
    %2115 = vmatpush.xpose.msra.mxu0 0.0
    %2116 = vmatpush.xpose.msra.mxu0 0.0
    %2117 = vmatpush.xpose.msra.mxu0 0.0
    %2118 = vmatpush.xpose.msra.mxu0 0.0
    %2119 = vmatpush.xpose.msra.mxu0 0.0
    %2120 = vmatpush.xpose.msra.mxu0 0.0
    %2121 = vmatpush.xpose.msra.mxu0 0.0
    %2122 = vmatpush.xpose.msra.mxu0 0.0
    %2123 = vmatpush.xpose.msra.mxu0 0.0
    %2124 = vmatpush.xpose.msra.mxu0 0.0
    %2125 = vmatpush.xpose.msra.mxu0 0.0
    %2126 = vmatpush.xpose.msra.mxu0 0.0
    %2127 = vmatpush.xpose.msra.mxu0 0.0
    %2128 = vmatpush.xpose.msra.mxu0 0.0
    %2129 = vmatpush.xpose.msra.mxu0 %v1925
    %2130 = vmatpush.xpose.msra.mxu0 %v1923
    %2131 = vmatmul.f32.gmra.mxu0 %v2079
    %v2132 = vpop.f32.mrf.mxu0
    %v2133 = vadd.f32 %v2104, %v2132
    %2134 = vmatmul.f32.gmra.mxu0 %v2081
    %v2135 = vpop.f32.mrf.mxu0
    %v2136 = vadd.f32 %v2107, %v2135
    %2137 = vmatmul.f32.gmra.mxu0 %v2083
    %v2138 = vpop.f32.mrf.mxu0
    %v2139 = vadd.f32 %v2110, %v2138
    %2140 = vmatmul.f32.gmra.mxu0 %v2085
    %v2141 = vpop.f32.mrf.mxu0
    %v2142 = vadd.f32 %v2113, %v2141
    %2143 = vdwg.mxu0
    %2144 = vset.pattern.permute.xlu0 1
    %2145 = vperm.xlu0 %2144, %v1613
    %v2146 = vpop.permute.xlu0 %2145
    %2148 = vset.pattern.permute.xlu0 1
    %2149 = vperm.xlu0 %2148, %v1628
    %v2150 = vpop.permute.xlu0 %2149
    %2152 = vset.pattern.permute.xlu0 1
    %2153 = vperm.xlu0 %2152, %v1643
    %v2154 = vpop.permute.xlu0 %2153
    %2156 = vset.pattern.permute.xlu0 1
    %2157 = vperm.xlu0 %2156, %v1658
    %v2158 = vpop.permute.xlu0 %2157
    %v2160 = vmul.f32 %v2133, %v2146
    %v2161 = vmul.f32 %v2136, %v2150
    %v2162 = vmul.f32 %v2139, %v2154
    %v2163 = vmul.f32 %v2142, %v2158
    %2164 = vrot.lane.b32.xlu0 %v1547, 64
    %v2165 = vpop.permute.xlu0 %2164
    %2166 = vrot.lane.b32.xlu0 %v1549, 64
    %v2167 = vpop.permute.xlu0 %2166
    %2168 = vrot.lane.b32.xlu0 %v1551, 64
    %v2169 = vpop.permute.xlu0 %2168
    %2170 = vrot.lane.b32.xlu0 %v1553, 64
    %v2171 = vpop.permute.xlu0 %2170
    %v2172 = vsel %vm136, %v2165, 0
    %v2174 = vsel %vm136, %v2167, 0
    %v2176 = vsel %vm136, %v2169, 0
    %v2178 = vsel %vm136, %v2171, 0
    %2180 = vmatpush.msra.mxu0 0.0
    %2181 = vmatpush.msra.mxu0 0.0
    %2182 = vmatpush.msra.mxu0 0.0
    %2183 = vmatpush.msra.mxu0 0.0
    %2184 = vmatpush.msra.mxu0 0.0
    %2185 = vmatpush.msra.mxu0 0.0
    %2186 = vmatpush.msra.mxu0 0.0
    %2187 = vmatpush.msra.mxu0 0.0
    %2188 = vmatpush.msra.mxu0 0.0
    %2189 = vmatpush.msra.mxu0 0.0
    %2190 = vmatpush.msra.mxu0 0.0
    %2191 = vmatpush.msra.mxu0 0.0
    %2192 = vmatpush.msra.mxu0 %v1842
    %2193 = vmatpush.msra.mxu0 %v1840
    %2194 = vmatpush.msra.mxu0 %v1838
    %2195 = vmatpush.msra.mxu0 %v1836
    %2196 = vmatmul.f32.gmra.mxu0 %v2172
    %v2197 = vpop.f32.mrf.mxu0
    %v2198 = vadd.f32 0.0, %v2197
    %2199 = vmatmul.f32.gmra.mxu0 %v2174
    %v2200 = vpop.f32.mrf.mxu0
    %v2201 = vadd.f32 0.0, %v2200
    %2202 = vmatmul.f32.gmra.mxu0 %v2176
    %v2203 = vpop.f32.mrf.mxu0
    %v2204 = vadd.f32 0.0, %v2203
    %2205 = vmatmul.f32.gmra.mxu0 %v2178
    %v2206 = vpop.f32.mrf.mxu0
    %v2207 = vadd.f32 0.0, %v2206
    %2208 = vdwg.mxu0
    %2209 = vmatpush.msra.mxu0 0.0
    %2210 = vmatpush.msra.mxu0 0.0
    %2211 = vmatpush.msra.mxu0 0.0
    %2212 = vmatpush.msra.mxu0 0.0
    %2213 = vmatpush.msra.mxu0 0.0
    %2214 = vmatpush.msra.mxu0 0.0
    %2215 = vmatpush.msra.mxu0 0.0
    %2216 = vmatpush.msra.mxu0 0.0
    %2217 = vmatpush.msra.mxu0 0.0
    %2218 = vmatpush.msra.mxu0 0.0
    %2219 = vmatpush.msra.mxu0 0.0
    %2220 = vmatpush.msra.mxu0 0.0
    %2221 = vmatpush.msra.mxu0 %v1843
    %2222 = vmatpush.msra.mxu0 %v1841
    %2223 = vmatpush.msra.mxu0 %v1839
    %2224 = vmatpush.msra.mxu0 %v1837
    %2225 = vmatmul.f32.gmra.mxu0 %v2172
    %v2226 = vpop.f32.mrf.mxu0
    %v2227 = vadd.f32 0.0, %v2226
    %2228 = vmatmul.f32.gmra.mxu0 %v2174
    %v2229 = vpop.f32.mrf.mxu0
    %v2230 = vadd.f32 0.0, %v2229
    %2231 = vmatmul.f32.gmra.mxu0 %v2176
    %v2232 = vpop.f32.mrf.mxu0
    %v2233 = vadd.f32 0.0, %v2232
    %2234 = vmatmul.f32.gmra.mxu0 %v2178
    %v2235 = vpop.f32.mrf.mxu0
    %v2236 = vadd.f32 0.0, %v2235
    %2237 = vdwg.mxu0
    %v2238 = vmul.f32 %v2198, %v107
    %v2239 = vmul.f32 %v2227, %v108
    %v2240 = vmul.f32 %v2201, %v109
    %v2241 = vmul.f32 %v2230, %v110
    %v2242 = vmul.f32 %v2204, %v111
    %v2243 = vmul.f32 %v2233, %v112
    %v2244 = vmul.f32 %v2207, %v113
    %v2245 = vmul.f32 %v2236, %v114
    %2246 = vmatpush.xpose.msra.mxu0 0.0
    %2247 = vmatpush.xpose.msra.mxu0 0.0
    %2248 = vmatpush.xpose.msra.mxu0 0.0
    %2249 = vmatpush.xpose.msra.mxu0 0.0
    %2250 = vmatpush.xpose.msra.mxu0 0.0
    %2251 = vmatpush.xpose.msra.mxu0 0.0
    %2252 = vmatpush.xpose.msra.mxu0 0.0
    %2253 = vmatpush.xpose.msra.mxu0 0.0
    %2254 = vmatpush.xpose.msra.mxu0 0.0
    %2255 = vmatpush.xpose.msra.mxu0 0.0
    %2256 = vmatpush.xpose.msra.mxu0 0.0
    %2257 = vmatpush.xpose.msra.mxu0 0.0
    %2258 = vmatpush.xpose.msra.mxu0 0.0
    %2259 = vmatpush.xpose.msra.mxu0 0.0
    %2260 = vmatpush.xpose.msra.mxu0 %v1924
    %2261 = vmatpush.xpose.msra.mxu0 %v1922
    %2262 = vmatmul.f32.gmra.mxu0 %v2238
    %v2263 = vpop.f32.mrf.mxu0
    %v2264 = vadd.f32 0.0, %v2263
    %2265 = vmatmul.f32.gmra.mxu0 %v2240
    %v2266 = vpop.f32.mrf.mxu0
    %v2267 = vadd.f32 0.0, %v2266
    %2268 = vmatmul.f32.gmra.mxu0 %v2242
    %v2269 = vpop.f32.mrf.mxu0
    %v2270 = vadd.f32 0.0, %v2269
    %2271 = vmatmul.f32.gmra.mxu0 %v2244
    %v2272 = vpop.f32.mrf.mxu0
    %v2273 = vadd.f32 0.0, %v2272
    %2274 = vdwg.mxu0
    %2275 = vmatpush.xpose.msra.mxu0 0.0
    %2276 = vmatpush.xpose.msra.mxu0 0.0
    %2277 = vmatpush.xpose.msra.mxu0 0.0
    %2278 = vmatpush.xpose.msra.mxu0 0.0
    %2279 = vmatpush.xpose.msra.mxu0 0.0
    %2280 = vmatpush.xpose.msra.mxu0 0.0
    %2281 = vmatpush.xpose.msra.mxu0 0.0
    %2282 = vmatpush.xpose.msra.mxu0 0.0
    %2283 = vmatpush.xpose.msra.mxu0 0.0
    %2284 = vmatpush.xpose.msra.mxu0 0.0
    %2285 = vmatpush.xpose.msra.mxu0 0.0
    %2286 = vmatpush.xpose.msra.mxu0 0.0
    %2287 = vmatpush.xpose.msra.mxu0 0.0
    %2288 = vmatpush.xpose.msra.mxu0 0.0
    %2289 = vmatpush.xpose.msra.mxu0 %v1925
    %2290 = vmatpush.xpose.msra.mxu0 %v1923
    %2291 = vmatmul.f32.gmra.mxu0 %v2239
    %v2292 = vpop.f32.mrf.mxu0
    %v2293 = vadd.f32 %v2264, %v2292
    %2294 = vmatmul.f32.gmra.mxu0 %v2241
    %v2295 = vpop.f32.mrf.mxu0
    %v2296 = vadd.f32 %v2267, %v2295
    %2297 = vmatmul.f32.gmra.mxu0 %v2243
    %v2298 = vpop.f32.mrf.mxu0
    %v2299 = vadd.f32 %v2270, %v2298
    %2300 = vmatmul.f32.gmra.mxu0 %v2245
    %v2301 = vpop.f32.mrf.mxu0
    %v2302 = vadd.f32 %v2273, %v2301
    %2303 = vdwg.mxu0
    %2304 = vset.pattern.permute.xlu0 2
    %2305 = vperm.xlu0 %2304, %v1613
    %v2306 = vpop.permute.xlu0 %2305
    %2308 = vset.pattern.permute.xlu0 2
    %2309 = vperm.xlu0 %2308, %v1628
    %v2310 = vpop.permute.xlu0 %2309
    %2312 = vset.pattern.permute.xlu0 2
    %2313 = vperm.xlu0 %2312, %v1643
    %v2314 = vpop.permute.xlu0 %2313
    %2316 = vset.pattern.permute.xlu0 2
    %2317 = vperm.xlu0 %2316, %v1658
    %v2318 = vpop.permute.xlu0 %2317
    %v2320 = vmul.f32 %v2293, %v2306
    %v2321 = vmul.f32 %v2296, %v2310
    %v2322 = vmul.f32 %v2299, %v2314
    %v2323 = vmul.f32 %v2302, %v2318
    %2324 = vrot.lane.b32.xlu0 %v1547, 32
    %v2325 = vpop.permute.xlu0 %2324
    %2326 = vrot.lane.b32.xlu0 %v1549, 32
    %v2327 = vpop.permute.xlu0 %2326
    %2328 = vrot.lane.b32.xlu0 %v1551, 32
    %v2329 = vpop.permute.xlu0 %2328
    %2330 = vrot.lane.b32.xlu0 %v1553, 32
    %v2331 = vpop.permute.xlu0 %2330
    %v2332 = vsel %vm136, %v2325, 0
    %v2334 = vsel %vm136, %v2327, 0
    %v2336 = vsel %vm136, %v2329, 0
    %v2338 = vsel %vm136, %v2331, 0
    %2340 = vmatpush.msra.mxu0 0.0
    %2341 = vmatpush.msra.mxu0 0.0
    %2342 = vmatpush.msra.mxu0 0.0
    %2343 = vmatpush.msra.mxu0 0.0
    %2344 = vmatpush.msra.mxu0 0.0
    %2345 = vmatpush.msra.mxu0 0.0
    %2346 = vmatpush.msra.mxu0 0.0
    %2347 = vmatpush.msra.mxu0 0.0
    %2348 = vmatpush.msra.mxu0 0.0
    %2349 = vmatpush.msra.mxu0 0.0
    %2350 = vmatpush.msra.mxu0 0.0
    %2351 = vmatpush.msra.mxu0 0.0
    %2352 = vmatpush.msra.mxu0 %v1842
    %2353 = vmatpush.msra.mxu0 %v1840
    %2354 = vmatpush.msra.mxu0 %v1838
    %2355 = vmatpush.msra.mxu0 %v1836
    %2356 = vmatmul.f32.gmra.mxu0 %v2332
    %v2357 = vpop.f32.mrf.mxu0
    %v2358 = vadd.f32 0.0, %v2357
    %2359 = vmatmul.f32.gmra.mxu0 %v2334
    %v2360 = vpop.f32.mrf.mxu0
    %v2361 = vadd.f32 0.0, %v2360
    %2362 = vmatmul.f32.gmra.mxu0 %v2336
    %v2363 = vpop.f32.mrf.mxu0
    %v2364 = vadd.f32 0.0, %v2363
    %2365 = vmatmul.f32.gmra.mxu0 %v2338
    %v2366 = vpop.f32.mrf.mxu0
    %v2367 = vadd.f32 0.0, %v2366
    %2368 = vdwg.mxu0
    %2369 = vmatpush.msra.mxu0 0.0
    %2370 = vmatpush.msra.mxu0 0.0
    %2371 = vmatpush.msra.mxu0 0.0
    %2372 = vmatpush.msra.mxu0 0.0
    %2373 = vmatpush.msra.mxu0 0.0
    %2374 = vmatpush.msra.mxu0 0.0
    %2375 = vmatpush.msra.mxu0 0.0
    %2376 = vmatpush.msra.mxu0 0.0
    %2377 = vmatpush.msra.mxu0 0.0
    %2378 = vmatpush.msra.mxu0 0.0
    %2379 = vmatpush.msra.mxu0 0.0
    %2380 = vmatpush.msra.mxu0 0.0
    %2381 = vmatpush.msra.mxu0 %v1843
    %2382 = vmatpush.msra.mxu0 %v1841
    %2383 = vmatpush.msra.mxu0 %v1839
    %2384 = vmatpush.msra.mxu0 %v1837
    %2385 = vmatmul.f32.gmra.mxu0 %v2332
    %v2386 = vpop.f32.mrf.mxu0
    %v2387 = vadd.f32 0.0, %v2386
    %2388 = vmatmul.f32.gmra.mxu0 %v2334
    %v2389 = vpop.f32.mrf.mxu0
    %v2390 = vadd.f32 0.0, %v2389
    %2391 = vmatmul.f32.gmra.mxu0 %v2336
    %v2392 = vpop.f32.mrf.mxu0
    %v2393 = vadd.f32 0.0, %v2392
    %2394 = vmatmul.f32.gmra.mxu0 %v2338
    %v2395 = vpop.f32.mrf.mxu0
    %v2396 = vadd.f32 0.0, %v2395
    %2397 = vdwg.mxu0
    %v2398 = vmul.f32 %v2358, %v107
    %v2399 = vmul.f32 %v2387, %v108
    %v2400 = vmul.f32 %v2361, %v109
    %v2401 = vmul.f32 %v2390, %v110
    %v2402 = vmul.f32 %v2364, %v111
    %v2403 = vmul.f32 %v2393, %v112
    %v2404 = vmul.f32 %v2367, %v113
    %v2405 = vmul.f32 %v2396, %v114
    %2406 = vmatpush.xpose.msra.mxu0 0.0
    %2407 = vmatpush.xpose.msra.mxu0 0.0
    %2408 = vmatpush.xpose.msra.mxu0 0.0
    %2409 = vmatpush.xpose.msra.mxu0 0.0
    %2410 = vmatpush.xpose.msra.mxu0 0.0
    %2411 = vmatpush.xpose.msra.mxu0 0.0
    %2412 = vmatpush.xpose.msra.mxu0 0.0
    %2413 = vmatpush.xpose.msra.mxu0 0.0
    %2414 = vmatpush.xpose.msra.mxu0 0.0
    %2415 = vmatpush.xpose.msra.mxu0 0.0
    %2416 = vmatpush.xpose.msra.mxu0 0.0
    %2417 = vmatpush.xpose.msra.mxu0 0.0
    %2418 = vmatpush.xpose.msra.mxu0 0.0
    %2419 = vmatpush.xpose.msra.mxu0 0.0
    %2420 = vmatpush.xpose.msra.mxu0 %v1924
    %2421 = vmatpush.xpose.msra.mxu0 %v1922
    %2422 = vmatmul.f32.gmra.mxu0 %v2398
    %v2423 = vpop.f32.mrf.mxu0
    %v2424 = vadd.f32 0.0, %v2423
    %2425 = vmatmul.f32.gmra.mxu0 %v2400
    %v2426 = vpop.f32.mrf.mxu0
    %v2427 = vadd.f32 0.0, %v2426
    %2428 = vmatmul.f32.gmra.mxu0 %v2402
    %v2429 = vpop.f32.mrf.mxu0
    %v2430 = vadd.f32 0.0, %v2429
    %2431 = vmatmul.f32.gmra.mxu0 %v2404
    %v2432 = vpop.f32.mrf.mxu0
    %v2433 = vadd.f32 0.0, %v2432
    %2434 = vdwg.mxu0
    %2435 = vmatpush.xpose.msra.mxu0 0.0
    %2436 = vmatpush.xpose.msra.mxu0 0.0
    %2437 = vmatpush.xpose.msra.mxu0 0.0
    %2438 = vmatpush.xpose.msra.mxu0 0.0
    %2439 = vmatpush.xpose.msra.mxu0 0.0
    %2440 = vmatpush.xpose.msra.mxu0 0.0
    %2441 = vmatpush.xpose.msra.mxu0 0.0
    %2442 = vmatpush.xpose.msra.mxu0 0.0
    %2443 = vmatpush.xpose.msra.mxu0 0.0
    %2444 = vmatpush.xpose.msra.mxu0 0.0
    %2445 = vmatpush.xpose.msra.mxu0 0.0
    %2446 = vmatpush.xpose.msra.mxu0 0.0
    %2447 = vmatpush.xpose.msra.mxu0 0.0
    %2448 = vmatpush.xpose.msra.mxu0 0.0
    %2449 = vmatpush.xpose.msra.mxu0 %v1925
    %2450 = vmatpush.xpose.msra.mxu0 %v1923
    %2451 = vmatmul.f32.gmra.mxu0 %v2399
    %v2452 = vpop.f32.mrf.mxu0
    %v2453 = vadd.f32 %v2424, %v2452
    %2454 = vmatmul.f32.gmra.mxu0 %v2401
    %v2455 = vpop.f32.mrf.mxu0
    %v2456 = vadd.f32 %v2427, %v2455
    %2457 = vmatmul.f32.gmra.mxu0 %v2403
    %v2458 = vpop.f32.mrf.mxu0
    %v2459 = vadd.f32 %v2430, %v2458
    %2460 = vmatmul.f32.gmra.mxu0 %v2405
    %v2461 = vpop.f32.mrf.mxu0
    %v2462 = vadd.f32 %v2433, %v2461
    %2463 = vdwg.mxu0
    %2464 = vset.pattern.permute.xlu0 3
    %2465 = vperm.xlu0 %2464, %v1613
    %v2466 = vpop.permute.xlu0 %2465
    %2468 = vset.pattern.permute.xlu0 3
    %2469 = vperm.xlu0 %2468, %v1628
    %v2470 = vpop.permute.xlu0 %2469
    %2472 = vset.pattern.permute.xlu0 3
    %2473 = vperm.xlu0 %2472, %v1643
    %v2474 = vpop.permute.xlu0 %2473
    %2476 = vset.pattern.permute.xlu0 3
    %2477 = vperm.xlu0 %2476, %v1658
    %v2478 = vpop.permute.xlu0 %2477
    %v2480 = vmul.f32 %v2453, %v2466
    %v2481 = vmul.f32 %v2456, %v2470
    %v2482 = vmul.f32 %v2459, %v2474
    %v2483 = vmul.f32 %v2462, %v2478
    %v2484 = vsub.f32 %v1832, %v326
    %v2485 = vsub.f32 %v1833, %v331
    %v2486 = vsub.f32 %v1834, %v336
    %v2487 = vsub.f32 %v1835, %v341
    %v2488 = vsub.f32 %v1832, %v465
    %v2489 = vsub.f32 %v1833, %v469
    %v2490 = vsub.f32 %v1834, %v473
    %v2491 = vsub.f32 %v1835, %v477
    %v2492 = vsub.f32 %v1832, %v601
    %v2493 = vsub.f32 %v1833, %v605
    %v2494 = vsub.f32 %v1834, %v609
    %v2495 = vsub.f32 %v1835, %v613
    %v2496 = vmul.f32 %v210, %v2484
    %v2497 = vmul.f32 %v215, %v2485
    %v2498 = vmul.f32 %v220, %v2486
    %v2499 = vmul.f32 %v225, %v2487
    %v2500 = vmul.f32 %v353, %v2488
    %v2501 = vmul.f32 %v357, %v2489
    %v2502 = vmul.f32 %v361, %v2490
    %v2503 = vmul.f32 %v365, %v2491
    %2508 = vrot.lane.b32.xlu0 %v2500, 112
    %v2509 = vpop.permute.xlu0 %2508
    %2510 = vrot.lane.b32.xlu0 %v2501, 112
    %v2511 = vpop.permute.xlu0 %2510
    %2512 = vrot.lane.b32.xlu0 %v2502, 112
    %v2513 = vpop.permute.xlu0 %2512
    %2514 = vrot.lane.b32.xlu0 %v2503, 112
    %v2515 = vpop.permute.xlu0 %2514
    %v2520 = vadd.f32 %v2496, %v2509
    %v2521 = vadd.f32 %v2497, %v2511
    %v2522 = vadd.f32 %v2498, %v2513
    %v2523 = vadd.f32 %v2499, %v2515
    %v2524 = vmul.f32 %v489, %v2492
    %v2525 = vmul.f32 %v493, %v2493
    %v2526 = vmul.f32 %v497, %v2494
    %v2527 = vmul.f32 %v501, %v2495
    %2532 = vrot.lane.b32.xlu0 %v2524, 96
    %v2533 = vpop.permute.xlu0 %2532
    %2534 = vrot.lane.b32.xlu0 %v2525, 96
    %v2535 = vpop.permute.xlu0 %2534
    %2536 = vrot.lane.b32.xlu0 %v2526, 96
    %v2537 = vpop.permute.xlu0 %2536
    %2538 = vrot.lane.b32.xlu0 %v2527, 96
    %v2539 = vpop.permute.xlu0 %2538
    %v2544 = vadd.f32 %v2520, %v2533
    %v2545 = vadd.f32 %v2521, %v2535
    %v2546 = vadd.f32 %v2522, %v2537
    %v2547 = vadd.f32 %v2523, %v2539
    %v2548 = vmul.f32 %v237, %v2484
    %v2549 = vmul.f32 %v241, %v2485
    %v2550 = vmul.f32 %v245, %v2486
    %v2551 = vmul.f32 %v249, %v2487
    %v2552 = vmul.f32 %v377, %v2488
    %v2553 = vmul.f32 %v381, %v2489
    %v2554 = vmul.f32 %v385, %v2490
    %v2555 = vmul.f32 %v389, %v2491
    %2560 = vrot.lane.b32.xlu0 %v2552, 112
    %v2561 = vpop.permute.xlu0 %2560
    %2562 = vrot.lane.b32.xlu0 %v2553, 112
    %v2563 = vpop.permute.xlu0 %2562
    %2564 = vrot.lane.b32.xlu0 %v2554, 112
    %v2565 = vpop.permute.xlu0 %2564
    %2566 = vrot.lane.b32.xlu0 %v2555, 112
    %v2567 = vpop.permute.xlu0 %2566
    %v2572 = vadd.f32 %v2548, %v2561
    %v2573 = vadd.f32 %v2549, %v2563
    %v2574 = vadd.f32 %v2550, %v2565
    %v2575 = vadd.f32 %v2551, %v2567
    %v2576 = vmul.f32 %v513, %v2492
    %v2577 = vmul.f32 %v517, %v2493
    %v2578 = vmul.f32 %v521, %v2494
    %v2579 = vmul.f32 %v525, %v2495
    %2584 = vrot.lane.b32.xlu0 %v2576, 96
    %v2585 = vpop.permute.xlu0 %2584
    %2586 = vrot.lane.b32.xlu0 %v2577, 96
    %v2587 = vpop.permute.xlu0 %2586
    %2588 = vrot.lane.b32.xlu0 %v2578, 96
    %v2589 = vpop.permute.xlu0 %2588
    %2590 = vrot.lane.b32.xlu0 %v2579, 96
    %v2591 = vpop.permute.xlu0 %2590
    %v2596 = vadd.f32 %v2572, %v2585
    %v2597 = vadd.f32 %v2573, %v2587
    %v2598 = vadd.f32 %v2574, %v2589
    %v2599 = vadd.f32 %v2575, %v2591
    %v2600 = vmul.f32 %v281, %v2484
    %v2601 = vmul.f32 %v285, %v2485
    %v2602 = vmul.f32 %v289, %v2486
    %v2603 = vmul.f32 %v293, %v2487
    %v2604 = vmul.f32 %v421, %v2488
    %v2605 = vmul.f32 %v425, %v2489
    %v2606 = vmul.f32 %v429, %v2490
    %v2607 = vmul.f32 %v433, %v2491
    %2612 = vrot.lane.b32.xlu0 %v2604, 112
    %v2613 = vpop.permute.xlu0 %2612
    %2614 = vrot.lane.b32.xlu0 %v2605, 112
    %v2615 = vpop.permute.xlu0 %2614
    %2616 = vrot.lane.b32.xlu0 %v2606, 112
    %v2617 = vpop.permute.xlu0 %2616
    %2618 = vrot.lane.b32.xlu0 %v2607, 112
    %v2619 = vpop.permute.xlu0 %2618
    %v2624 = vadd.f32 %v2600, %v2613
    %v2625 = vadd.f32 %v2601, %v2615
    %v2626 = vadd.f32 %v2602, %v2617
    %v2627 = vadd.f32 %v2603, %v2619
    %v2628 = vmul.f32 %v557, %v2492
    %v2629 = vmul.f32 %v561, %v2493
    %v2630 = vmul.f32 %v565, %v2494
    %v2631 = vmul.f32 %v569, %v2495
    %2636 = vrot.lane.b32.xlu0 %v2628, 96
    %v2637 = vpop.permute.xlu0 %2636
    %2638 = vrot.lane.b32.xlu0 %v2629, 96
    %v2639 = vpop.permute.xlu0 %2638
    %2640 = vrot.lane.b32.xlu0 %v2630, 96
    %v2641 = vpop.permute.xlu0 %2640
    %2642 = vrot.lane.b32.xlu0 %v2631, 96
    %v2643 = vpop.permute.xlu0 %2642
    %v2648 = vadd.f32 %v2624, %v2637
    %v2649 = vadd.f32 %v2625, %v2639
    %v2650 = vadd.f32 %v2626, %v2641
    %v2651 = vadd.f32 %v2627, %v2643
    %v2652 = vmul.f32 %v2544, %v2544
    %v2653 = vmul.f32 %v2545, %v2545
    %v2654 = vmul.f32 %v2546, %v2546
    %v2655 = vmul.f32 %v2547, %v2547
    %v2656 = vmul.f32 %v2596, %v2596
    %v2657 = vmul.f32 %v2597, %v2597
    %v2658 = vmul.f32 %v2598, %v2598
    %v2659 = vmul.f32 %v2599, %v2599
    %v2660 = vadd.f32 %v2652, %v2656
    %v2661 = vadd.f32 %v2653, %v2657
    %v2662 = vadd.f32 %v2654, %v2658
    %v2663 = vadd.f32 %v2655, %v2659
    %v2664 = vmul.f32 %v2648, %v2648
    %v2665 = vmul.f32 %v2649, %v2649
    %v2666 = vmul.f32 %v2650, %v2650
    %v2667 = vmul.f32 %v2651, %v2651
    %v2668 = vadd.f32 %v2660, %v2664
    %v2669 = vadd.f32 %v2661, %v2665
    %v2670 = vadd.f32 %v2662, %v2666
    %v2671 = vadd.f32 %v2663, %v2667
    %v2672 = vrsqrt.pop %v2668
    %v2673 = vmul.f32 %v2672, %v2668
    %v2674 = vmul.f32 %v2673, %v2672
    %v2675 = vmul.f32 0.5, %v2674
    %v2676 = vsub.f32 1.5, %v2675
    %v2677 = vmul.f32 %v2672, %v2676
    %v2678 = vmul.f32 %v2668, %v2677
    %vm2679 = vcmp.eq.f32.partialorder %v2668, inf
    %v2680 = vsel %vm2679, %v2668, %v2678
    %vm2681 = vcmp.eq.f32.partialorder %v2668, 0.0
    %v2682 = vand.u32 %v2668, 2147483648
    %v2683 = vsel %vm2681, %v2682, %v2680
    %v2684 = vrsqrt.pop %v2669
    %v2685 = vmul.f32 %v2684, %v2669
    %v2686 = vmul.f32 %v2685, %v2684
    %v2687 = vmul.f32 0.5, %v2686
    %v2688 = vsub.f32 1.5, %v2687
    %v2689 = vmul.f32 %v2684, %v2688
    %v2690 = vmul.f32 %v2669, %v2689
    %vm2691 = vcmp.eq.f32.partialorder %v2669, inf
    %v2692 = vsel %vm2691, %v2669, %v2690
    %vm2693 = vcmp.eq.f32.partialorder %v2669, 0.0
    %v2694 = vand.u32 %v2669, 2147483648
    %v2695 = vsel %vm2693, %v2694, %v2692
    %v2696 = vrsqrt.pop %v2670
    %v2697 = vmul.f32 %v2696, %v2670
    %v2698 = vmul.f32 %v2697, %v2696
    %v2699 = vmul.f32 0.5, %v2698
    %v2700 = vsub.f32 1.5, %v2699
    %v2701 = vmul.f32 %v2696, %v2700
    %v2702 = vmul.f32 %v2670, %v2701
    %vm2703 = vcmp.eq.f32.partialorder %v2670, inf
    %v2704 = vsel %vm2703, %v2670, %v2702
    %vm2705 = vcmp.eq.f32.partialorder %v2670, 0.0
    %v2706 = vand.u32 %v2670, 2147483648
    %v2707 = vsel %vm2705, %v2706, %v2704
    %v2708 = vrsqrt.pop %v2671
    %v2709 = vmul.f32 %v2708, %v2671
    %v2710 = vmul.f32 %v2709, %v2708
    %v2711 = vmul.f32 0.5, %v2710
    %v2712 = vsub.f32 1.5, %v2711
    %v2713 = vmul.f32 %v2708, %v2712
    %v2714 = vmul.f32 %v2671, %v2713
    %vm2715 = vcmp.eq.f32.partialorder %v2671, inf
    %v2716 = vsel %vm2715, %v2671, %v2714
    %vm2717 = vcmp.eq.f32.partialorder %v2671, 0.0
    %v2718 = vand.u32 %v2671, 2147483648
    %v2719 = vsel %vm2717, %v2718, %v2716
    %v2720 = vadd.f32 %v2683, 0.0001
    %v2721 = vadd.f32 %v2695, 0.0001
    %v2722 = vadd.f32 %v2707, 0.0001
    %v2723 = vadd.f32 %v2719, 0.0001
    %v2724 = vrcp.pop %v2720
    %v2725 = vmul.f32 %v2720, %v2724
    %v2726 = vsub.f32 1.0, %v2725
    %v2727 = vmul.f32 %v2724, %v2726
    %v2728 = vadd.f32 %v2724, %v2727
    %vm2729 = vweird.f32 %v2720
    %vm2730 = vweird.f32 %v2724
    %vm2731 = vmor %vm2729, %vm2730
    %v2732 = vsel %vm2731, %v2724, %v2728
    %v2733 = vand.u32 2147483647, %v2720
    %vm2734 = vcmp.eq.f32.partialorder %v2733, 8.507059e+37
    %v2735 = vand.u32 %v2720, 2147483648
    %v2736 = vor.u32 1.1754944e-38, %v2735
    %v2737 = vsel %vm2734, %v2736, %v2732
    %v2738 = vmul.f32 1.0, %v2737
    %v2739 = vrcp.pop %v2721
    %v2740 = vmul.f32 %v2721, %v2739
    %v2741 = vsub.f32 1.0, %v2740
    %v2742 = vmul.f32 %v2739, %v2741
    %v2743 = vadd.f32 %v2739, %v2742
    %vm2744 = vweird.f32 %v2721
    %vm2745 = vweird.f32 %v2739
    %vm2746 = vmor %vm2744, %vm2745
    %v2747 = vsel %vm2746, %v2739, %v2743
    %v2748 = vand.u32 2147483647, %v2721
    %vm2749 = vcmp.eq.f32.partialorder %v2748, 8.507059e+37
    %v2750 = vand.u32 %v2721, 2147483648
    %v2751 = vor.u32 1.1754944e-38, %v2750
    %v2752 = vsel %vm2749, %v2751, %v2747
    %v2753 = vmul.f32 1.0, %v2752
    %v2754 = vrcp.pop %v2722
    %v2755 = vmul.f32 %v2722, %v2754
    %v2756 = vsub.f32 1.0, %v2755
    %v2757 = vmul.f32 %v2754, %v2756
    %v2758 = vadd.f32 %v2754, %v2757
    %vm2759 = vweird.f32 %v2722
    %vm2760 = vweird.f32 %v2754
    %vm2761 = vmor %vm2759, %vm2760
    %v2762 = vsel %vm2761, %v2754, %v2758
    %v2763 = vand.u32 2147483647, %v2722
    %vm2764 = vcmp.eq.f32.partialorder %v2763, 8.507059e+37
    %v2765 = vand.u32 %v2722, 2147483648
    %v2766 = vor.u32 1.1754944e-38, %v2765
    %v2767 = vsel %vm2764, %v2766, %v2762
    %v2768 = vmul.f32 1.0, %v2767
    %v2769 = vrcp.pop %v2723
    %v2770 = vmul.f32 %v2723, %v2769
    %v2771 = vsub.f32 1.0, %v2770
    %v2772 = vmul.f32 %v2769, %v2771
    %v2773 = vadd.f32 %v2769, %v2772
    %vm2774 = vweird.f32 %v2723
    %vm2775 = vweird.f32 %v2769
    %vm2776 = vmor %vm2774, %vm2775
    %v2777 = vsel %vm2776, %v2769, %v2773
    %v2778 = vand.u32 2147483647, %v2723
    %vm2779 = vcmp.eq.f32.partialorder %v2778, 8.507059e+37
    %v2780 = vand.u32 %v2723, 2147483648
    %v2781 = vor.u32 1.1754944e-38, %v2780
    %v2782 = vsel %vm2779, %v2781, %v2777
    %v2783 = vmul.f32 1.0, %v2782
    %v2784 = vmul.f32 %v2544, %v2738
    %v2785 = vmul.f32 %v2545, %v2753
    %v2786 = vmul.f32 %v2546, %v2768
    %v2787 = vmul.f32 %v2547, %v2783
    %v2788 = vmul.f32 %v2596, %v2738
    %v2789 = vmul.f32 %v2597, %v2753
    %v2790 = vmul.f32 %v2598, %v2768
    %v2791 = vmul.f32 %v2599, %v2783
    %v2792 = vmul.f32 %v2648, %v2738
    %v2793 = vmul.f32 %v2649, %v2753
    %v2794 = vmul.f32 %v2650, %v2768
    %v2795 = vmul.f32 %v2651, %v2783
    %2800 = vrot.lane.b32.xlu0 %v2160, 16
    %v2801 = vpop.permute.xlu0 %2800
    %2802 = vrot.lane.b32.xlu0 %v2161, 16
    %v2803 = vpop.permute.xlu0 %2802
    %2804 = vrot.lane.b32.xlu0 %v2162, 16
    %v2805 = vpop.permute.xlu0 %2804
    %2806 = vrot.lane.b32.xlu0 %v2163, 16
    %v2807 = vpop.permute.xlu0 %2806
    %2816 = vrot.lane.b32.xlu0 %v2320, 32
    %v2817 = vpop.permute.xlu0 %2816
    %2818 = vrot.lane.b32.xlu0 %v2321, 32
    %v2819 = vpop.permute.xlu0 %2818
    %2820 = vrot.lane.b32.xlu0 %v2322, 32
    %v2821 = vpop.permute.xlu0 %2820
    %2822 = vrot.lane.b32.xlu0 %v2323, 32
    %v2823 = vpop.permute.xlu0 %2822
    %2832 = vrot.lane.b32.xlu0 %v2480, 48
    %v2833 = vpop.permute.xlu0 %2832
    %2834 = vrot.lane.b32.xlu0 %v2481, 48
    %v2835 = vpop.permute.xlu0 %2834
    %2836 = vrot.lane.b32.xlu0 %v2482, 48
    %v2837 = vpop.permute.xlu0 %2836
    %2838 = vrot.lane.b32.xlu0 %v2483, 48
    %v2839 = vpop.permute.xlu0 %2838
    %2848 = vrot.lane.b32.xlu0 %v1832, 64
    %v2849 = vpop.permute.xlu0 %2848
    %2850 = vrot.lane.b32.xlu0 %v1833, 64
    %v2851 = vpop.permute.xlu0 %2850
    %2852 = vrot.lane.b32.xlu0 %v1834, 64
    %v2853 = vpop.permute.xlu0 %2852
    %2854 = vrot.lane.b32.xlu0 %v1835, 64
    %v2855 = vpop.permute.xlu0 %2854
    %2864 = vrot.lane.b32.xlu0 %v2544, 64
    %v2865 = vpop.permute.xlu0 %2864
    %2866 = vrot.lane.b32.xlu0 %v2545, 64
    %v2867 = vpop.permute.xlu0 %2866
    %2868 = vrot.lane.b32.xlu0 %v2546, 64
    %v2869 = vpop.permute.xlu0 %2868
    %2870 = vrot.lane.b32.xlu0 %v2547, 64
    %v2871 = vpop.permute.xlu0 %2870
    %2880 = vrot.lane.b32.xlu0 %v2596, 80
    %v2881 = vpop.permute.xlu0 %2880
    %2882 = vrot.lane.b32.xlu0 %v2597, 80
    %v2883 = vpop.permute.xlu0 %2882
    %2884 = vrot.lane.b32.xlu0 %v2598, 80
    %v2885 = vpop.permute.xlu0 %2884
    %2886 = vrot.lane.b32.xlu0 %v2599, 80
    %v2887 = vpop.permute.xlu0 %2886
    %2896 = vrot.lane.b32.xlu0 %v2648, 96
    %v2897 = vpop.permute.xlu0 %2896
    %2898 = vrot.lane.b32.xlu0 %v2649, 96
    %v2899 = vpop.permute.xlu0 %2898
    %2900 = vrot.lane.b32.xlu0 %v2650, 96
    %v2901 = vpop.permute.xlu0 %2900
    %2902 = vrot.lane.b32.xlu0 %v2651, 96
    %v2903 = vpop.permute.xlu0 %2902
    %2912 = vrot.lane.b32.xlu0 %v2683, 112
    %v2913 = vpop.permute.xlu0 %2912
    %2914 = vrot.lane.b32.xlu0 %v2695, 112
    %v2915 = vpop.permute.xlu0 %2914
    %2916 = vrot.lane.b32.xlu0 %v2707, 112
    %v2917 = vpop.permute.xlu0 %2916
    %2918 = vrot.lane.b32.xlu0 %v2719, 112
    %v2919 = vpop.permute.xlu0 %2918
    %2928 = vrot.lane.b32.xlu0 %v2788, 16
    %v2929 = vpop.permute.xlu0 %2928
    %2930 = vrot.lane.b32.xlu0 %v2789, 16
    %v2931 = vpop.permute.xlu0 %2930
    %2932 = vrot.lane.b32.xlu0 %v2790, 16
    %v2933 = vpop.permute.xlu0 %2932
    %2934 = vrot.lane.b32.xlu0 %v2791, 16
    %v2935 = vpop.permute.xlu0 %2934
    %2944 = vrot.lane.b32.xlu0 %v2792, 32
    %v2945 = vpop.permute.xlu0 %2944
    %2946 = vrot.lane.b32.xlu0 %v2793, 32
    %v2947 = vpop.permute.xlu0 %2946
    %2948 = vrot.lane.b32.xlu0 %v2794, 32
    %v2949 = vpop.permute.xlu0 %2948
    %2950 = vrot.lane.b32.xlu0 %v2795, 32
    %v2951 = vpop.permute.xlu0 %2950
    %v2956 = vsel %vm656, %v2000, %v2801
    %v2957 = vsel %vm656, %v2001, %v2803
    %v2958 = vsel %vm656, %v2002, %v2805
    %v2959 = vsel %vm656, %v2003, %v2807
    %v2960 = vsel %vm136, %v2956, %v2817
    %v2961 = vsel %vm136, %v2957, %v2819
    %v2962 = vsel %vm136, %v2958, %v2821
    %v2963 = vsel %vm136, %v2959, %v2823
    %v2964 = vsel %vm1728, %v2960, %v2833
    %v2965 = vsel %vm1728, %v2961, %v2835
    %v2966 = vsel %vm1728, %v2962, %v2837
    %v2967 = vsel %vm1728, %v2963, %v2839
    %v2968 = vsel %vm894, %v2964, %v2849
    %v2969 = vsel %vm894, %v2965, %v2851
    %v2970 = vsel %vm894, %v2966, %v2853
    %v2971 = vsel %vm894, %v2967, %v2855
    %v2972 = vsel %vm899, %v2968, %v2865
    %v2973 = vsel %vm899, %v2969, %v2867
    %v2974 = vsel %vm899, %v2970, %v2869
    %v2975 = vsel %vm899, %v2971, %v2871
    %vm2976 = vcmask 916480
    %v2977 = vsel %vm2976, %v2972, %v2881
    %v2978 = vsel %vm2976, %v2973, %v2883
    %v2979 = vsel %vm2976, %v2974, %v2885
    %v2980 = vsel %vm2976, %v2975, %v2887
    %v2981 = vsel %vm656, %v2897, %v2913
    %v2982 = vsel %vm656, %v2899, %v2915
    %v2983 = vsel %vm656, %v2901, %v2917
    %v2984 = vsel %vm656, %v2903, %v2919
    %v2985 = vsel %vm136, %v2981, %v2784
    %v2986 = vsel %vm136, %v2982, %v2785
    %v2987 = vsel %vm136, %v2983, %v2786
    %v2988 = vsel %vm136, %v2984, %v2787
    %v2989 = vsel %vm1728, %v2985, %v2929
    %v2990 = vsel %vm1728, %v2986, %v2931
    %v2991 = vsel %vm1728, %v2987, %v2933
    %v2992 = vsel %vm1728, %v2988, %v2935
    %v2993 = vsel %vm894, %v2989, %v2945
    %v2994 = vsel %vm894, %v2990, %v2947
    %v2995 = vsel %vm894, %v2991, %v2949
    %v2996 = vsel %vm894, %v2992, %v2951
    %v2997 = vld [vmem:[%s16] sm:$0xff]
    %v2998 = vld [vmem:[%s16 + $0x8] sm:$0xff]
    %v2999 = vld [vmem:[%s16 + $0x10] sm:$0xff]
    %v3000 = vld [vmem:[%s16 + $0x18] sm:$0xff]
    %v3001 = vld [vmem:[%s16 + $0x20] sm:$0xff]
    %v3002 = vld [vmem:[%s16 + $0x28] sm:$0xff]
    %v3003 = vld [vmem:[%s16 + $0x30] sm:$0xff]
    %v3004 = vld [vmem:[%s16 + $0x38] sm:$0xff]
    %v3005 = vld [vmem:[%s16 + $0x40] sm:$0xff]
    %v3006 = vld [vmem:[%s16 + $0x48] sm:$0xff]
    %v3007 = vld [vmem:[%s16 + $0x50] sm:$0xff]
    %v3008 = vld [vmem:[%s16 + $0x58] sm:$0xff]
    %v3009 = vld [vmem:[%s16 + $0x60] sm:$0xff]
    %v3010 = vld [vmem:[%s16 + $0x68] sm:$0xff]
    %v3011 = vld [vmem:[%s16 + $0x70] sm:$0xff]
    %v3012 = vld [vmem:[%s16 + $0x78] sm:$0xff]
    %v3013 = vld [vmem:[%s16 + $0x80] sm:$0xff]
    %v3014 = vld [vmem:[%s16 + $0x88] sm:$0xff]
    %v3015 = vld [vmem:[%s16 + $0x90] sm:$0xff]
    %v3016 = vld [vmem:[%s16 + $0x98] sm:$0xff]
    %v3017 = vld [vmem:[%s16 + $0xa0] sm:$0xff]
    %v3018 = vld [vmem:[%s16 + $0xa8] sm:$0xff]
    %v3019 = vld [vmem:[%s16 + $0xb0] sm:$0xff]
    %v3020 = vld [vmem:[%s16 + $0xb8] sm:$0xff]
    %v3021 = vld [vmem:[%s16 + $0xc0] sm:$0xff]
    %v3022 = vld [vmem:[%s16 + $0xc8] sm:$0xff]
    %v3023 = vld [vmem:[%s17] sm:$0x1]
    %v3025 = vperm.slane %v3023, 0
    %vm3027 = vcmask 654336
    %v3029 = vsel %vm3027, %v2993, 0
    %v3032 = vsel %vm3027, %v2994, 0
    %v3035 = vsel %vm3027, %v2995, 0
    %v3038 = vsel %vm3027, %v2996, 0
    %3040 = vmatpush.msra.mxu0 %v3012
    %3041 = vmatpush.msra.mxu0 %v3011
    %3042 = vmatpush.msra.mxu0 %v3010
    %3043 = vmatpush.msra.mxu0 %v3009
    %3044 = vmatpush.msra.mxu0 %v3008
    %3045 = vmatpush.msra.mxu0 %v3007
    %3046 = vmatpush.msra.mxu0 %v3006
    %3047 = vmatpush.msra.mxu0 %v3005
    %3048 = vmatpush.msra.mxu0 %v3004
    %3049 = vmatpush.msra.mxu0 %v3003
    %3050 = vmatpush.msra.mxu0 %v3002
    %3051 = vmatpush.msra.mxu0 %v3001
    %3052 = vmatpush.msra.mxu0 %v3000
    %3053 = vmatpush.msra.mxu0 %v2999
    %3054 = vmatpush.msra.mxu0 %v2998
    %3055 = vmatpush.msra.mxu0 %v2997
    %3056 = vmatmul.f32.gmra.mxu0 %v2977
    %v3057 = vpop.f32.mrf.mxu0
    %v3058 = vadd.f32 %v3025, %v3057
    %3059 = vmatmul.f32.gmra.mxu0 %v2978
    %v3060 = vpop.f32.mrf.mxu0
    %v3061 = vadd.f32 %v3025, %v3060
    %3062 = vmatmul.f32.gmra.mxu0 %v2979
    %v3063 = vpop.f32.mrf.mxu0
    %v3064 = vadd.f32 %v3025, %v3063
    %3065 = vmatmul.f32.gmra.mxu0 %v2980
    %v3066 = vpop.f32.mrf.mxu0
    %v3067 = vadd.f32 %v3025, %v3066
    %3068 = vdwg.mxu0
    %3069 = vmatpush.msra.mxu0 0.0
    %3070 = vmatpush.msra.mxu0 0.0
    %3071 = vmatpush.msra.mxu0 0.0
    %3072 = vmatpush.msra.mxu0 0.0
    %3073 = vmatpush.msra.mxu0 0.0
    %3074 = vmatpush.msra.mxu0 0.0
    %3075 = vmatpush.msra.mxu0 %v3022
    %3076 = vmatpush.msra.mxu0 %v3021
    %3077 = vmatpush.msra.mxu0 %v3020
    %3078 = vmatpush.msra.mxu0 %v3019
    %3079 = vmatpush.msra.mxu0 %v3018
    %3080 = vmatpush.msra.mxu0 %v3017
    %3081 = vmatpush.msra.mxu0 %v3016
    %3082 = vmatpush.msra.mxu0 %v3015
    %3083 = vmatpush.msra.mxu0 %v3014
    %3084 = vmatpush.msra.mxu0 %v3013
    %3085 = vmatmul.f32.gmra.mxu0 %v3029
    %v3086 = vpop.f32.mrf.mxu0
    %v3087 = vadd.f32 %v3058, %v3086
    %3088 = vmatmul.f32.gmra.mxu0 %v3032
    %v3089 = vpop.f32.mrf.mxu0
    %v3090 = vadd.f32 %v3061, %v3089
    %3091 = vmatmul.f32.gmra.mxu0 %v3035
    %v3092 = vpop.f32.mrf.mxu0
    %v3093 = vadd.f32 %v3064, %v3092
    %3094 = vmatmul.f32.gmra.mxu0 %v3038
    %v3095 = vpop.f32.mrf.mxu0
    %v3096 = vadd.f32 %v3067, %v3095
    %3097 = vdwg.mxu0
    %v3098 = vmul.f32 %v3087, %v826
    %v3099 = vmul.f32 %v3090, %v831
    %v3100 = vmul.f32 %v3093, %v836
    %v3101 = vmul.f32 %v3096, %v841
    %v3102 = vadd.f32 %v103, %v3098
    %v3103 = vadd.f32 %v104, %v3099
    %v3104 = vadd.f32 %v105, %v3100
    %v3105 = vadd.f32 %v106, %v3101
    %v3106 = vld [vmem:[%s18] sm:$0x1]
    %v3107 = vld [vmem:[%s19] sm:$0x1]
    %v3108 = vsel %vm136, %v3102, 0.0
    %3109 = vadd.xlane.f32.xlu0 %v3108
    %v3110 = vpop.xlane.xlu0 %3109
    %v3111 = vsel %vm136, %v3103, 0.0
    %3112 = vadd.xlane.f32.xlu0 %v3111
    %v3113 = vpop.xlane.xlu0 %3112
    %v3114 = vsel %vm136, %v3104, 0.0
    %3115 = vadd.xlane.f32.xlu0 %v3114
    %v3116 = vpop.xlane.xlu0 %3115
    %v3117 = vsel %vm136, %v3105, 0.0
    %3118 = vadd.xlane.f32.xlu0 %v3117
    %v3119 = vpop.xlane.xlu0 %3118
    %v3120 = vrcp.pop 32.0
    %v3121 = vmul.f32 32.0, %v3120
    %v3122 = vsub.f32 1.0, %v3121
    %v3123 = vmul.f32 %v3120, %v3122
    %v3124 = vadd.f32 %v3120, %v3123
    %vm3125 = vweird.f32 %v3120
    %v3126 = vsel %vm3125, %v3120, %v3124
    %v3127 = vmul.f32 %v3110, %v3126
    %v3128 = vmul.f32 %v3113, %v3126
    %v3129 = vmul.f32 %v3116, %v3126
    %v3130 = vmul.f32 %v3119, %v3126
    %v3131 = vsub.f32 %v3102, %v3127
    %v3132 = vsub.f32 %v3103, %v3128
    %v3133 = vsub.f32 %v3104, %v3129
    %v3134 = vsub.f32 %v3105, %v3130
    %v3135 = vmul.f32 %v3131, %v3131
    %v3136 = vmul.f32 %v3132, %v3132
    %v3137 = vmul.f32 %v3133, %v3133
    %v3138 = vmul.f32 %v3134, %v3134
    %v3139 = vsel %vm136, %v3135, 0.0
    %3140 = vadd.xlane.f32.xlu0 %v3139
    %v3141 = vpop.xlane.xlu0 %3140
    %v3142 = vsel %vm136, %v3136, 0.0
    %3143 = vadd.xlane.f32.xlu0 %v3142
    %v3144 = vpop.xlane.xlu0 %3143
    %v3145 = vsel %vm136, %v3137, 0.0
    %3146 = vadd.xlane.f32.xlu0 %v3145
    %v3147 = vpop.xlane.xlu0 %3146
    %v3148 = vsel %vm136, %v3138, 0.0
    %3149 = vadd.xlane.f32.xlu0 %v3148
    %v3150 = vpop.xlane.xlu0 %3149
    %v3151 = vmul.f32 %v3141, %v3126
    %v3152 = vmul.f32 %v3144, %v3126
    %v3153 = vmul.f32 %v3147, %v3126
    %v3154 = vmul.f32 %v3150, %v3126
    %v3155 = vadd.f32 %v3151, 1e-05
    %v3156 = vadd.f32 %v3152, 1e-05
    %v3157 = vadd.f32 %v3153, 1e-05
    %v3158 = vadd.f32 %v3154, 1e-05
    %v3159 = vrsqrt.pop %v3155
    %v3160 = vmul.f32 %v3159, %v3155
    %v3161 = vmul.f32 %v3160, %v3159
    %v3162 = vmul.f32 0.5, %v3161
    %v3163 = vsub.f32 1.5, %v3162
    %v3164 = vmul.f32 %v3159, %v3163
    %vm3165 = vweird.f32 %v3155
    %vm3166 = vweird.f32 %v3159
    %vm3167 = vmor %vm3165, %vm3166
    %v3168 = vsel %vm3167, %v3159, %v3164
    %v3169 = vrsqrt.pop %v3156
    %v3170 = vmul.f32 %v3169, %v3156
    %v3171 = vmul.f32 %v3170, %v3169
    %v3172 = vmul.f32 0.5, %v3171
    %v3173 = vsub.f32 1.5, %v3172
    %v3174 = vmul.f32 %v3169, %v3173
    %vm3175 = vweird.f32 %v3156
    %vm3176 = vweird.f32 %v3169
    %vm3177 = vmor %vm3175, %vm3176
    %v3178 = vsel %vm3177, %v3169, %v3174
    %v3179 = vrsqrt.pop %v3157
    %v3180 = vmul.f32 %v3179, %v3157
    %v3181 = vmul.f32 %v3180, %v3179
    %v3182 = vmul.f32 0.5, %v3181
    %v3183 = vsub.f32 1.5, %v3182
    %v3184 = vmul.f32 %v3179, %v3183
    %vm3185 = vweird.f32 %v3157
    %vm3186 = vweird.f32 %v3179
    %vm3187 = vmor %vm3185, %vm3186
    %v3188 = vsel %vm3187, %v3179, %v3184
    %v3189 = vrsqrt.pop %v3158
    %v3190 = vmul.f32 %v3189, %v3158
    %v3191 = vmul.f32 %v3190, %v3189
    %v3192 = vmul.f32 0.5, %v3191
    %v3193 = vsub.f32 1.5, %v3192
    %v3194 = vmul.f32 %v3189, %v3193
    %vm3195 = vweird.f32 %v3158
    %vm3196 = vweird.f32 %v3189
    %vm3197 = vmor %vm3195, %vm3196
    %v3198 = vsel %vm3197, %v3189, %v3194
    %v3199 = vmul.f32 %v3131, %v3168
    %v3200 = vmul.f32 %v3132, %v3178
    %v3201 = vmul.f32 %v3133, %v3188
    %v3202 = vmul.f32 %v3134, %v3198
    %v3204 = vperm.slane %v3106, 0
    %v3206 = vmul.f32 %v3199, %v3204
    %v3207 = vmul.f32 %v3200, %v3204
    %v3208 = vmul.f32 %v3201, %v3204
    %v3209 = vmul.f32 %v3202, %v3204
    %v3211 = vperm.slane %v3107, 0
    %v3213 = vadd.f32 %v3206, %v3211
    %v3214 = vadd.f32 %v3207, %v3211
    %v3215 = vadd.f32 %v3208, %v3211
    %v3216 = vadd.f32 %v3209, %v3211
    %v3217 = vld [vmem:[%s20] sm:$0xff]
    %v3218 = vld [vmem:[%s20 + $0x8] sm:$0xff]
    %v3219 = vld [vmem:[%s20 + $0x10] sm:$0xff]
    %v3220 = vld [vmem:[%s20 + $0x18] sm:$0xff]
    %v3221 = vld [vmem:[%s21] sm:$0x1]
    %v3223 = vperm.slane %v3221, 0
    %v3226 = vsel %vm136, %v3213, 0
    %v3229 = vsel %vm136, %v3214, 0
    %v3232 = vsel %vm136, %v3215, 0
    %v3235 = vsel %vm136, %v3216, 0
    %3237 = vmatpush.msra.mxu0 0.0
    %3238 = vmatpush.msra.mxu0 0.0
    %3239 = vmatpush.msra.mxu0 0.0
    %3240 = vmatpush.msra.mxu0 0.0
    %3241 = vmatpush.msra.mxu0 0.0
    %3242 = vmatpush.msra.mxu0 0.0
    %3243 = vmatpush.msra.mxu0 0.0
    %3244 = vmatpush.msra.mxu0 0.0
    %3245 = vmatpush.msra.mxu0 0.0
    %3246 = vmatpush.msra.mxu0 0.0
    %3247 = vmatpush.msra.mxu0 0.0
    %3248 = vmatpush.msra.mxu0 0.0
    %3249 = vmatpush.msra.mxu0 %v3220
    %3250 = vmatpush.msra.mxu0 %v3219
    %3251 = vmatpush.msra.mxu0 %v3218
    %3252 = vmatpush.msra.mxu0 %v3217
    %3253 = vmatmul.f32.gmra.mxu0 %v3226
    %v3254 = vpop.f32.mrf.mxu0
    %v3255 = vadd.f32 %v3223, %v3254
    %3256 = vmatmul.f32.gmra.mxu0 %v3229
    %v3257 = vpop.f32.mrf.mxu0
    %v3258 = vadd.f32 %v3223, %v3257
    %3259 = vmatmul.f32.gmra.mxu0 %v3232
    %v3260 = vpop.f32.mrf.mxu0
    %v3261 = vadd.f32 %v3223, %v3260
    %3262 = vmatmul.f32.gmra.mxu0 %v3235
    %v3263 = vpop.f32.mrf.mxu0
    %v3264 = vadd.f32 %v3223, %v3263
    %3265 = vdwg.mxu0
    %v3266 = vmax.f32 %v3255, 0.0
    %v3267 = vmax.f32 %v3258, 0.0
    %v3268 = vmax.f32 %v3261, 0.0
    %v3269 = vmax.f32 %v3264, 0.0
    %v3270 = vld [vmem:[%s22] sm:$0xff]
    %v3271 = vld [vmem:[%s22 + $0x8] sm:$0xff]
    %v3272 = vld [vmem:[%s22 + $0x10] sm:$0xff]
    %v3273 = vld [vmem:[%s22 + $0x18] sm:$0xff]
    %v3274 = vld [vmem:[%s23] sm:$0x1]
    %v3276 = vperm.slane %v3274, 0
    %v3279 = vsel %vm136, %v3266, 0
    %v3282 = vsel %vm136, %v3267, 0
    %v3285 = vsel %vm136, %v3268, 0
    %v3288 = vsel %vm136, %v3269, 0
    %3290 = vmatpush.msra.mxu0 0.0
    %3291 = vmatpush.msra.mxu0 0.0
    %3292 = vmatpush.msra.mxu0 0.0
    %3293 = vmatpush.msra.mxu0 0.0
    %3294 = vmatpush.msra.mxu0 0.0
    %3295 = vmatpush.msra.mxu0 0.0
    %3296 = vmatpush.msra.mxu0 0.0
    %3297 = vmatpush.msra.mxu0 0.0
    %3298 = vmatpush.msra.mxu0 0.0
    %3299 = vmatpush.msra.mxu0 0.0
    %3300 = vmatpush.msra.mxu0 0.0
    %3301 = vmatpush.msra.mxu0 0.0
    %3302 = vmatpush.msra.mxu0 %v3273
    %3303 = vmatpush.msra.mxu0 %v3272
    %3304 = vmatpush.msra.mxu0 %v3271
    %3305 = vmatpush.msra.mxu0 %v3270
    %3306 = vmatmul.f32.gmra.mxu0 %v3279
    %v3307 = vpop.f32.mrf.mxu0
    %v3308 = vadd.f32 %v3276, %v3307
    %3309 = vmatmul.f32.gmra.mxu0 %v3282
    %v3310 = vpop.f32.mrf.mxu0
    %v3311 = vadd.f32 %v3276, %v3310
    %3312 = vmatmul.f32.gmra.mxu0 %v3285
    %v3313 = vpop.f32.mrf.mxu0
    %v3314 = vadd.f32 %v3276, %v3313
    %3315 = vmatmul.f32.gmra.mxu0 %v3288
    %v3316 = vpop.f32.mrf.mxu0
    %v3317 = vadd.f32 %v3276, %v3316
    %3318 = vdwg.mxu0
    %v3319 = vmax.f32 %v3308, 0.0
    %v3320 = vmax.f32 %v3311, 0.0
    %v3321 = vmax.f32 %v3314, 0.0
    %v3322 = vmax.f32 %v3317, 0.0
    %v3323 = vld [vmem:[%s24] sm:$0xff]
    %v3324 = vld [vmem:[%s24 + $0x8] sm:$0xff]
    %v3325 = vld [vmem:[%s24 + $0x10] sm:$0xff]
    %v3326 = vld [vmem:[%s24 + $0x18] sm:$0xff]
    %v3327 = vld [vmem:[%s25] sm:$0x1]
    %v3329 = vperm.slane %v3327, 0
    %v3332 = vsel %vm136, %v3319, 0
    %v3335 = vsel %vm136, %v3320, 0
    %v3338 = vsel %vm136, %v3321, 0
    %v3341 = vsel %vm136, %v3322, 0
    %3343 = vmatpush.msra.mxu0 0.0
    %3344 = vmatpush.msra.mxu0 0.0
    %3345 = vmatpush.msra.mxu0 0.0
    %3346 = vmatpush.msra.mxu0 0.0
    %3347 = vmatpush.msra.mxu0 0.0
    %3348 = vmatpush.msra.mxu0 0.0
    %3349 = vmatpush.msra.mxu0 0.0
    %3350 = vmatpush.msra.mxu0 0.0
    %3351 = vmatpush.msra.mxu0 0.0
    %3352 = vmatpush.msra.mxu0 0.0
    %3353 = vmatpush.msra.mxu0 0.0
    %3354 = vmatpush.msra.mxu0 0.0
    %3355 = vmatpush.msra.mxu0 %v3326
    %3356 = vmatpush.msra.mxu0 %v3325
    %3357 = vmatpush.msra.mxu0 %v3324
    %3358 = vmatpush.msra.mxu0 %v3323
    %3359 = vmatmul.f32.gmra.mxu0 %v3332
    %v3360 = vpop.f32.mrf.mxu0
    %v3361 = vadd.f32 %v3329, %v3360
    %3362 = vmatmul.f32.gmra.mxu0 %v3335
    %v3363 = vpop.f32.mrf.mxu0
    %v3364 = vadd.f32 %v3329, %v3363
    %3365 = vmatmul.f32.gmra.mxu0 %v3338
    %v3366 = vpop.f32.mrf.mxu0
    %v3367 = vadd.f32 %v3329, %v3366
    %3368 = vmatmul.f32.gmra.mxu0 %v3341
    %v3369 = vpop.f32.mrf.mxu0
    %v3370 = vadd.f32 %v3329, %v3369
    %3371 = vdwg.mxu0
    %v3372 = vadd.f32 %v3213, %v3361
    %v3373 = vadd.f32 %v3214, %v3364
    %v3374 = vadd.f32 %v3215, %v3367
    %v3375 = vadd.f32 %v3216, %v3370
    %v3376 = vld [vmem:[%s26] sm:$0x1]
    %v3377 = vld [vmem:[%s27] sm:$0x1]
    %v3378 = vsel %vm136, %v3372, 0.0
    %3379 = vadd.xlane.f32.xlu0 %v3378
    %v3380 = vpop.xlane.xlu0 %3379
    %v3381 = vsel %vm136, %v3373, 0.0
    %3382 = vadd.xlane.f32.xlu0 %v3381
    %v3383 = vpop.xlane.xlu0 %3382
    %v3384 = vsel %vm136, %v3374, 0.0
    %3385 = vadd.xlane.f32.xlu0 %v3384
    %v3386 = vpop.xlane.xlu0 %3385
    %v3387 = vsel %vm136, %v3375, 0.0
    %3388 = vadd.xlane.f32.xlu0 %v3387
    %v3389 = vpop.xlane.xlu0 %3388
    %v3390 = vmul.f32 %v3380, %v3126
    %v3391 = vmul.f32 %v3383, %v3126
    %v3392 = vmul.f32 %v3386, %v3126
    %v3393 = vmul.f32 %v3389, %v3126
    %v3394 = vsub.f32 %v3372, %v3390
    %v3395 = vsub.f32 %v3373, %v3391
    %v3396 = vsub.f32 %v3374, %v3392
    %v3397 = vsub.f32 %v3375, %v3393
    %v3398 = vmul.f32 %v3394, %v3394
    %v3399 = vmul.f32 %v3395, %v3395
    %v3400 = vmul.f32 %v3396, %v3396
    %v3401 = vmul.f32 %v3397, %v3397
    %v3402 = vsel %vm136, %v3398, 0.0
    %3403 = vadd.xlane.f32.xlu0 %v3402
    %v3404 = vpop.xlane.xlu0 %3403
    %v3405 = vsel %vm136, %v3399, 0.0
    %3406 = vadd.xlane.f32.xlu0 %v3405
    %v3407 = vpop.xlane.xlu0 %3406
    %v3408 = vsel %vm136, %v3400, 0.0
    %3409 = vadd.xlane.f32.xlu0 %v3408
    %v3410 = vpop.xlane.xlu0 %3409
    %v3411 = vsel %vm136, %v3401, 0.0
    %3412 = vadd.xlane.f32.xlu0 %v3411
    %v3413 = vpop.xlane.xlu0 %3412
    %v3414 = vmul.f32 %v3404, %v3126
    %v3415 = vmul.f32 %v3407, %v3126
    %v3416 = vmul.f32 %v3410, %v3126
    %v3417 = vmul.f32 %v3413, %v3126
    %v3418 = vadd.f32 %v3414, 1e-05
    %v3419 = vadd.f32 %v3415, 1e-05
    %v3420 = vadd.f32 %v3416, 1e-05
    %v3421 = vadd.f32 %v3417, 1e-05
    %v3422 = vrsqrt.pop %v3418
    %v3423 = vmul.f32 %v3422, %v3418
    %v3424 = vmul.f32 %v3423, %v3422
    %v3425 = vmul.f32 0.5, %v3424
    %v3426 = vsub.f32 1.5, %v3425
    %v3427 = vmul.f32 %v3422, %v3426
    %vm3428 = vweird.f32 %v3418
    %vm3429 = vweird.f32 %v3422
    %vm3430 = vmor %vm3428, %vm3429
    %v3431 = vsel %vm3430, %v3422, %v3427
    %v3432 = vrsqrt.pop %v3419
    %v3433 = vmul.f32 %v3432, %v3419
    %v3434 = vmul.f32 %v3433, %v3432
    %v3435 = vmul.f32 0.5, %v3434
    %v3436 = vsub.f32 1.5, %v3435
    %v3437 = vmul.f32 %v3432, %v3436
    %vm3438 = vweird.f32 %v3419
    %vm3439 = vweird.f32 %v3432
    %vm3440 = vmor %vm3438, %vm3439
    %v3441 = vsel %vm3440, %v3432, %v3437
    %v3442 = vrsqrt.pop %v3420
    %v3443 = vmul.f32 %v3442, %v3420
    %v3444 = vmul.f32 %v3443, %v3442
    %v3445 = vmul.f32 0.5, %v3444
    %v3446 = vsub.f32 1.5, %v3445
    %v3447 = vmul.f32 %v3442, %v3446
    %vm3448 = vweird.f32 %v3420
    %vm3449 = vweird.f32 %v3442
    %vm3450 = vmor %vm3448, %vm3449
    %v3451 = vsel %vm3450, %v3442, %v3447
    %v3452 = vrsqrt.pop %v3421
    %v3453 = vmul.f32 %v3452, %v3421
    %v3454 = vmul.f32 %v3453, %v3452
    %v3455 = vmul.f32 0.5, %v3454
    %v3456 = vsub.f32 1.5, %v3455
    %v3457 = vmul.f32 %v3452, %v3456
    %vm3458 = vweird.f32 %v3421
    %vm3459 = vweird.f32 %v3452
    %vm3460 = vmor %vm3458, %vm3459
    %v3461 = vsel %vm3460, %v3452, %v3457
    %v3462 = vmul.f32 %v3394, %v3431
    %v3463 = vmul.f32 %v3395, %v3441
    %v3464 = vmul.f32 %v3396, %v3451
    %v3465 = vmul.f32 %v3397, %v3461
    %v3467 = vperm.slane %v3376, 0
    %v3469 = vmul.f32 %v3462, %v3467
    %v3470 = vmul.f32 %v3463, %v3467
    %v3471 = vmul.f32 %v3464, %v3467
    %v3472 = vmul.f32 %v3465, %v3467
    %v3474 = vperm.slane %v3377, 0
    %v3476 = vadd.f32 %v3469, %v3474
    %v3477 = vadd.f32 %v3470, %v3474
    %v3478 = vadd.f32 %v3471, %v3474
    %v3479 = vadd.f32 %v3472, %v3474
    %3480 = vst.msk [vmem:[#allocation5] sm:$0xff] %vm136, %v3476
    %3481 = vst.msk [vmem:[#allocation5 + $0x8] sm:$0xff] %vm136, %v3477
    %3482 = vst.msk [vmem:[#allocation5 + $0x10] sm:$0xff] %vm136, %v3478
    %3483 = vst.msk [vmem:[#allocation5 + $0x18] sm:$0xff] %vm136, %v3479
    // Predicated region
    $region118: #{ga_block_forward.1} parent=1 // pred_check
      _
    $region119: #{ga_block_forward.1} parent=1 // pred_check_branch
      %3485 = sbr.rel (0) target = $region121
    $region120: #{ga_block_forward.1} parent=1 // pred_region
      %3487 = vsyncadd [#allocation3], 0
      %s3488 = sshll.u32 [#allocation5], 4
      %s3489 = int_to_ptr.vmem [resolvable:$true] %s3488
      %s3490 = sshll.u32 %s28, 4
      %s3491 = int_to_ptr.hbm [resolvable:$true] %s3490
      %3496 = dma.vmem_to_hbm [thread:$0]  %s3489, 512, %s3491, [#allocation3], 128, 128, 8
    $region121: #{ga_block_forward.1} parent=1 // pred_fallthru
      _
    // Predicated region
    $region122: #{ga_block_forward.1} parent=1 // pred_check
      _
    $region123: #{ga_block_forward.1} parent=1 // pred_check_branch
      %3498 = sbr.rel (0) target = $region125
    $region124: #{ga_block_forward.1} parent=1 // pred_region
      %3500 = dma.done [#allocation3], 512
    $region125: #{ga_block_forward.1} parent=1 // pred_fallthru
      _
    %3501 = vsyncpa [#allocation3], 1
    %3502 = vsyncpa [#allocation4], 1

</llo_original>
